<compile_context>
chip_gen: v5e
topology: v5e:2x2
jax: 0.10.0
libtpu: 0.0.40
codegen_flags: <defaults>
</compile_context>

<pallas_src>
import jax
import jax.numpy as jnp
from jax.experimental import pallas as pl
from jax.experimental.pallas import tpu as pltpu


# ----------------------------------------------------------------------------
# Fused encoder kernel builder
# ----------------------------------------------------------------------------
def _build_encoder_kernel(T, Bp, Din, H, L, num_layers, num_dirs):
    G = 4 * H
    n_seq_sets = min(2, max(num_layers - 1, 0))   # ping-pong sets actually used

    def kernel(*refs):
        # ------------------------------ unpack refs -------------------------
        idx = 0
        x_ref = refs[idx]; idx += 1
        layers = []
        for layer in range(num_layers):
            dirs = []
            for _d in range(num_dirs):
                n_in = 1 if layer == 0 else num_dirs
                wih = refs[idx:idx + n_in]; idx += n_in
                whh = refs[idx]; idx += 1
                b = refs[idx]; idx += 1
                dirs.append((wih, whh, b))
            layers.append(dirs)
        wm = refs[idx:idx + num_dirs]; idx += num_dirs
        bm = refs[idx]; idx += 1
        wv = refs[idx:idx + num_dirs]; idx += num_dirs
        bv = refs[idx]; idx += 1
        eps_ref = refs[idx]; idx += 1
        z_ref = refs[idx]; mean_ref = refs[idx + 1]; logvar_ref = refs[idx + 2]
        idx += 3
        xg_refs = refs[idx:idx + num_dirs]; idx += num_dirs        # (T*Bp, 4H)
        seq_refs = [refs[idx + p * num_dirs: idx + (p + 1) * num_dirs]
                    for p in range(n_seq_sets)]                    # (T*Bp, H)
        idx += n_seq_sets * num_dirs

        f32 = jnp.float32

        # Lane mask selecting the g (cell-candidate) gate block. Hoisted once.
        lane = jax.lax.broadcasted_iota(jnp.int32, (Bp, G), 1)
        g_mask = (lane >= 2 * H) & (lane < 3 * H)
        # Column scale that doubles the g-gate pre-activation so that
        # tanh(g) == 2*sigmoid(2g) - 1 can be recovered from a SINGLE sigmoid
        # pass over the whole (Bp, 4H) vreg inside the serial loop.
        lane_row = jax.lax.broadcasted_iota(jnp.int32, (1, G), 1)
        col_scale = jnp.where((lane_row >= 2 * H) & (lane_row < 3 * H),
                              jnp.float32(2.0), jnp.float32(1.0))

        def lstm_cell(gates, c):
            # gates already have the g columns pre-doubled.
            s = jax.nn.sigmoid(gates)                       # one EUP pass
            act = jnp.where(g_mask, 2.0 * s - 1.0, s)       # tanh(g)=2σ(2g)-1
            i = act[:, 0:H]
            f = act[:, H:2 * H]
            g = act[:, 2 * H:3 * H]
            o = act[:, 3 * H:4 * H]
            c_new = f * c + i * g
            h_new = o * jnp.tanh(c_new)
            return h_new, c_new

        final_h = [None] * num_dirs

        # -------------------------- layers (unrolled) ------------------------
        for layer in range(num_layers):
            cur = layer % 2
            prev = 1 - cur
            is_last = layer == num_layers - 1
            dirs = layers[layer]

            # Hoisted input projection + fused bias: one batched matmul per
            # direction (the direction concat of the previous layer is folded
            # into split W_ih halves, so no concatenate is materialized).
            if layer == 0:
                lay_in = [x_ref[...]]
            else:
                lay_in = [seq_refs[prev][s][...] for s in range(num_dirs)]
            for d in range(num_dirs):
                wih, _whh, b = dirs[d]
                xg = jnp.dot(lay_in[0], wih[0][...],
                             preferred_element_type=f32)
                for s in range(1, len(wih)):
                    xg = xg + jnp.dot(lay_in[s], wih[s][...],
                                      preferred_element_type=f32)
                # Pre-double the g-gate columns (once per layer, outside the
                # serial recurrence).
                xg_refs[d][...] = (xg + b[...]) * col_scale

            # Load recurrent weights once per layer (loop constants), with the
            # g-gate columns pre-doubled as well.
            whh = [dirs[d][1][...] * col_scale for d in range(num_dirs)]

            def step(t, carry):
                hs, cs = carry
                new_h, new_c = [], []
                for d in range(num_dirs):
                    # d == 0: forward in time; d == 1: reverse in time.
                    tt = t if d == 0 else T - 1 - t
                    off = tt * Bp                      # sublane-aligned (Bp=8k)
                    gates = xg_refs[d][pl.ds(off, Bp), :] + jnp.dot(
                        hs[d], whh[d], preferred_element_type=f32)
                    h_new, c_new = lstm_cell(gates, cs[d])
                    if not is_last:                    # last layer: only h_n
                        seq_refs[cur][d][pl.ds(off, Bp), :] = h_new
                    new_h.append(h_new)
                    new_c.append(c_new)
                return tuple(new_h), tuple(new_c)

            zeros = tuple(jnp.zeros((Bp, H), f32) for _ in range(num_dirs))
            hs_fin, _ = jax.lax.fori_loop(0, T, step, (zeros, zeros),
                                          unroll=True)
            for d in range(num_dirs):
                final_h[d] = hs_fin[d]

        # ---------------- FC heads + reparameterization (fused) --------------
        # h = concat(final_fwd, final_bwd) is folded into split FC weights.
        mean = jnp.dot(final_h[0], wm[0][...],
                       preferred_element_type=f32) + bm[...]
        logv = jnp.dot(final_h[0], wv[0][...],
                       preferred_element_type=f32) + bv[...]
        for d in range(1, num_dirs):
            mean = mean + jnp.dot(final_h[d], wm[d][...],
                                  preferred_element_type=f32)
            logv = logv + jnp.dot(final_h[d], wv[d][...],
                                  preferred_element_type=f32)
        z = mean + jnp.exp(0.5 * logv) * eps_ref[...]
        z_ref[...] = z
        mean_ref[...] = mean
        logvar_ref[...] = logv

    return kernel


# ----------------------------------------------------------------------------
# Forward pass (mirrors Encoder.forward, inference semantics)
# ----------------------------------------------------------------------------
@jax.jit
def encoder_forward(params, x, eps):
    """x: (B, T, input_size) batch_first; eps: (B, latent_dim) ~ N(0, 1)."""
    lstm = params["lstm"]
    num_layers = len(lstm)
    num_dirs = len(lstm[0])
    H = lstm[0][0]["w_hh"].shape[0]
    L = params["fc_mean_w"].shape[1]
    B, T, Din = x.shape
    Bp = ((B + 7) // 8) * 8          # pad batch to a full sublane block

    x_tm = jnp.transpose(x, (1, 0, 2)).astype(jnp.float32)     # (T, B, Din)
    x_tm = jnp.pad(x_tm, ((0, 0), (0, Bp - B), (0, 0)))
    x_flat = x_tm.reshape(T * Bp, Din)                         # time-major flat
    eps_p = jnp.pad(eps.astype(jnp.float32), ((0, Bp - B), (0, 0)))

    # Flat kernel-argument list (direction concat folded into weight splits).
    inputs = [x_flat]
    for layer in range(num_layers):
        for d in range(num_dirs):
            p = lstm[layer][d]
            if layer == 0:
                inputs.append(p["w_ih"])
            else:
                for s in range(num_dirs):
                    inputs.append(p["w_ih"][s * H:(s + 1) * H])
            inputs.append(p["w_hh"])
            inputs.append(p["b"])
    for s in range(num_dirs):
        inputs.append(params["fc_mean_w"][s * H:(s + 1) * H])
    inputs.append(params["fc_mean_b"])
    for s in range(num_dirs):
        inputs.append(params["fc_log_var_w"][s * H:(s + 1) * H])
    inputs.append(params["fc_log_var_b"])
    inputs.append(eps_p)

    kernel = _build_encoder_kernel(T, Bp, Din, H, L, num_layers, num_dirs)

    n_seq_sets = min(2, max(num_layers - 1, 0))
    scratch = ([pltpu.VMEM((T * Bp, 4 * H), jnp.float32)       # precomp. gates
                for _ in range(num_dirs)] +
               [pltpu.VMEM((T * Bp, H), jnp.float32)           # seq ping-pong
                for _ in range(n_seq_sets * num_dirs)])

    out_sds = jax.ShapeDtypeStruct((Bp, L), jnp.float32)
    z, mean, log_var = pl.pallas_call(
        kernel,
        out_shape=(out_sds, out_sds, out_sds),
        in_specs=[pl.BlockSpec(memory_space=pltpu.MemorySpace.VMEM)]
                 * len(inputs),
        out_specs=(pl.BlockSpec(memory_space=pltpu.MemorySpace.VMEM),) * 3,
        scratch_shapes=scratch,
    )(*inputs)
    # Drop the padded batch rows.
    return z[:B], mean[:B], log_var[:B]


# ----------------------------------------------------------------------------
# Parameter construction (PyTorch-style uniform init ranges; arrays only)
# ----------------------------------------------------------------------------
def init_encoder_params(key, input_size, hidden_size, latent_dim, num_layers,
                        bidirectional=True):
    num_dirs = 2 if bidirectional else 1
    k_lstm = float(hidden_size) ** -0.5
    params = {"lstm": []}

    for layer in range(num_layers):
        din = input_size if layer == 0 else num_dirs * hidden_size
        dirs = []
        for _ in range(num_dirs):
            key, k1, k2, k3, k4 = jax.random.split(key, 5)
            w_ih = jax.random.uniform(k1, (din, 4 * hidden_size),
                                      minval=-k_lstm, maxval=k_lstm,
                                      dtype=jnp.float32)
            w_hh = jax.random.uniform(k2, (hidden_size, 4 * hidden_size),
                                      minval=-k_lstm, maxval=k_lstm,
                                      dtype=jnp.float32)
            b_ih = jax.random.uniform(k3, (4 * hidden_size,),
                                      minval=-k_lstm, maxval=k_lstm,
                                      dtype=jnp.float32)
            b_hh = jax.random.uniform(k4, (4 * hidden_size,),
                                      minval=-k_lstm, maxval=k_lstm,
                                      dtype=jnp.float32)
            dirs.append({
                "w_ih": w_ih,
                "w_hh": w_hh,
                "b": (b_ih + b_hh).reshape(1, 4 * hidden_size),
            })
        params["lstm"].append(dirs)

    fc_in = num_dirs * hidden_size
    k_fc = float(fc_in) ** -0.5
    key, k1, k2, k3, k4 = jax.random.split(key, 5)
    params["fc_mean_w"] = jax.random.uniform(
        k1, (fc_in, latent_dim), minval=-k_fc, maxval=k_fc, dtype=jnp.float32)
    params["fc_mean_b"] = jax.random.uniform(
        k2, (1, latent_dim), minval=-k_fc, maxval=k_fc, dtype=jnp.float32)
    params["fc_log_var_w"] = jax.random.uniform(
        k3, (fc_in, latent_dim), minval=-k_fc, maxval=k_fc, dtype=jnp.float32)
    params["fc_log_var_b"] = jax.random.uniform(
        k4, (1, latent_dim), minval=-k_fc, maxval=k_fc, dtype=jnp.float32)
    return params


# ----------------------------------------------------------------------------
# Pure-JAX reference (no Pallas) with identical inference semantics
# ----------------------------------------------------------------------------
def _reference_encoder(params, x, eps):
    lstm = params["lstm"]
    H = lstm[0][0]["w_hh"].shape[0]
    num_dirs = len(lstm[0])
    B, T, _ = x.shape
    x = x.astype(jnp.float32)

    def cell(p, x_t, h, c):
        gates = x_t @ p["w_ih"] + h @ p["w_hh"] + p["b"][0]
        i = jax.nn.sigmoid(gates[:, 0:H])
        f = jax.nn.sigmoid(gates[:, H:2 * H])
        g = jnp.tanh(gates[:, 2 * H:3 * H])
        o = jax.nn.sigmoid(gates[:, 3 * H:4 * H])
        c = f * c + i * g
        h = o * jnp.tanh(c)
        return h, c

    inp = x
    finals = []
    for layer_dirs in lstm:
        outs, finals = [], []
        for d, p in enumerate(layer_dirs):
            h = jnp.zeros((B, H), jnp.float32)
            c = jnp.zeros((B, H), jnp.float32)
            hs = [None] * T
            order = range(T) if d == 0 else range(T - 1, -1, -1)
            for t in order:
                h, c = cell(p, inp[:, t, :], h, c)
                hs[t] = h
            outs.append(jnp.stack(hs, axis=1))
            finals.append(h)
        inp = jnp.concatenate(outs, axis=-1) if num_dirs == 2 else outs[0]
    hcat = jnp.concatenate(finals, axis=1) if num_dirs == 2 else finals[0]
    mean = hcat @ params["fc_mean_w"] + params["fc_mean_b"][0]
    logv = hcat @ params["fc_log_var_w"] + params["fc_log_var_b"][0]
    z = mean + jnp.exp(0.5 * logv) * eps
    return z, mean, logv


# ----------------------------------------------------------------------------
if __name__ == "__main__":
    batch = 4
    seq_len = 8
    input_size = 8
    hidden_size = 32
    latent_dim = 16
    num_layers = 2

    key = jax.random.PRNGKey(0)
    key, kp, kx, ke = jax.random.split(key, 4)

    params = init_encoder_params(kp, input_size, hidden_size, latent_dim,
                                 num_layers, bidirectional=True)
    x = jax.random.normal(kx, (batch, seq_len, input_size), dtype=jnp.float32)
    # epsilon for the reparameterization (torch.randn_like equivalent)
    eps = jax.random.normal(ke, (batch, latent_dim), dtype=jnp.float32)

    z, mean, log_var = encoder_forward(params, x, eps)
    jax.block_until_ready((z, mean, log_var))

    assert z.shape == (batch, latent_dim)
    assert mean.shape == (batch, latent_dim)
    assert log_var.shape == (batch, latent_dim)

    # Numerical check against the pure-JAX reference.
    z_r, m_r, lv_r = _reference_encoder(params, x, eps)
    assert jnp.allclose(mean, m_r, atol=2e-4, rtol=2e-4)
    assert jnp.allclose(log_var, lv_r, atol=2e-4, rtol=2e-4)
    assert jnp.allclose(z, z_r, atol=2e-4, rtol=2e-4)

    print("KERNEL_OK")
</pallas_src>

<mosaic_0001>
module attributes {stable_mosaic.version = 11 : i64} {
  func.func @kernel(%arg0: memref<64x8xf32, #tpu.memory_space<vmem>>, %arg1: memref<8x128xf32, #tpu.memory_space<vmem>>, %arg2: memref<32x128xf32, #tpu.memory_space<vmem>>, %arg3: memref<1x128xf32, #tpu.memory_space<vmem>>, %arg4: memref<8x128xf32, #tpu.memory_space<vmem>>, %arg5: memref<32x128xf32, #tpu.memory_space<vmem>>, %arg6: memref<1x128xf32, #tpu.memory_space<vmem>>, %arg7: memref<32x128xf32, #tpu.memory_space<vmem>>, %arg8: memref<32x128xf32, #tpu.memory_space<vmem>>, %arg9: memref<32x128xf32, #tpu.memory_space<vmem>>, %arg10: memref<1x128xf32, #tpu.memory_space<vmem>>, %arg11: memref<32x128xf32, #tpu.memory_space<vmem>>, %arg12: memref<32x128xf32, #tpu.memory_space<vmem>>, %arg13: memref<32x128xf32, #tpu.memory_space<vmem>>, %arg14: memref<1x128xf32, #tpu.memory_space<vmem>>, %arg15: memref<32x16xf32, #tpu.memory_space<vmem>>, %arg16: memref<32x16xf32, #tpu.memory_space<vmem>>, %arg17: memref<1x16xf32, #tpu.memory_space<vmem>>, %arg18: memref<32x16xf32, #tpu.memory_space<vmem>>, %arg19: memref<32x16xf32, #tpu.memory_space<vmem>>, %arg20: memref<1x16xf32, #tpu.memory_space<vmem>>, %arg21: memref<8x16xf32, #tpu.memory_space<vmem>>, %arg22: memref<8x16xf32, #tpu.memory_space<vmem>>, %arg23: memref<8x16xf32, #tpu.memory_space<vmem>>, %arg24: memref<8x16xf32, #tpu.memory_space<vmem>>, %arg25: memref<64x128xf32, #tpu.memory_space<vmem>>, %arg26: memref<64x128xf32, #tpu.memory_space<vmem>>, %arg27: memref<64x32xf32, #tpu.memory_space<vmem>>, %arg28: memref<64x32xf32, #tpu.memory_space<vmem>>) attributes {dimension_semantics = [], scalar_prefetch = 0 : i64, scratch_operands = 4 : i64, tpu.core_type = #tpu.core_type<tc>} {
    %0 = tpu.iota {dimensions = array<i32: 1>} : vector<8x128xi32>
    %c64_i32 = arith.constant 64 : i32
    %1 = vector.broadcast %c64_i32 : i32 to vector<8x128xi32>
    %2 = arith.cmpi sge, %0, %1 : vector<8x128xi32>
    %c96_i32 = arith.constant 96 : i32
    %3 = vector.broadcast %c96_i32 : i32 to vector<8x128xi32>
    %4 = arith.cmpi slt, %0, %3 : vector<8x128xi32>
    %5 = arith.andi %2, %4 : vector<8x128xi1>
    %6 = tpu.iota {dimensions = array<i32: 1>} : vector<1x128xi32>
    %c64_i32_0 = arith.constant 64 : i32
    %7 = vector.broadcast %c64_i32_0 : i32 to vector<1x128xi32>
    %8 = arith.cmpi sge, %6, %7 : vector<1x128xi32>
    %c96_i32_1 = arith.constant 96 : i32
    %9 = vector.broadcast %c96_i32_1 : i32 to vector<1x128xi32>
    %10 = arith.cmpi slt, %6, %9 : vector<1x128xi32>
    %11 = arith.andi %8, %10 : vector<1x128xi1>
    %cst = arith.constant 2.000000e+00 : f32
    %cst_2 = arith.constant 1.000000e+00 : f32
    %12 = vector.broadcast %cst : f32 to vector<1x128xf32>
    %13 = vector.broadcast %cst_2 : f32 to vector<1x128xf32>
    %14 = arith.select %11, %12, %13 : vector<1x128xi1>, vector<1x128xf32>
    %c0 = arith.constant 0 : index
    %c0_3 = arith.constant 0 : index
    %15 = vector.load %arg0[%c0, %c0_3] : memref<64x8xf32, #tpu.memory_space<vmem>>, vector<64x8xf32>
    %c0_4 = arith.constant 0 : index
    %c0_5 = arith.constant 0 : index
    %16 = vector.load %arg1[%c0_4, %c0_5] : memref<8x128xf32, #tpu.memory_space<vmem>>, vector<8x128xf32>
    %cst_6 = arith.constant dense<0.000000e+00> : vector<64x128xf32>
    %17 = tpu.matmul %15, %16, %cst_6 {dimension_numbers = #tpu.dot_dimension_numbers<[1], [0], [0], [1], [0, 0, 1, 1], [], []>} : vector<64x8xf32>, vector<8x128xf32>, vector<64x128xf32> -> vector<64x128xf32>
    %c0_7 = arith.constant 0 : index
    %c0_8 = arith.constant 0 : index
    %18 = vector.load %arg3[%c0_7, %c0_8] : memref<1x128xf32, #tpu.memory_space<vmem>>, vector<1x128xf32>
    %19 = vector.broadcast %18 : vector<1x128xf32> to vector<64x128xf32>
    %20 = arith.addf %17, %19 : vector<64x128xf32>
    %21 = vector.broadcast %14 : vector<1x128xf32> to vector<64x128xf32>
    %22 = arith.mulf %20, %21 : vector<64x128xf32>
    %c0_9 = arith.constant 0 : index
    %c0_10 = arith.constant 0 : index
    %23 = vector.load %arg25[%c0_9, %c0_10] : memref<64x128xf32, #tpu.memory_space<vmem>>, vector<64x128xf32>
    tpu.vector_store %arg25[%c0_9, %c0_10], %22 {strides = array<i32>} : memref<64x128xf32, #tpu.memory_space<vmem>>, vector<64x128xf32>,
    %c0_11 = arith.constant 0 : index
    %c0_12 = arith.constant 0 : index
    %24 = vector.load %arg4[%c0_11, %c0_12] : memref<8x128xf32, #tpu.memory_space<vmem>>, vector<8x128xf32>
    %cst_13 = arith.constant dense<0.000000e+00> : vector<64x128xf32>
    %25 = tpu.matmul %15, %24, %cst_13 {dimension_numbers = #tpu.dot_dimension_numbers<[1], [0], [0], [1], [0, 0, 1, 1], [], []>} : vector<64x8xf32>, vector<8x128xf32>, vector<64x128xf32> -> vector<64x128xf32>
    %c0_14 = arith.constant 0 : index
    %c0_15 = arith.constant 0 : index
    %26 = vector.load %arg6[%c0_14, %c0_15] : memref<1x128xf32, #tpu.memory_space<vmem>>, vector<1x128xf32>
    %27 = vector.broadcast %26 : vector<1x128xf32> to vector<64x128xf32>
    %28 = arith.addf %25, %27 : vector<64x128xf32>
    %29 = vector.broadcast %14 : vector<1x128xf32> to vector<64x128xf32>
    %30 = arith.mulf %28, %29 : vector<64x128xf32>
    %c0_16 = arith.constant 0 : index
    %c0_17 = arith.constant 0 : index
    %31 = vector.load %arg26[%c0_16, %c0_17] : memref<64x128xf32, #tpu.memory_space<vmem>>, vector<64x128xf32>
    tpu.vector_store %arg26[%c0_16, %c0_17], %30 {strides = array<i32>} : memref<64x128xf32, #tpu.memory_space<vmem>>, vector<64x128xf32>,
    %c0_18 = arith.constant 0 : index
    %c0_19 = arith.constant 0 : index
    %32 = vector.load %arg2[%c0_18, %c0_19] : memref<32x128xf32, #tpu.memory_space<vmem>>, vector<32x128xf32>
    %33 = vector.broadcast %14 : vector<1x128xf32> to vector<32x128xf32>
    %34 = arith.mulf %32, %33 : vector<32x128xf32>
    %c0_20 = arith.constant 0 : index
    %c0_21 = arith.constant 0 : index
    %35 = vector.load %arg5[%c0_20, %c0_21] : memref<32x128xf32, #tpu.memory_space<vmem>>, vector<32x128xf32>
    %36 = vector.broadcast %14 : vector<1x128xf32> to vector<32x128xf32>
    %37 = arith.mulf %35, %36 : vector<32x128xf32>
    %cst_22 = arith.constant 0.000000e+00 : f32
    %38 = vector.broadcast %cst_22 : f32 to vector<8x32xf32>
    %cst_23 = arith.constant 0.000000e+00 : f32
    %39 = vector.broadcast %cst_23 : f32 to vector<8x32xf32>
    %c0_i32 = arith.constant 0 : i32
    %c8_i32 = arith.constant 8 : i32
    %40 = arith.muli %c0_i32, %c8_i32 : i32
    %41 = arith.index_cast %40 : i32 to index
    %c0_24 = arith.constant 0 : index
    %42 = vector.load %arg25[%41, %c0_24] : memref<64x128xf32, #tpu.memory_space<vmem>>, vector<8x128xf32>
    %cst_25 = arith.constant dense<0.000000e+00> : vector<8x128xf32>
    %43 = tpu.matmul %38, %34, %cst_25 {dimension_numbers = #tpu.dot_dimension_numbers<[1], [0], [0], [1], [0, 0, 1, 1], [], []>} : vector<8x32xf32>, vector<32x128xf32>, vector<8x128xf32> -> vector<8x128xf32>
    %44 = arith.addf %42, %43 : vector<8x128xf32>
    %45 = arith.negf %44 : vector<8x128xf32>
    %46 = math.exp %45 : vector<8x128xf32>
    %cst_26 = arith.constant 1.000000e+00 : f32
    %47 = vector.broadcast %cst_26 : f32 to vector<8x128xf32>
    %48 = arith.addf %47, %46 : vector<8x128xf32>
    %49 = arith.divf %47, %48 : vector<8x128xf32>
    %cst_27 = arith.constant 2.000000e+00 : f32
    %50 = vector.broadcast %cst_27 : f32 to vector<8x128xf32>
    %51 = arith.mulf %50, %49 : vector<8x128xf32>
    %cst_28 = arith.constant 1.000000e+00 : f32
    %52 = vector.broadcast %cst_28 : f32 to vector<8x128xf32>
    %53 = arith.subf %51, %52 : vector<8x128xf32>
    %54 = arith.select %5, %53, %49 : vector<8x128xi1>, vector<8x128xf32>
    %55 = vector.extract_strided_slice %54 {offsets = [0, 0], sizes = [8, 32], strides = [1, 1]} : vector<8x128xf32> to vector<8x32xf32>
    %56 = vector.extract_strided_slice %54 {offsets = [0, 32], sizes = [8, 32], strides = [1, 1]} : vector<8x128xf32> to vector<8x32xf32>
    %57 = vector.extract_strided_slice %54 {offsets = [0, 64], sizes = [8, 32], strides = [1, 1]} : vector<8x128xf32> to vector<8x32xf32>
    %58 = vector.extract_strided_slice %54 {offsets = [0, 96], sizes = [8, 32], strides = [1, 1]} : vector<8x128xf32> to vector<8x32xf32>
    %59 = arith.mulf %56, %38 : vector<8x32xf32>
    %60 = arith.mulf %55, %57 : vector<8x32xf32>
    %61 = arith.addf %59, %60 : vector<8x32xf32>
    %62 = math.tanh %61 : vector<8x32xf32>
    %63 = arith.mulf %58, %62 : vector<8x32xf32>
    %64 = arith.index_cast %40 : i32 to index
    %c0_29 = arith.constant 0 : index
    %65 = vector.load %arg27[%64, %c0_29] : memref<64x32xf32, #tpu.memory_space<vmem>>, vector<8x32xf32>
    tpu.vector_store %arg27[%64, %c0_29], %63 {strides = array<i32>} : memref<64x32xf32, #tpu.memory_space<vmem>>, vector<8x32xf32>,
    %c7_i32 = arith.constant 7 : i32
    %66 = arith.subi %c7_i32, %c0_i32 : i32
    %c8_i32_30 = arith.constant 8 : i32
    %67 = arith.muli %66, %c8_i32_30 : i32
    %68 = arith.index_cast %67 : i32 to index
    %c0_31 = arith.constant 0 : index
    %69 = vector.load %arg26[%68, %c0_31] : memref<64x128xf32, #tpu.memory_space<vmem>>, vector<8x128xf32>
    %cst_32 = arith.constant dense<0.000000e+00> : vector<8x128xf32>
    %70 = tpu.matmul %39, %37, %cst_32 {dimension_numbers = #tpu.dot_dimension_numbers<[1], [0], [0], [1], [0, 0, 1, 1], [], []>} : vector<8x32xf32>, vector<32x128xf32>, vector<8x128xf32> -> vector<8x128xf32>
    %71 = arith.addf %69, %70 : vector<8x128xf32>
    %72 = arith.negf %71 : vector<8x128xf32>
    %73 = math.exp %72 : vector<8x128xf32>
    %cst_33 = arith.constant 1.000000e+00 : f32
    %74 = vector.broadcast %cst_33 : f32 to vector<8x128xf32>
    %75 = arith.addf %74, %73 : vector<8x128xf32>
    %76 = arith.divf %74, %75 : vector<8x128xf32>
    %cst_34 = arith.constant 2.000000e+00 : f32
    %77 = vector.broadcast %cst_34 : f32 to vector<8x128xf32>
    %78 = arith.mulf %77, %76 : vector<8x128xf32>
    %cst_35 = arith.constant 1.000000e+00 : f32
    %79 = vector.broadcast %cst_35 : f32 to vector<8x128xf32>
    %80 = arith.subf %78, %79 : vector<8x128xf32>
    %81 = arith.select %5, %80, %76 : vector<8x128xi1>, vector<8x128xf32>
    %82 = vector.extract_strided_slice %81 {offsets = [0, 0], sizes = [8, 32], strides = [1, 1]} : vector<8x128xf32> to vector<8x32xf32>
    %83 = vector.extract_strided_slice %81 {offsets = [0, 32], sizes = [8, 32], strides = [1, 1]} : vector<8x128xf32> to vector<8x32xf32>
    %84 = vector.extract_strided_slice %81 {offsets = [0, 64], sizes = [8, 32], strides = [1, 1]} : vector<8x128xf32> to vector<8x32xf32>
    %85 = vector.extract_strided_slice %81 {offsets = [0, 96], sizes = [8, 32], strides = [1, 1]} : vector<8x128xf32> to vector<8x32xf32>
    %86 = arith.mulf %83, %39 : vector<8x32xf32>
    %87 = arith.mulf %82, %84 : vector<8x32xf32>
    %88 = arith.addf %86, %87 : vector<8x32xf32>
    %89 = math.tanh %88 : vector<8x32xf32>
    %90 = arith.mulf %85, %89 : vector<8x32xf32>
    %91 = arith.index_cast %67 : i32 to index
    %c0_36 = arith.constant 0 : index
    %92 = vector.load %arg28[%91, %c0_36] : memref<64x32xf32, #tpu.memory_space<vmem>>, vector<8x32xf32>
    tpu.vector_store %arg28[%91, %c0_36], %90 {strides = array<i32>} : memref<64x32xf32, #tpu.memory_space<vmem>>, vector<8x32xf32>,
    %c1_i32 = arith.constant 1 : i32
    %c8_i32_37 = arith.constant 8 : i32
    %93 = arith.muli %c1_i32, %c8_i32_37 : i32
    %94 = arith.index_cast %93 : i32 to index
    %c0_38 = arith.constant 0 : index
    %95 = vector.load %arg25[%94, %c0_38] : memref<64x128xf32, #tpu.memory_space<vmem>>, vector<8x128xf32>
    %cst_39 = arith.constant dense<0.000000e+00> : vector<8x128xf32>
    %96 = tpu.matmul %63, %34, %cst_39 {dimension_numbers = #tpu.dot_dimension_numbers<[1], [0], [0], [1], [0, 0, 1, 1], [], []>} : vector<8x32xf32>, vector<32x128xf32>, vector<8x128xf32> -> vector<8x128xf32>
    %97 = arith.addf %95, %96 : vector<8x128xf32>
    %98 = arith.negf %97 : vector<8x128xf32>
    %99 = math.exp %98 : vector<8x128xf32>
    %cst_40 = arith.constant 1.000000e+00 : f32
    %100 = vector.broadcast %cst_40 : f32 to vector<8x128xf32>
    %101 = arith.addf %100, %99 : vector<8x128xf32>
    %102 = arith.divf %100, %101 : vector<8x128xf32>
    %cst_41 = arith.constant 2.000000e+00 : f32
    %103 = vector.broadcast %cst_41 : f32 to vector<8x128xf32>
    %104 = arith.mulf %103, %102 : vector<8x128xf32>
    %cst_42 = arith.constant 1.000000e+00 : f32
    %105 = vector.broadcast %cst_42 : f32 to vector<8x128xf32>
    %106 = arith.subf %104, %105 : vector<8x128xf32>
    %107 = arith.select %5, %106, %102 : vector<8x128xi1>, vector<8x128xf32>
    %108 = vector.extract_strided_slice %107 {offsets = [0, 0], sizes = [8, 32], strides = [1, 1]} : vector<8x128xf32> to vector<8x32xf32>
    %109 = vector.extract_strided_slice %107 {offsets = [0, 32], sizes = [8, 32], strides = [1, 1]} : vector<8x128xf32> to vector<8x32xf32>
    %110 = vector.extract_strided_slice %107 {offsets = [0, 64], sizes = [8, 32], strides = [1, 1]} : vector<8x128xf32> to vector<8x32xf32>
    %111 = vector.extract_strided_slice %107 {offsets = [0, 96], sizes = [8, 32], strides = [1, 1]} : vector<8x128xf32> to vector<8x32xf32>
    %112 = arith.mulf %109, %61 : vector<8x32xf32>
    %113 = arith.mulf %108, %110 : vector<8x32xf32>
    %114 = arith.addf %112, %113 : vector<8x32xf32>
    %115 = math.tanh %114 : vector<8x32xf32>
    %116 = arith.mulf %111, %115 : vector<8x32xf32>
    %117 = arith.index_cast %93 : i32 to index
    %c0_43 = arith.constant 0 : index
    %118 = vector.load %arg27[%117, %c0_43] : memref<64x32xf32, #tpu.memory_space<vmem>>, vector<8x32xf32>
    tpu.vector_store %arg27[%117, %c0_43], %116 {strides = array<i32>} : memref<64x32xf32, #tpu.memory_space<vmem>>, vector<8x32xf32>,
    %c7_i32_44 = arith.constant 7 : i32
    %119 = arith.subi %c7_i32_44, %c1_i32 : i32
    %c8_i32_45 = arith.constant 8 : i32
    %120 = arith.muli %119, %c8_i32_45 : i32
    %121 = arith.index_cast %120 : i32 to index
    %c0_46 = arith.constant 0 : index
    %122 = vector.load %arg26[%121, %c0_46] : memref<64x128xf32, #tpu.memory_space<vmem>>, vector<8x128xf32>
    %cst_47 = arith.constant dense<0.000000e+00> : vector<8x128xf32>
    %123 = tpu.matmul %90, %37, %cst_47 {dimension_numbers = #tpu.dot_dimension_numbers<[1], [0], [0], [1], [0, 0, 1, 1], [], []>} : vector<8x32xf32>, vector<32x128xf32>, vector<8x128xf32> -> vector<8x128xf32>
    %124 = arith.addf %122, %123 : vector<8x128xf32>
    %125 = arith.negf %124 : vector<8x128xf32>
    %126 = math.exp %125 : vector<8x128xf32>
    %cst_48 = arith.constant 1.000000e+00 : f32
    %127 = vector.broadcast %cst_48 : f32 to vector<8x128xf32>
    %128 = arith.addf %127, %126 : vector<8x128xf32>
    %129 = arith.divf %127, %128 : vector<8x128xf32>
    %cst_49 = arith.constant 2.000000e+00 : f32
    %130 = vector.broadcast %cst_49 : f32 to vector<8x128xf32>
    %131 = arith.mulf %130, %129 : vector<8x128xf32>
    %cst_50 = arith.constant 1.000000e+00 : f32
    %132 = vector.broadcast %cst_50 : f32 to vector<8x128xf32>
    %133 = arith.subf %131, %132 : vector<8x128xf32>
    %134 = arith.select %5, %133, %129 : vector<8x128xi1>, vector<8x128xf32>
    %135 = vector.extract_strided_slice %134 {offsets = [0, 0], sizes = [8, 32], strides = [1, 1]} : vector<8x128xf32> to vector<8x32xf32>
    %136 = vector.extract_strided_slice %134 {offsets = [0, 32], sizes = [8, 32], strides = [1, 1]} : vector<8x128xf32> to vector<8x32xf32>
    %137 = vector.extract_strided_slice %134 {offsets = [0, 64], sizes = [8, 32], strides = [1, 1]} : vector<8x128xf32> to vector<8x32xf32>
    %138 = vector.extract_strided_slice %134 {offsets = [0, 96], sizes = [8, 32], strides = [1, 1]} : vector<8x128xf32> to vector<8x32xf32>
    %139 = arith.mulf %136, %88 : vector<8x32xf32>
    %140 = arith.mulf %135, %137 : vector<8x32xf32>
    %141 = arith.addf %139, %140 : vector<8x32xf32>
    %142 = math.tanh %141 : vector<8x32xf32>
    %143 = arith.mulf %138, %142 : vector<8x32xf32>
    %144 = arith.index_cast %120 : i32 to index
    %c0_51 = arith.constant 0 : index
    %145 = vector.load %arg28[%144, %c0_51] : memref<64x32xf32, #tpu.memory_space<vmem>>, vector<8x32xf32>
    tpu.vector_store %arg28[%144, %c0_51], %143 {strides = array<i32>} : memref<64x32xf32, #tpu.memory_space<vmem>>, vector<8x32xf32>,
    %c2_i32 = arith.constant 2 : i32
    %c8_i32_52 = arith.constant 8 : i32
    %146 = arith.muli %c2_i32, %c8_i32_52 : i32
    %147 = arith.index_cast %146 : i32 to index
    %c0_53 = arith.constant 0 : index
    %148 = vector.load %arg25[%147, %c0_53] : memref<64x128xf32, #tpu.memory_space<vmem>>, vector<8x128xf32>
    %cst_54 = arith.constant dense<0.000000e+00> : vector<8x128xf32>
    %149 = tpu.matmul %116, %34, %cst_54 {dimension_numbers = #tpu.dot_dimension_numbers<[1], [0], [0], [1], [0, 0, 1, 1], [], []>} : vector<8x32xf32>, vector<32x128xf32>, vector<8x128xf32> -> vector<8x128xf32>
    %150 = arith.addf %148, %149 : vector<8x128xf32>
    %151 = arith.negf %150 : vector<8x128xf32>
    %152 = math.exp %151 : vector<8x128xf32>
    %cst_55 = arith.constant 1.000000e+00 : f32
    %153 = vector.broadcast %cst_55 : f32 to vector<8x128xf32>
    %154 = arith.addf %153, %152 : vector<8x128xf32>
    %155 = arith.divf %153, %154 : vector<8x128xf32>
    %cst_56 = arith.constant 2.000000e+00 : f32
    %156 = vector.broadcast %cst_56 : f32 to vector<8x128xf32>
    %157 = arith.mulf %156, %155 : vector<8x128xf32>
    %cst_57 = arith.constant 1.000000e+00 : f32
    %158 = vector.broadcast %cst_57 : f32 to vector<8x128xf32>
    %159 = arith.subf %157, %158 : vector<8x128xf32>
    %160 = arith.select %5, %159, %155 : vector<8x128xi1>, vector<8x128xf32>
    %161 = vector.extract_strided_slice %160 {offsets = [0, 0], sizes = [8, 32], strides = [1, 1]} : vector<8x128xf32> to vector<8x32xf32>
    %162 = vector.extract_strided_slice %160 {offsets = [0, 32], sizes = [8, 32], strides = [1, 1]} : vector<8x128xf32> to vector<8x32xf32>
    %163 = vector.extract_strided_slice %160 {offsets = [0, 64], sizes = [8, 32], strides = [1, 1]} : vector<8x128xf32> to vector<8x32xf32>
    %164 = vector.extract_strided_slice %160 {offsets = [0, 96], sizes = [8, 32], strides = [1, 1]} : vector<8x128xf32> to vector<8x32xf32>
    %165 = arith.mulf %162, %114 : vector<8x32xf32>
    %166 = arith.mulf %161, %163 : vector<8x32xf32>
    %167 = arith.addf %165, %166 : vector<8x32xf32>
    %168 = math.tanh %167 : vector<8x32xf32>
    %169 = arith.mulf %164, %168 : vector<8x32xf32>
    %170 = arith.index_cast %146 : i32 to index
    %c0_58 = arith.constant 0 : index
    %171 = vector.load %arg27[%170, %c0_58] : memref<64x32xf32, #tpu.memory_space<vmem>>, vector<8x32xf32>
    tpu.vector_store %arg27[%170, %c0_58], %169 {strides = array<i32>} : memref<64x32xf32, #tpu.memory_space<vmem>>, vector<8x32xf32>,
    %c7_i32_59 = arith.constant 7 : i32
    %172 = arith.subi %c7_i32_59, %c2_i32 : i32
    %c8_i32_60 = arith.constant 8 : i32
    %173 = arith.muli %172, %c8_i32_60 : i32
    %174 = arith.index_cast %173 : i32 to index
    %c0_61 = arith.constant 0 : index
    %175 = vector.load %arg26[%174, %c0_61] : memref<64x128xf32, #tpu.memory_space<vmem>>, vector<8x128xf32>
    %cst_62 = arith.constant dense<0.000000e+00> : vector<8x128xf32>
    %176 = tpu.matmul %143, %37, %cst_62 {dimension_numbers = #tpu.dot_dimension_numbers<[1], [0], [0], [1], [0, 0, 1, 1], [], []>} : vector<8x32xf32>, vector<32x128xf32>, vector<8x128xf32> -> vector<8x128xf32>
    %177 = arith.addf %175, %176 : vector<8x128xf32>
    %178 = arith.negf %177 : vector<8x128xf32>
    %179 = math.exp %178 : vector<8x128xf32>
    %cst_63 = arith.constant 1.000000e+00 : f32
    %180 = vector.broadcast %cst_63 : f32 to vector<8x128xf32>
    %181 = arith.addf %180, %179 : vector<8x128xf32>
    %182 = arith.divf %180, %181 : vector<8x128xf32>
    %cst_64 = arith.constant 2.000000e+00 : f32
    %183 = vector.broadcast %cst_64 : f32 to vector<8x128xf32>
    %184 = arith.mulf %183, %182 : vector<8x128xf32>
    %cst_65 = arith.constant 1.000000e+00 : f32
    %185 = vector.broadcast %cst_65 : f32 to vector<8x128xf32>
    %186 = arith.subf %184, %185 : vector<8x128xf32>
    %187 = arith.select %5, %186, %182 : vector<8x128xi1>, vector<8x128xf32>
    %188 = vector.extract_strided_slice %187 {offsets = [0, 0], sizes = [8, 32], strides = [1, 1]} : vector<8x128xf32> to vector<8x32xf32>
    %189 = vector.extract_strided_slice %187 {offsets = [0, 32], sizes = [8, 32], strides = [1, 1]} : vector<8x128xf32> to vector<8x32xf32>
    %190 = vector.extract_strided_slice %187 {offsets = [0, 64], sizes = [8, 32], strides = [1, 1]} : vector<8x128xf32> to vector<8x32xf32>
    %191 = vector.extract_strided_slice %187 {offsets = [0, 96], sizes = [8, 32], strides = [1, 1]} : vector<8x128xf32> to vector<8x32xf32>
    %192 = arith.mulf %189, %141 : vector<8x32xf32>
    %193 = arith.mulf %188, %190 : vector<8x32xf32>
    %194 = arith.addf %192, %193 : vector<8x32xf32>
    %195 = math.tanh %194 : vector<8x32xf32>
    %196 = arith.mulf %191, %195 : vector<8x32xf32>
    %197 = arith.index_cast %173 : i32 to index
    %c0_66 = arith.constant 0 : index
    %198 = vector.load %arg28[%197, %c0_66] : memref<64x32xf32, #tpu.memory_space<vmem>>, vector<8x32xf32>
    tpu.vector_store %arg28[%197, %c0_66], %196 {strides = array<i32>} : memref<64x32xf32, #tpu.memory_space<vmem>>, vector<8x32xf32>,
    %c3_i32 = arith.constant 3 : i32
    %c8_i32_67 = arith.constant 8 : i32
    %199 = arith.muli %c3_i32, %c8_i32_67 : i32
    %200 = arith.index_cast %199 : i32 to index
    %c0_68 = arith.constant 0 : index
    %201 = vector.load %arg25[%200, %c0_68] : memref<64x128xf32, #tpu.memory_space<vmem>>, vector<8x128xf32>
    %cst_69 = arith.constant dense<0.000000e+00> : vector<8x128xf32>
    %202 = tpu.matmul %169, %34, %cst_69 {dimension_numbers = #tpu.dot_dimension_numbers<[1], [0], [0], [1], [0, 0, 1, 1], [], []>} : vector<8x32xf32>, vector<32x128xf32>, vector<8x128xf32> -> vector<8x128xf32>
    %203 = arith.addf %201, %202 : vector<8x128xf32>
    %204 = arith.negf %203 : vector<8x128xf32>
    %205 = math.exp %204 : vector<8x128xf32>
    %cst_70 = arith.constant 1.000000e+00 : f32
    %206 = vector.broadcast %cst_70 : f32 to vector<8x128xf32>
    %207 = arith.addf %206, %205 : vector<8x128xf32>
    %208 = arith.divf %206, %207 : vector<8x128xf32>
    %cst_71 = arith.constant 2.000000e+00 : f32
    %209 = vector.broadcast %cst_71 : f32 to vector<8x128xf32>
    %210 = arith.mulf %209, %208 : vector<8x128xf32>
    %cst_72 = arith.constant 1.000000e+00 : f32
    %211 = vector.broadcast %cst_72 : f32 to vector<8x128xf32>
    %212 = arith.subf %210, %211 : vector<8x128xf32>
    %213 = arith.select %5, %212, %208 : vector<8x128xi1>, vector<8x128xf32>
    %214 = vector.extract_strided_slice %213 {offsets = [0, 0], sizes = [8, 32], strides = [1, 1]} : vector<8x128xf32> to vector<8x32xf32>
    %215 = vector.extract_strided_slice %213 {offsets = [0, 32], sizes = [8, 32], strides = [1, 1]} : vector<8x128xf32> to vector<8x32xf32>
    %216 = vector.extract_strided_slice %213 {offsets = [0, 64], sizes = [8, 32], strides = [1, 1]} : vector<8x128xf32> to vector<8x32xf32>
    %217 = vector.extract_strided_slice %213 {offsets = [0, 96], sizes = [8, 32], strides = [1, 1]} : vector<8x128xf32> to vector<8x32xf32>
    %218 = arith.mulf %215, %167 : vector<8x32xf32>
    %219 = arith.mulf %214, %216 : vector<8x32xf32>
    %220 = arith.addf %218, %219 : vector<8x32xf32>
    %221 = math.tanh %220 : vector<8x32xf32>
    %222 = arith.mulf %217, %221 : vector<8x32xf32>
    %223 = arith.index_cast %199 : i32 to index
    %c0_73 = arith.constant 0 : index
    %224 = vector.load %arg27[%223, %c0_73] : memref<64x32xf32, #tpu.memory_space<vmem>>, vector<8x32xf32>
    tpu.vector_store %arg27[%223, %c0_73], %222 {strides = array<i32>} : memref<64x32xf32, #tpu.memory_space<vmem>>, vector<8x32xf32>,
    %c7_i32_74 = arith.constant 7 : i32
    %225 = arith.subi %c7_i32_74, %c3_i32 : i32
    %c8_i32_75 = arith.constant 8 : i32
    %226 = arith.muli %225, %c8_i32_75 : i32
    %227 = arith.index_cast %226 : i32 to index
    %c0_76 = arith.constant 0 : index
    %228 = vector.load %arg26[%227, %c0_76] : memref<64x128xf32, #tpu.memory_space<vmem>>, vector<8x128xf32>
    %cst_77 = arith.constant dense<0.000000e+00> : vector<8x128xf32>
    %229 = tpu.matmul %196, %37, %cst_77 {dimension_numbers = #tpu.dot_dimension_numbers<[1], [0], [0], [1], [0, 0, 1, 1], [], []>} : vector<8x32xf32>, vector<32x128xf32>, vector<8x128xf32> -> vector<8x128xf32>
    %230 = arith.addf %228, %229 : vector<8x128xf32>
    %231 = arith.negf %230 : vector<8x128xf32>
    %232 = math.exp %231 : vector<8x128xf32>
    %cst_78 = arith.constant 1.000000e+00 : f32
    %233 = vector.broadcast %cst_78 : f32 to vector<8x128xf32>
    %234 = arith.addf %233, %232 : vector<8x128xf32>
    %235 = arith.divf %233, %234 : vector<8x128xf32>
    %cst_79 = arith.constant 2.000000e+00 : f32
    %236 = vector.broadcast %cst_79 : f32 to vector<8x128xf32>
    %237 = arith.mulf %236, %235 : vector<8x128xf32>
    %cst_80 = arith.constant 1.000000e+00 : f32
    %238 = vector.broadcast %cst_80 : f32 to vector<8x128xf32>
    %239 = arith.subf %237, %238 : vector<8x128xf32>
    %240 = arith.select %5, %239, %235 : vector<8x128xi1>, vector<8x128xf32>
    %241 = vector.extract_strided_slice %240 {offsets = [0, 0], sizes = [8, 32], strides = [1, 1]} : vector<8x128xf32> to vector<8x32xf32>
    %242 = vector.extract_strided_slice %240 {offsets = [0, 32], sizes = [8, 32], strides = [1, 1]} : vector<8x128xf32> to vector<8x32xf32>
    %243 = vector.extract_strided_slice %240 {offsets = [0, 64], sizes = [8, 32], strides = [1, 1]} : vector<8x128xf32> to vector<8x32xf32>
    %244 = vector.extract_strided_slice %240 {offsets = [0, 96], sizes = [8, 32], strides = [1, 1]} : vector<8x128xf32> to vector<8x32xf32>
    %245 = arith.mulf %242, %194 : vector<8x32xf32>
    %246 = arith.mulf %241, %243 : vector<8x32xf32>
    %247 = arith.addf %245, %246 : vector<8x32xf32>
    %248 = math.tanh %247 : vector<8x32xf32>
    %249 = arith.mulf %244, %248 : vector<8x32xf32>
    %250 = arith.index_cast %226 : i32 to index
    %c0_81 = arith.constant 0 : index
    %251 = vector.load %arg28[%250, %c0_81] : memref<64x32xf32, #tpu.memory_space<vmem>>, vector<8x32xf32>
    tpu.vector_store %arg28[%250, %c0_81], %249 {strides = array<i32>} : memref<64x32xf32, #tpu.memory_space<vmem>>, vector<8x32xf32>,
    %c4_i32 = arith.constant 4 : i32
    %c8_i32_82 = arith.constant 8 : i32
    %252 = arith.muli %c4_i32, %c8_i32_82 : i32
    %253 = arith.index_cast %252 : i32 to index
    %c0_83 = arith.constant 0 : index
    %254 = vector.load %arg25[%253, %c0_83] : memref<64x128xf32, #tpu.memory_space<vmem>>, vector<8x128xf32>
    %cst_84 = arith.constant dense<0.000000e+00> : vector<8x128xf32>
    %255 = tpu.matmul %222, %34, %cst_84 {dimension_numbers = #tpu.dot_dimension_numbers<[1], [0], [0], [1], [0, 0, 1, 1], [], []>} : vector<8x32xf32>, vector<32x128xf32>, vector<8x128xf32> -> vector<8x128xf32>
    %256 = arith.addf %254, %255 : vector<8x128xf32>
    %257 = arith.negf %256 : vector<8x128xf32>
    %258 = math.exp %257 : vector<8x128xf32>
    %cst_85 = arith.constant 1.000000e+00 : f32
    %259 = vector.broadcast %cst_85 : f32 to vector<8x128xf32>
    %260 = arith.addf %259, %258 : vector<8x128xf32>
    %261 = arith.divf %259, %260 : vector<8x128xf32>
    %cst_86 = arith.constant 2.000000e+00 : f32
    %262 = vector.broadcast %cst_86 : f32 to vector<8x128xf32>
    %263 = arith.mulf %262, %261 : vector<8x128xf32>
    %cst_87 = arith.constant 1.000000e+00 : f32
    %264 = vector.broadcast %cst_87 : f32 to vector<8x128xf32>
    %265 = arith.subf %263, %264 : vector<8x128xf32>
    %266 = arith.select %5, %265, %261 : vector<8x128xi1>, vector<8x128xf32>
    %267 = vector.extract_strided_slice %266 {offsets = [0, 0], sizes = [8, 32], strides = [1, 1]} : vector<8x128xf32> to vector<8x32xf32>
    %268 = vector.extract_strided_slice %266 {offsets = [0, 32], sizes = [8, 32], strides = [1, 1]} : vector<8x128xf32> to vector<8x32xf32>
    %269 = vector.extract_strided_slice %266 {offsets = [0, 64], sizes = [8, 32], strides = [1, 1]} : vector<8x128xf32> to vector<8x32xf32>
    %270 = vector.extract_strided_slice %266 {offsets = [0, 96], sizes = [8, 32], strides = [1, 1]} : vector<8x128xf32> to vector<8x32xf32>
    %271 = arith.mulf %268, %220 : vector<8x32xf32>
    %272 = arith.mulf %267, %269 : vector<8x32xf32>
    %273 = arith.addf %271, %272 : vector<8x32xf32>
    %274 = math.tanh %273 : vector<8x32xf32>
    %275 = arith.mulf %270, %274 : vector<8x32xf32>
    %276 = arith.index_cast %252 : i32 to index
    %c0_88 = arith.constant 0 : index
    %277 = vector.load %arg27[%276, %c0_88] : memref<64x32xf32, #tpu.memory_space<vmem>>, vector<8x32xf32>
    tpu.vector_store %arg27[%276, %c0_88], %275 {strides = array<i32>} : memref<64x32xf32, #tpu.memory_space<vmem>>, vector<8x32xf32>,
    %c7_i32_89 = arith.constant 7 : i32
    %278 = arith.subi %c7_i32_89, %c4_i32 : i32
    %c8_i32_90 = arith.constant 8 : i32
    %279 = arith.muli %278, %c8_i32_90 : i32
    %280 = arith.index_cast %279 : i32 to index
    %c0_91 = arith.constant 0 : index
    %281 = vector.load %arg26[%280, %c0_91] : memref<64x128xf32, #tpu.memory_space<vmem>>, vector<8x128xf32>
    %cst_92 = arith.constant dense<0.000000e+00> : vector<8x128xf32>
    %282 = tpu.matmul %249, %37, %cst_92 {dimension_numbers = #tpu.dot_dimension_numbers<[1], [0], [0], [1], [0, 0, 1, 1], [], []>} : vector<8x32xf32>, vector<32x128xf32>, vector<8x128xf32> -> vector<8x128xf32>
    %283 = arith.addf %281, %282 : vector<8x128xf32>
    %284 = arith.negf %283 : vector<8x128xf32>
    %285 = math.exp %284 : vector<8x128xf32>
    %cst_93 = arith.constant 1.000000e+00 : f32
    %286 = vector.broadcast %cst_93 : f32 to vector<8x128xf32>
    %287 = arith.addf %286, %285 : vector<8x128xf32>
    %288 = arith.divf %286, %287 : vector<8x128xf32>
    %cst_94 = arith.constant 2.000000e+00 : f32
    %289 = vector.broadcast %cst_94 : f32 to vector<8x128xf32>
    %290 = arith.mulf %289, %288 : vector<8x128xf32>
    %cst_95 = arith.constant 1.000000e+00 : f32
    %291 = vector.broadcast %cst_95 : f32 to vector<8x128xf32>
    %292 = arith.subf %290, %291 : vector<8x128xf32>
    %293 = arith.select %5, %292, %288 : vector<8x128xi1>, vector<8x128xf32>
    %294 = vector.extract_strided_slice %293 {offsets = [0, 0], sizes = [8, 32], strides = [1, 1]} : vector<8x128xf32> to vector<8x32xf32>
    %295 = vector.extract_strided_slice %293 {offsets = [0, 32], sizes = [8, 32], strides = [1, 1]} : vector<8x128xf32> to vector<8x32xf32>
    %296 = vector.extract_strided_slice %293 {offsets = [0, 64], sizes = [8, 32], strides = [1, 1]} : vector<8x128xf32> to vector<8x32xf32>
    %297 = vector.extract_strided_slice %293 {offsets = [0, 96], sizes = [8, 32], strides = [1, 1]} : vector<8x128xf32> to vector<8x32xf32>
    %298 = arith.mulf %295, %247 : vector<8x32xf32>
    %299 = arith.mulf %294, %296 : vector<8x32xf32>
    %300 = arith.addf %298, %299 : vector<8x32xf32>
    %301 = math.tanh %300 : vector<8x32xf32>
    %302 = arith.mulf %297, %301 : vector<8x32xf32>
    %303 = arith.index_cast %279 : i32 to index
    %c0_96 = arith.constant 0 : index
    %304 = vector.load %arg28[%303, %c0_96] : memref<64x32xf32, #tpu.memory_space<vmem>>, vector<8x32xf32>
    tpu.vector_store %arg28[%303, %c0_96], %302 {strides = array<i32>} : memref<64x32xf32, #tpu.memory_space<vmem>>, vector<8x32xf32>,
    %c5_i32 = arith.constant 5 : i32
    %c8_i32_97 = arith.constant 8 : i32
    %305 = arith.muli %c5_i32, %c8_i32_97 : i32
    %306 = arith.index_cast %305 : i32 to index
    %c0_98 = arith.constant 0 : index
    %307 = vector.load %arg25[%306, %c0_98] : memref<64x128xf32, #tpu.memory_space<vmem>>, vector<8x128xf32>
    %cst_99 = arith.constant dense<0.000000e+00> : vector<8x128xf32>
    %308 = tpu.matmul %275, %34, %cst_99 {dimension_numbers = #tpu.dot_dimension_numbers<[1], [0], [0], [1], [0, 0, 1, 1], [], []>} : vector<8x32xf32>, vector<32x128xf32>, vector<8x128xf32> -> vector<8x128xf32>
    %309 = arith.addf %307, %308 : vector<8x128xf32>
    %310 = arith.negf %309 : vector<8x128xf32>
    %311 = math.exp %310 : vector<8x128xf32>
    %cst_100 = arith.constant 1.000000e+00 : f32
    %312 = vector.broadcast %cst_100 : f32 to vector<8x128xf32>
    %313 = arith.addf %312, %311 : vector<8x128xf32>
    %314 = arith.divf %312, %313 : vector<8x128xf32>
    %cst_101 = arith.constant 2.000000e+00 : f32
    %315 = vector.broadcast %cst_101 : f32 to vector<8x128xf32>
    %316 = arith.mulf %315, %314 : vector<8x128xf32>
    %cst_102 = arith.constant 1.000000e+00 : f32
    %317 = vector.broadcast %cst_102 : f32 to vector<8x128xf32>
    %318 = arith.subf %316, %317 : vector<8x128xf32>
    %319 = arith.select %5, %318, %314 : vector<8x128xi1>, vector<8x128xf32>
    %320 = vector.extract_strided_slice %319 {offsets = [0, 0], sizes = [8, 32], strides = [1, 1]} : vector<8x128xf32> to vector<8x32xf32>
    %321 = vector.extract_strided_slice %319 {offsets = [0, 32], sizes = [8, 32], strides = [1, 1]} : vector<8x128xf32> to vector<8x32xf32>
    %322 = vector.extract_strided_slice %319 {offsets = [0, 64], sizes = [8, 32], strides = [1, 1]} : vector<8x128xf32> to vector<8x32xf32>
    %323 = vector.extract_strided_slice %319 {offsets = [0, 96], sizes = [8, 32], strides = [1, 1]} : vector<8x128xf32> to vector<8x32xf32>
    %324 = arith.mulf %321, %273 : vector<8x32xf32>
    %325 = arith.mulf %320, %322 : vector<8x32xf32>
    %326 = arith.addf %324, %325 : vector<8x32xf32>
    %327 = math.tanh %326 : vector<8x32xf32>
    %328 = arith.mulf %323, %327 : vector<8x32xf32>
    %329 = arith.index_cast %305 : i32 to index
    %c0_103 = arith.constant 0 : index
    %330 = vector.load %arg27[%329, %c0_103] : memref<64x32xf32, #tpu.memory_space<vmem>>, vector<8x32xf32>
    tpu.vector_store %arg27[%329, %c0_103], %328 {strides = array<i32>} : memref<64x32xf32, #tpu.memory_space<vmem>>, vector<8x32xf32>,
    %c7_i32_104 = arith.constant 7 : i32
    %331 = arith.subi %c7_i32_104, %c5_i32 : i32
    %c8_i32_105 = arith.constant 8 : i32
    %332 = arith.muli %331, %c8_i32_105 : i32
    %333 = arith.index_cast %332 : i32 to index
    %c0_106 = arith.constant 0 : index
    %334 = vector.load %arg26[%333, %c0_106] : memref<64x128xf32, #tpu.memory_space<vmem>>, vector<8x128xf32>
    %cst_107 = arith.constant dense<0.000000e+00> : vector<8x128xf32>
    %335 = tpu.matmul %302, %37, %cst_107 {dimension_numbers = #tpu.dot_dimension_numbers<[1], [0], [0], [1], [0, 0, 1, 1], [], []>} : vector<8x32xf32>, vector<32x128xf32>, vector<8x128xf32> -> vector<8x128xf32>
    %336 = arith.addf %334, %335 : vector<8x128xf32>
    %337 = arith.negf %336 : vector<8x128xf32>
    %338 = math.exp %337 : vector<8x128xf32>
    %cst_108 = arith.constant 1.000000e+00 : f32
    %339 = vector.broadcast %cst_108 : f32 to vector<8x128xf32>
    %340 = arith.addf %339, %338 : vector<8x128xf32>
    %341 = arith.divf %339, %340 : vector<8x128xf32>
    %cst_109 = arith.constant 2.000000e+00 : f32
    %342 = vector.broadcast %cst_109 : f32 to vector<8x128xf32>
    %343 = arith.mulf %342, %341 : vector<8x128xf32>
    %cst_110 = arith.constant 1.000000e+00 : f32
    %344 = vector.broadcast %cst_110 : f32 to vector<8x128xf32>
    %345 = arith.subf %343, %344 : vector<8x128xf32>
    %346 = arith.select %5, %345, %341 : vector<8x128xi1>, vector<8x128xf32>
    %347 = vector.extract_strided_slice %346 {offsets = [0, 0], sizes = [8, 32], strides = [1, 1]} : vector<8x128xf32> to vector<8x32xf32>
    %348 = vector.extract_strided_slice %346 {offsets = [0, 32], sizes = [8, 32], strides = [1, 1]} : vector<8x128xf32> to vector<8x32xf32>
    %349 = vector.extract_strided_slice %346 {offsets = [0, 64], sizes = [8, 32], strides = [1, 1]} : vector<8x128xf32> to vector<8x32xf32>
    %350 = vector.extract_strided_slice %346 {offsets = [0, 96], sizes = [8, 32], strides = [1, 1]} : vector<8x128xf32> to vector<8x32xf32>
    %351 = arith.mulf %348, %300 : vector<8x32xf32>
    %352 = arith.mulf %347, %349 : vector<8x32xf32>
    %353 = arith.addf %351, %352 : vector<8x32xf32>
    %354 = math.tanh %353 : vector<8x32xf32>
    %355 = arith.mulf %350, %354 : vector<8x32xf32>
    %356 = arith.index_cast %332 : i32 to index
    %c0_111 = arith.constant 0 : index
    %357 = vector.load %arg28[%356, %c0_111] : memref<64x32xf32, #tpu.memory_space<vmem>>, vector<8x32xf32>
    tpu.vector_store %arg28[%356, %c0_111], %355 {strides = array<i32>} : memref<64x32xf32, #tpu.memory_space<vmem>>, vector<8x32xf32>,
    %c6_i32 = arith.constant 6 : i32
    %c8_i32_112 = arith.constant 8 : i32
    %358 = arith.muli %c6_i32, %c8_i32_112 : i32
    %359 = arith.index_cast %358 : i32 to index
    %c0_113 = arith.constant 0 : index
    %360 = vector.load %arg25[%359, %c0_113] : memref<64x128xf32, #tpu.memory_space<vmem>>, vector<8x128xf32>
    %cst_114 = arith.constant dense<0.000000e+00> : vector<8x128xf32>
    %361 = tpu.matmul %328, %34, %cst_114 {dimension_numbers = #tpu.dot_dimension_numbers<[1], [0], [0], [1], [0, 0, 1, 1], [], []>} : vector<8x32xf32>, vector<32x128xf32>, vector<8x128xf32> -> vector<8x128xf32>
    %362 = arith.addf %360, %361 : vector<8x128xf32>
    %363 = arith.negf %362 : vector<8x128xf32>
    %364 = math.exp %363 : vector<8x128xf32>
    %cst_115 = arith.constant 1.000000e+00 : f32
    %365 = vector.broadcast %cst_115 : f32 to vector<8x128xf32>
    %366 = arith.addf %365, %364 : vector<8x128xf32>
    %367 = arith.divf %365, %366 : vector<8x128xf32>
    %cst_116 = arith.constant 2.000000e+00 : f32
    %368 = vector.broadcast %cst_116 : f32 to vector<8x128xf32>
    %369 = arith.mulf %368, %367 : vector<8x128xf32>
    %cst_117 = arith.constant 1.000000e+00 : f32
    %370 = vector.broadcast %cst_117 : f32 to vector<8x128xf32>
    %371 = arith.subf %369, %370 : vector<8x128xf32>
    %372 = arith.select %5, %371, %367 : vector<8x128xi1>, vector<8x128xf32>
    %373 = vector.extract_strided_slice %372 {offsets = [0, 0], sizes = [8, 32], strides = [1, 1]} : vector<8x128xf32> to vector<8x32xf32>
    %374 = vector.extract_strided_slice %372 {offsets = [0, 32], sizes = [8, 32], strides = [1, 1]} : vector<8x128xf32> to vector<8x32xf32>
    %375 = vector.extract_strided_slice %372 {offsets = [0, 64], sizes = [8, 32], strides = [1, 1]} : vector<8x128xf32> to vector<8x32xf32>
    %376 = vector.extract_strided_slice %372 {offsets = [0, 96], sizes = [8, 32], strides = [1, 1]} : vector<8x128xf32> to vector<8x32xf32>
    %377 = arith.mulf %374, %326 : vector<8x32xf32>
    %378 = arith.mulf %373, %375 : vector<8x32xf32>
    %379 = arith.addf %377, %378 : vector<8x32xf32>
    %380 = math.tanh %379 : vector<8x32xf32>
    %381 = arith.mulf %376, %380 : vector<8x32xf32>
    %382 = arith.index_cast %358 : i32 to index
    %c0_118 = arith.constant 0 : index
    %383 = vector.load %arg27[%382, %c0_118] : memref<64x32xf32, #tpu.memory_space<vmem>>, vector<8x32xf32>
    tpu.vector_store %arg27[%382, %c0_118], %381 {strides = array<i32>} : memref<64x32xf32, #tpu.memory_space<vmem>>, vector<8x32xf32>,
    %c7_i32_119 = arith.constant 7 : i32
    %384 = arith.subi %c7_i32_119, %c6_i32 : i32
    %c8_i32_120 = arith.constant 8 : i32
    %385 = arith.muli %384, %c8_i32_120 : i32
    %386 = arith.index_cast %385 : i32 to index
    %c0_121 = arith.constant 0 : index
    %387 = vector.load %arg26[%386, %c0_121] : memref<64x128xf32, #tpu.memory_space<vmem>>, vector<8x128xf32>
    %cst_122 = arith.constant dense<0.000000e+00> : vector<8x128xf32>
    %388 = tpu.matmul %355, %37, %cst_122 {dimension_numbers = #tpu.dot_dimension_numbers<[1], [0], [0], [1], [0, 0, 1, 1], [], []>} : vector<8x32xf32>, vector<32x128xf32>, vector<8x128xf32> -> vector<8x128xf32>
    %389 = arith.addf %387, %388 : vector<8x128xf32>
    %390 = arith.negf %389 : vector<8x128xf32>
    %391 = math.exp %390 : vector<8x128xf32>
    %cst_123 = arith.constant 1.000000e+00 : f32
    %392 = vector.broadcast %cst_123 : f32 to vector<8x128xf32>
    %393 = arith.addf %392, %391 : vector<8x128xf32>
    %394 = arith.divf %392, %393 : vector<8x128xf32>
    %cst_124 = arith.constant 2.000000e+00 : f32
    %395 = vector.broadcast %cst_124 : f32 to vector<8x128xf32>
    %396 = arith.mulf %395, %394 : vector<8x128xf32>
    %cst_125 = arith.constant 1.000000e+00 : f32
    %397 = vector.broadcast %cst_125 : f32 to vector<8x128xf32>
    %398 = arith.subf %396, %397 : vector<8x128xf32>
    %399 = arith.select %5, %398, %394 : vector<8x128xi1>, vector<8x128xf32>
    %400 = vector.extract_strided_slice %399 {offsets = [0, 0], sizes = [8, 32], strides = [1, 1]} : vector<8x128xf32> to vector<8x32xf32>
    %401 = vector.extract_strided_slice %399 {offsets = [0, 32], sizes = [8, 32], strides = [1, 1]} : vector<8x128xf32> to vector<8x32xf32>
    %402 = vector.extract_strided_slice %399 {offsets = [0, 64], sizes = [8, 32], strides = [1, 1]} : vector<8x128xf32> to vector<8x32xf32>
    %403 = vector.extract_strided_slice %399 {offsets = [0, 96], sizes = [8, 32], strides = [1, 1]} : vector<8x128xf32> to vector<8x32xf32>
    %404 = arith.mulf %401, %353 : vector<8x32xf32>
    %405 = arith.mulf %400, %402 : vector<8x32xf32>
    %406 = arith.addf %404, %405 : vector<8x32xf32>
    %407 = math.tanh %406 : vector<8x32xf32>
    %408 = arith.mulf %403, %407 : vector<8x32xf32>
    %409 = arith.index_cast %385 : i32 to index
    %c0_126 = arith.constant 0 : index
    %410 = vector.load %arg28[%409, %c0_126] : memref<64x32xf32, #tpu.memory_space<vmem>>, vector<8x32xf32>
    tpu.vector_store %arg28[%409, %c0_126], %408 {strides = array<i32>} : memref<64x32xf32, #tpu.memory_space<vmem>>, vector<8x32xf32>,
    %c7_i32_127 = arith.constant 7 : i32
    %c8_i32_128 = arith.constant 8 : i32
    %411 = arith.muli %c7_i32_127, %c8_i32_128 : i32
    %412 = arith.index_cast %411 : i32 to index
    %c0_129 = arith.constant 0 : index
    %413 = vector.load %arg25[%412, %c0_129] : memref<64x128xf32, #tpu.memory_space<vmem>>, vector<8x128xf32>
    %cst_130 = arith.constant dense<0.000000e+00> : vector<8x128xf32>
    %414 = tpu.matmul %381, %34, %cst_130 {dimension_numbers = #tpu.dot_dimension_numbers<[1], [0], [0], [1], [0, 0, 1, 1], [], []>} : vector<8x32xf32>, vector<32x128xf32>, vector<8x128xf32> -> vector<8x128xf32>
    %415 = arith.addf %413, %414 : vector<8x128xf32>
    %416 = arith.negf %415 : vector<8x128xf32>
    %417 = math.exp %416 : vector<8x128xf32>
    %cst_131 = arith.constant 1.000000e+00 : f32
    %418 = vector.broadcast %cst_131 : f32 to vector<8x128xf32>
    %419 = arith.addf %418, %417 : vector<8x128xf32>
    %420 = arith.divf %418, %419 : vector<8x128xf32>
    %cst_132 = arith.constant 2.000000e+00 : f32
    %421 = vector.broadcast %cst_132 : f32 to vector<8x128xf32>
    %422 = arith.mulf %421, %420 : vector<8x128xf32>
    %cst_133 = arith.constant 1.000000e+00 : f32
    %423 = vector.broadcast %cst_133 : f32 to vector<8x128xf32>
    %424 = arith.subf %422, %423 : vector<8x128xf32>
    %425 = arith.select %5, %424, %420 : vector<8x128xi1>, vector<8x128xf32>
    %426 = vector.extract_strided_slice %425 {offsets = [0, 0], sizes = [8, 32], strides = [1, 1]} : vector<8x128xf32> to vector<8x32xf32>
    %427 = vector.extract_strided_slice %425 {offsets = [0, 32], sizes = [8, 32], strides = [1, 1]} : vector<8x128xf32> to vector<8x32xf32>
    %428 = vector.extract_strided_slice %425 {offsets = [0, 64], sizes = [8, 32], strides = [1, 1]} : vector<8x128xf32> to vector<8x32xf32>
    %429 = vector.extract_strided_slice %425 {offsets = [0, 96], sizes = [8, 32], strides = [1, 1]} : vector<8x128xf32> to vector<8x32xf32>
    %430 = arith.mulf %427, %379 : vector<8x32xf32>
    %431 = arith.mulf %426, %428 : vector<8x32xf32>
    %432 = arith.addf %430, %431 : vector<8x32xf32>
    %433 = math.tanh %432 : vector<8x32xf32>
    %434 = arith.mulf %429, %433 : vector<8x32xf32>
    %435 = arith.index_cast %411 : i32 to index
    %c0_134 = arith.constant 0 : index
    %436 = vector.load %arg27[%435, %c0_134] : memref<64x32xf32, #tpu.memory_space<vmem>>, vector<8x32xf32>
    tpu.vector_store %arg27[%435, %c0_134], %434 {strides = array<i32>} : memref<64x32xf32, #tpu.memory_space<vmem>>, vector<8x32xf32>,
    %c7_i32_135 = arith.constant 7 : i32
    %437 = arith.subi %c7_i32_135, %c7_i32_127 : i32
    %c8_i32_136 = arith.constant 8 : i32
    %438 = arith.muli %437, %c8_i32_136 : i32
    %439 = arith.index_cast %438 : i32 to index
    %c0_137 = arith.constant 0 : index
    %440 = vector.load %arg26[%439, %c0_137] : memref<64x128xf32, #tpu.memory_space<vmem>>, vector<8x128xf32>
    %cst_138 = arith.constant dense<0.000000e+00> : vector<8x128xf32>
    %441 = tpu.matmul %408, %37, %cst_138 {dimension_numbers = #tpu.dot_dimension_numbers<[1], [0], [0], [1], [0, 0, 1, 1], [], []>} : vector<8x32xf32>, vector<32x128xf32>, vector<8x128xf32> -> vector<8x128xf32>
    %442 = arith.addf %440, %441 : vector<8x128xf32>
    %443 = arith.negf %442 : vector<8x128xf32>
    %444 = math.exp %443 : vector<8x128xf32>
    %cst_139 = arith.constant 1.000000e+00 : f32
    %445 = vector.broadcast %cst_139 : f32 to vector<8x128xf32>
    %446 = arith.addf %445, %444 : vector<8x128xf32>
    %447 = arith.divf %445, %446 : vector<8x128xf32>
    %cst_140 = arith.constant 2.000000e+00 : f32
    %448 = vector.broadcast %cst_140 : f32 to vector<8x128xf32>
    %449 = arith.mulf %448, %447 : vector<8x128xf32>
    %cst_141 = arith.constant 1.000000e+00 : f32
    %450 = vector.broadcast %cst_141 : f32 to vector<8x128xf32>
    %451 = arith.subf %449, %450 : vector<8x128xf32>
    %452 = arith.select %5, %451, %447 : vector<8x128xi1>, vector<8x128xf32>
    %453 = vector.extract_strided_slice %452 {offsets = [0, 0], sizes = [8, 32], strides = [1, 1]} : vector<8x128xf32> to vector<8x32xf32>
    %454 = vector.extract_strided_slice %452 {offsets = [0, 32], sizes = [8, 32], strides = [1, 1]} : vector<8x128xf32> to vector<8x32xf32>
    %455 = vector.extract_strided_slice %452 {offsets = [0, 64], sizes = [8, 32], strides = [1, 1]} : vector<8x128xf32> to vector<8x32xf32>
    %456 = vector.extract_strided_slice %452 {offsets = [0, 96], sizes = [8, 32], strides = [1, 1]} : vector<8x128xf32> to vector<8x32xf32>
    %457 = arith.mulf %454, %406 : vector<8x32xf32>
    %458 = arith.mulf %453, %455 : vector<8x32xf32>
    %459 = arith.addf %457, %458 : vector<8x32xf32>
    %460 = math.tanh %459 : vector<8x32xf32>
    %461 = arith.mulf %456, %460 : vector<8x32xf32>
    %462 = arith.index_cast %438 : i32 to index
    %c0_142 = arith.constant 0 : index
    %463 = vector.load %arg28[%462, %c0_142] : memref<64x32xf32, #tpu.memory_space<vmem>>, vector<8x32xf32>
    tpu.vector_store %arg28[%462, %c0_142], %461 {strides = array<i32>} : memref<64x32xf32, #tpu.memory_space<vmem>>, vector<8x32xf32>,
    %c8_i32_143 = arith.constant 8 : i32
    %c0_144 = arith.constant 0 : index
    %c0_145 = arith.constant 0 : index
    %464 = vector.load %arg27[%c0_144, %c0_145] : memref<64x32xf32, #tpu.memory_space<vmem>>, vector<64x32xf32>
    %c0_146 = arith.constant 0 : index
    %c0_147 = arith.constant 0 : index
    %465 = vector.load %arg28[%c0_146, %c0_147] : memref<64x32xf32, #tpu.memory_space<vmem>>, vector<64x32xf32>
    %c0_148 = arith.constant 0 : index
    %c0_149 = arith.constant 0 : index
    %466 = vector.load %arg7[%c0_148, %c0_149] : memref<32x128xf32, #tpu.memory_space<vmem>>, vector<32x128xf32>
    %cst_150 = arith.constant dense<0.000000e+00> : vector<64x128xf32>
    %467 = tpu.matmul %464, %466, %cst_150 {dimension_numbers = #tpu.dot_dimension_numbers<[1], [0], [0], [1], [0, 0, 1, 1], [], []>} : vector<64x32xf32>, vector<32x128xf32>, vector<64x128xf32> -> vector<64x128xf32>
    %c0_151 = arith.constant 0 : index
    %c0_152 = arith.constant 0 : index
    %468 = vector.load %arg8[%c0_151, %c0_152] : memref<32x128xf32, #tpu.memory_space<vmem>>, vector<32x128xf32>
    %cst_153 = arith.constant dense<0.000000e+00> : vector<64x128xf32>
    %469 = tpu.matmul %465, %468, %cst_153 {dimension_numbers = #tpu.dot_dimension_numbers<[1], [0], [0], [1], [0, 0, 1, 1], [], []>} : vector<64x32xf32>, vector<32x128xf32>, vector<64x128xf32> -> vector<64x128xf32>
    %470 = arith.addf %467, %469 : vector<64x128xf32>
    %c0_154 = arith.constant 0 : index
    %c0_155 = arith.constant 0 : index
    %471 = vector.load %arg10[%c0_154, %c0_155] : memref<1x128xf32, #tpu.memory_space<vmem>>, vector<1x128xf32>
    %472 = vector.broadcast %471 : vector<1x128xf32> to vector<64x128xf32>
    %473 = arith.addf %470, %472 : vector<64x128xf32>
    %474 = vector.broadcast %14 : vector<1x128xf32> to vector<64x128xf32>
    %475 = arith.mulf %473, %474 : vector<64x128xf32>
    %c0_156 = arith.constant 0 : index
    %c0_157 = arith.constant 0 : index
    %476 = vector.load %arg25[%c0_156, %c0_157] : memref<64x128xf32, #tpu.memory_space<vmem>>, vector<64x128xf32>
    tpu.vector_store %arg25[%c0_156, %c0_157], %475 {strides = array<i32>} : memref<64x128xf32, #tpu.memory_space<vmem>>, vector<64x128xf32>,
    %c0_158 = arith.constant 0 : index
    %c0_159 = arith.constant 0 : index
    %477 = vector.load %arg11[%c0_158, %c0_159] : memref<32x128xf32, #tpu.memory_space<vmem>>, vector<32x128xf32>
    %cst_160 = arith.constant dense<0.000000e+00> : vector<64x128xf32>
    %478 = tpu.matmul %464, %477, %cst_160 {dimension_numbers = #tpu.dot_dimension_numbers<[1], [0], [0], [1], [0, 0, 1, 1], [], []>} : vector<64x32xf32>, vector<32x128xf32>, vector<64x128xf32> -> vector<64x128xf32>
    %c0_161 = arith.constant 0 : index
    %c0_162 = arith.constant 0 : index
    %479 = vector.load %arg12[%c0_161, %c0_162] : memref<32x128xf32, #tpu.memory_space<vmem>>, vector<32x128xf32>
    %cst_163 = arith.constant dense<0.000000e+00> : vector<64x128xf32>
    %480 = tpu.matmul %465, %479, %cst_163 {dimension_numbers = #tpu.dot_dimension_numbers<[1], [0], [0], [1], [0, 0, 1, 1], [], []>} : vector<64x32xf32>, vector<32x128xf32>, vector<64x128xf32> -> vector<64x128xf32>
    %481 = arith.addf %478, %480 : vector<64x128xf32>
    %c0_164 = arith.constant 0 : index
    %c0_165 = arith.constant 0 : index
    %482 = vector.load %arg14[%c0_164, %c0_165] : memref<1x128xf32, #tpu.memory_space<vmem>>, vector<1x128xf32>
    %483 = vector.broadcast %482 : vector<1x128xf32> to vector<64x128xf32>
    %484 = arith.addf %481, %483 : vector<64x128xf32>
    %485 = vector.broadcast %14 : vector<1x128xf32> to vector<64x128xf32>
    %486 = arith.mulf %484, %485 : vector<64x128xf32>
    %c0_166 = arith.constant 0 : index
    %c0_167 = arith.constant 0 : index
    %487 = vector.load %arg26[%c0_166, %c0_167] : memref<64x128xf32, #tpu.memory_space<vmem>>, vector<64x128xf32>
    tpu.vector_store %arg26[%c0_166, %c0_167], %486 {strides = array<i32>} : memref<64x128xf32, #tpu.memory_space<vmem>>, vector<64x128xf32>,
    %c0_168 = arith.constant 0 : index
    %c0_169 = arith.constant 0 : index
    %488 = vector.load %arg9[%c0_168, %c0_169] : memref<32x128xf32, #tpu.memory_space<vmem>>, vector<32x128xf32>
    %489 = vector.broadcast %14 : vector<1x128xf32> to vector<32x128xf32>
    %490 = arith.mulf %488, %489 : vector<32x128xf32>
    %c0_170 = arith.constant 0 : index
    %c0_171 = arith.constant 0 : index
    %491 = vector.load %arg13[%c0_170, %c0_171] : memref<32x128xf32, #tpu.memory_space<vmem>>, vector<32x128xf32>
    %492 = vector.broadcast %14 : vector<1x128xf32> to vector<32x128xf32>
    %493 = arith.mulf %491, %492 : vector<32x128xf32>
    %cst_172 = arith.constant 0.000000e+00 : f32
    %494 = vector.broadcast %cst_172 : f32 to vector<8x32xf32>
    %cst_173 = arith.constant 0.000000e+00 : f32
    %495 = vector.broadcast %cst_173 : f32 to vector<8x32xf32>
    %c0_i32_174 = arith.constant 0 : i32
    %c8_i32_175 = arith.constant 8 : i32
    %496 = arith.muli %c0_i32_174, %c8_i32_175 : i32
    %497 = arith.index_cast %496 : i32 to index
    %c0_176 = arith.constant 0 : index
    %498 = vector.load %arg25[%497, %c0_176] : memref<64x128xf32, #tpu.memory_space<vmem>>, vector<8x128xf32>
    %cst_177 = arith.constant dense<0.000000e+00> : vector<8x128xf32>
    %499 = tpu.matmul %494, %490, %cst_177 {dimension_numbers = #tpu.dot_dimension_numbers<[1], [0], [0], [1], [0, 0, 1, 1], [], []>} : vector<8x32xf32>, vector<32x128xf32>, vector<8x128xf32> -> vector<8x128xf32>
    %500 = arith.addf %498, %499 : vector<8x128xf32>
    %501 = arith.negf %500 : vector<8x128xf32>
    %502 = math.exp %501 : vector<8x128xf32>
    %cst_178 = arith.constant 1.000000e+00 : f32
    %503 = vector.broadcast %cst_178 : f32 to vector<8x128xf32>
    %504 = arith.addf %503, %502 : vector<8x128xf32>
    %505 = arith.divf %503, %504 : vector<8x128xf32>
    %cst_179 = arith.constant 2.000000e+00 : f32
    %506 = vector.broadcast %cst_179 : f32 to vector<8x128xf32>
    %507 = arith.mulf %506, %505 : vector<8x128xf32>
    %cst_180 = arith.constant 1.000000e+00 : f32
    %508 = vector.broadcast %cst_180 : f32 to vector<8x128xf32>
    %509 = arith.subf %507, %508 : vector<8x128xf32>
    %510 = arith.select %5, %509, %505 : vector<8x128xi1>, vector<8x128xf32>
    %511 = vector.extract_strided_slice %510 {offsets = [0, 0], sizes = [8, 32], strides = [1, 1]} : vector<8x128xf32> to vector<8x32xf32>
    %512 = vector.extract_strided_slice %510 {offsets = [0, 32], sizes = [8, 32], strides = [1, 1]} : vector<8x128xf32> to vector<8x32xf32>
    %513 = vector.extract_strided_slice %510 {offsets = [0, 64], sizes = [8, 32], strides = [1, 1]} : vector<8x128xf32> to vector<8x32xf32>
    %514 = vector.extract_strided_slice %510 {offsets = [0, 96], sizes = [8, 32], strides = [1, 1]} : vector<8x128xf32> to vector<8x32xf32>
    %515 = arith.mulf %512, %494 : vector<8x32xf32>
    %516 = arith.mulf %511, %513 : vector<8x32xf32>
    %517 = arith.addf %515, %516 : vector<8x32xf32>
    %518 = math.tanh %517 : vector<8x32xf32>
    %519 = arith.mulf %514, %518 : vector<8x32xf32>
    %c7_i32_181 = arith.constant 7 : i32
    %520 = arith.subi %c7_i32_181, %c0_i32_174 : i32
    %c8_i32_182 = arith.constant 8 : i32
    %521 = arith.muli %520, %c8_i32_182 : i32
    %522 = arith.index_cast %521 : i32 to index
    %c0_183 = arith.constant 0 : index
    %523 = vector.load %arg26[%522, %c0_183] : memref<64x128xf32, #tpu.memory_space<vmem>>, vector<8x128xf32>
    %cst_184 = arith.constant dense<0.000000e+00> : vector<8x128xf32>
    %524 = tpu.matmul %495, %493, %cst_184 {dimension_numbers = #tpu.dot_dimension_numbers<[1], [0], [0], [1], [0, 0, 1, 1], [], []>} : vector<8x32xf32>, vector<32x128xf32>, vector<8x128xf32> -> vector<8x128xf32>
    %525 = arith.addf %523, %524 : vector<8x128xf32>
    %526 = arith.negf %525 : vector<8x128xf32>
    %527 = math.exp %526 : vector<8x128xf32>
    %cst_185 = arith.constant 1.000000e+00 : f32
    %528 = vector.broadcast %cst_185 : f32 to vector<8x128xf32>
    %529 = arith.addf %528, %527 : vector<8x128xf32>
    %530 = arith.divf %528, %529 : vector<8x128xf32>
    %cst_186 = arith.constant 2.000000e+00 : f32
    %531 = vector.broadcast %cst_186 : f32 to vector<8x128xf32>
    %532 = arith.mulf %531, %530 : vector<8x128xf32>
    %cst_187 = arith.constant 1.000000e+00 : f32
    %533 = vector.broadcast %cst_187 : f32 to vector<8x128xf32>
    %534 = arith.subf %532, %533 : vector<8x128xf32>
    %535 = arith.select %5, %534, %530 : vector<8x128xi1>, vector<8x128xf32>
    %536 = vector.extract_strided_slice %535 {offsets = [0, 0], sizes = [8, 32], strides = [1, 1]} : vector<8x128xf32> to vector<8x32xf32>
    %537 = vector.extract_strided_slice %535 {offsets = [0, 32], sizes = [8, 32], strides = [1, 1]} : vector<8x128xf32> to vector<8x32xf32>
    %538 = vector.extract_strided_slice %535 {offsets = [0, 64], sizes = [8, 32], strides = [1, 1]} : vector<8x128xf32> to vector<8x32xf32>
    %539 = vector.extract_strided_slice %535 {offsets = [0, 96], sizes = [8, 32], strides = [1, 1]} : vector<8x128xf32> to vector<8x32xf32>
    %540 = arith.mulf %537, %495 : vector<8x32xf32>
    %541 = arith.mulf %536, %538 : vector<8x32xf32>
    %542 = arith.addf %540, %541 : vector<8x32xf32>
    %543 = math.tanh %542 : vector<8x32xf32>
    %544 = arith.mulf %539, %543 : vector<8x32xf32>
    %c1_i32_188 = arith.constant 1 : i32
    %c8_i32_189 = arith.constant 8 : i32
    %545 = arith.muli %c1_i32_188, %c8_i32_189 : i32
    %546 = arith.index_cast %545 : i32 to index
    %c0_190 = arith.constant 0 : index
    %547 = vector.load %arg25[%546, %c0_190] : memref<64x128xf32, #tpu.memory_space<vmem>>, vector<8x128xf32>
    %cst_191 = arith.constant dense<0.000000e+00> : vector<8x128xf32>
    %548 = tpu.matmul %519, %490, %cst_191 {dimension_numbers = #tpu.dot_dimension_numbers<[1], [0], [0], [1], [0, 0, 1, 1], [], []>} : vector<8x32xf32>, vector<32x128xf32>, vector<8x128xf32> -> vector<8x128xf32>
    %549 = arith.addf %547, %548 : vector<8x128xf32>
    %550 = arith.negf %549 : vector<8x128xf32>
    %551 = math.exp %550 : vector<8x128xf32>
    %cst_192 = arith.constant 1.000000e+00 : f32
    %552 = vector.broadcast %cst_192 : f32 to vector<8x128xf32>
    %553 = arith.addf %552, %551 : vector<8x128xf32>
    %554 = arith.divf %552, %553 : vector<8x128xf32>
    %cst_193 = arith.constant 2.000000e+00 : f32
    %555 = vector.broadcast %cst_193 : f32 to vector<8x128xf32>
    %556 = arith.mulf %555, %554 : vector<8x128xf32>
    %cst_194 = arith.constant 1.000000e+00 : f32
    %557 = vector.broadcast %cst_194 : f32 to vector<8x128xf32>
    %558 = arith.subf %556, %557 : vector<8x128xf32>
    %559 = arith.select %5, %558, %554 : vector<8x128xi1>, vector<8x128xf32>
    %560 = vector.extract_strided_slice %559 {offsets = [0, 0], sizes = [8, 32], strides = [1, 1]} : vector<8x128xf32> to vector<8x32xf32>
    %561 = vector.extract_strided_slice %559 {offsets = [0, 32], sizes = [8, 32], strides = [1, 1]} : vector<8x128xf32> to vector<8x32xf32>
    %562 = vector.extract_strided_slice %559 {offsets = [0, 64], sizes = [8, 32], strides = [1, 1]} : vector<8x128xf32> to vector<8x32xf32>
    %563 = vector.extract_strided_slice %559 {offsets = [0, 96], sizes = [8, 32], strides = [1, 1]} : vector<8x128xf32> to vector<8x32xf32>
    %564 = arith.mulf %561, %517 : vector<8x32xf32>
    %565 = arith.mulf %560, %562 : vector<8x32xf32>
    %566 = arith.addf %564, %565 : vector<8x32xf32>
    %567 = math.tanh %566 : vector<8x32xf32>
    %568 = arith.mulf %563, %567 : vector<8x32xf32>
    %c7_i32_195 = arith.constant 7 : i32
    %569 = arith.subi %c7_i32_195, %c1_i32_188 : i32
    %c8_i32_196 = arith.constant 8 : i32
    %570 = arith.muli %569, %c8_i32_196 : i32
    %571 = arith.index_cast %570 : i32 to index
    %c0_197 = arith.constant 0 : index
    %572 = vector.load %arg26[%571, %c0_197] : memref<64x128xf32, #tpu.memory_space<vmem>>, vector<8x128xf32>
    %cst_198 = arith.constant dense<0.000000e+00> : vector<8x128xf32>
    %573 = tpu.matmul %544, %493, %cst_198 {dimension_numbers = #tpu.dot_dimension_numbers<[1], [0], [0], [1], [0, 0, 1, 1], [], []>} : vector<8x32xf32>, vector<32x128xf32>, vector<8x128xf32> -> vector<8x128xf32>
    %574 = arith.addf %572, %573 : vector<8x128xf32>
    %575 = arith.negf %574 : vector<8x128xf32>
    %576 = math.exp %575 : vector<8x128xf32>
    %cst_199 = arith.constant 1.000000e+00 : f32
    %577 = vector.broadcast %cst_199 : f32 to vector<8x128xf32>
    %578 = arith.addf %577, %576 : vector<8x128xf32>
    %579 = arith.divf %577, %578 : vector<8x128xf32>
    %cst_200 = arith.constant 2.000000e+00 : f32
    %580 = vector.broadcast %cst_200 : f32 to vector<8x128xf32>
    %581 = arith.mulf %580, %579 : vector<8x128xf32>
    %cst_201 = arith.constant 1.000000e+00 : f32
    %582 = vector.broadcast %cst_201 : f32 to vector<8x128xf32>
    %583 = arith.subf %581, %582 : vector<8x128xf32>
    %584 = arith.select %5, %583, %579 : vector<8x128xi1>, vector<8x128xf32>
    %585 = vector.extract_strided_slice %584 {offsets = [0, 0], sizes = [8, 32], strides = [1, 1]} : vector<8x128xf32> to vector<8x32xf32>
    %586 = vector.extract_strided_slice %584 {offsets = [0, 32], sizes = [8, 32], strides = [1, 1]} : vector<8x128xf32> to vector<8x32xf32>
    %587 = vector.extract_strided_slice %584 {offsets = [0, 64], sizes = [8, 32], strides = [1, 1]} : vector<8x128xf32> to vector<8x32xf32>
    %588 = vector.extract_strided_slice %584 {offsets = [0, 96], sizes = [8, 32], strides = [1, 1]} : vector<8x128xf32> to vector<8x32xf32>
    %589 = arith.mulf %586, %542 : vector<8x32xf32>
    %590 = arith.mulf %585, %587 : vector<8x32xf32>
    %591 = arith.addf %589, %590 : vector<8x32xf32>
    %592 = math.tanh %591 : vector<8x32xf32>
    %593 = arith.mulf %588, %592 : vector<8x32xf32>
    %c2_i32_202 = arith.constant 2 : i32
    %c8_i32_203 = arith.constant 8 : i32
    %594 = arith.muli %c2_i32_202, %c8_i32_203 : i32
    %595 = arith.index_cast %594 : i32 to index
    %c0_204 = arith.constant 0 : index
    %596 = vector.load %arg25[%595, %c0_204] : memref<64x128xf32, #tpu.memory_space<vmem>>, vector<8x128xf32>
    %cst_205 = arith.constant dense<0.000000e+00> : vector<8x128xf32>
    %597 = tpu.matmul %568, %490, %cst_205 {dimension_numbers = #tpu.dot_dimension_numbers<[1], [0], [0], [1], [0, 0, 1, 1], [], []>} : vector<8x32xf32>, vector<32x128xf32>, vector<8x128xf32> -> vector<8x128xf32>
    %598 = arith.addf %596, %597 : vector<8x128xf32>
    %599 = arith.negf %598 : vector<8x128xf32>
    %600 = math.exp %599 : vector<8x128xf32>
    %cst_206 = arith.constant 1.000000e+00 : f32
    %601 = vector.broadcast %cst_206 : f32 to vector<8x128xf32>
    %602 = arith.addf %601, %600 : vector<8x128xf32>
    %603 = arith.divf %601, %602 : vector<8x128xf32>
    %cst_207 = arith.constant 2.000000e+00 : f32
    %604 = vector.broadcast %cst_207 : f32 to vector<8x128xf32>
    %605 = arith.mulf %604, %603 : vector<8x128xf32>
    %cst_208 = arith.constant 1.000000e+00 : f32
    %606 = vector.broadcast %cst_208 : f32 to vector<8x128xf32>
    %607 = arith.subf %605, %606 : vector<8x128xf32>
    %608 = arith.select %5, %607, %603 : vector<8x128xi1>, vector<8x128xf32>
    %609 = vector.extract_strided_slice %608 {offsets = [0, 0], sizes = [8, 32], strides = [1, 1]} : vector<8x128xf32> to vector<8x32xf32>
    %610 = vector.extract_strided_slice %608 {offsets = [0, 32], sizes = [8, 32], strides = [1, 1]} : vector<8x128xf32> to vector<8x32xf32>
    %611 = vector.extract_strided_slice %608 {offsets = [0, 64], sizes = [8, 32], strides = [1, 1]} : vector<8x128xf32> to vector<8x32xf32>
    %612 = vector.extract_strided_slice %608 {offsets = [0, 96], sizes = [8, 32], strides = [1, 1]} : vector<8x128xf32> to vector<8x32xf32>
    %613 = arith.mulf %610, %566 : vector<8x32xf32>
    %614 = arith.mulf %609, %611 : vector<8x32xf32>
    %615 = arith.addf %613, %614 : vector<8x32xf32>
    %616 = math.tanh %615 : vector<8x32xf32>
    %617 = arith.mulf %612, %616 : vector<8x32xf32>
    %c7_i32_209 = arith.constant 7 : i32
    %618 = arith.subi %c7_i32_209, %c2_i32_202 : i32
    %c8_i32_210 = arith.constant 8 : i32
    %619 = arith.muli %618, %c8_i32_210 : i32
    %620 = arith.index_cast %619 : i32 to index
    %c0_211 = arith.constant 0 : index
    %621 = vector.load %arg26[%620, %c0_211] : memref<64x128xf32, #tpu.memory_space<vmem>>, vector<8x128xf32>
    %cst_212 = arith.constant dense<0.000000e+00> : vector<8x128xf32>
    %622 = tpu.matmul %593, %493, %cst_212 {dimension_numbers = #tpu.dot_dimension_numbers<[1], [0], [0], [1], [0, 0, 1, 1], [], []>} : vector<8x32xf32>, vector<32x128xf32>, vector<8x128xf32> -> vector<8x128xf32>
    %623 = arith.addf %621, %622 : vector<8x128xf32>
    %624 = arith.negf %623 : vector<8x128xf32>
    %625 = math.exp %624 : vector<8x128xf32>
    %cst_213 = arith.constant 1.000000e+00 : f32
    %626 = vector.broadcast %cst_213 : f32 to vector<8x128xf32>
    %627 = arith.addf %626, %625 : vector<8x128xf32>
    %628 = arith.divf %626, %627 : vector<8x128xf32>
    %cst_214 = arith.constant 2.000000e+00 : f32
    %629 = vector.broadcast %cst_214 : f32 to vector<8x128xf32>
    %630 = arith.mulf %629, %628 : vector<8x128xf32>
    %cst_215 = arith.constant 1.000000e+00 : f32
    %631 = vector.broadcast %cst_215 : f32 to vector<8x128xf32>
    %632 = arith.subf %630, %631 : vector<8x128xf32>
    %633 = arith.select %5, %632, %628 : vector<8x128xi1>, vector<8x128xf32>
    %634 = vector.extract_strided_slice %633 {offsets = [0, 0], sizes = [8, 32], strides = [1, 1]} : vector<8x128xf32> to vector<8x32xf32>
    %635 = vector.extract_strided_slice %633 {offsets = [0, 32], sizes = [8, 32], strides = [1, 1]} : vector<8x128xf32> to vector<8x32xf32>
    %636 = vector.extract_strided_slice %633 {offsets = [0, 64], sizes = [8, 32], strides = [1, 1]} : vector<8x128xf32> to vector<8x32xf32>
    %637 = vector.extract_strided_slice %633 {offsets = [0, 96], sizes = [8, 32], strides = [1, 1]} : vector<8x128xf32> to vector<8x32xf32>
    %638 = arith.mulf %635, %591 : vector<8x32xf32>
    %639 = arith.mulf %634, %636 : vector<8x32xf32>
    %640 = arith.addf %638, %639 : vector<8x32xf32>
    %641 = math.tanh %640 : vector<8x32xf32>
    %642 = arith.mulf %637, %641 : vector<8x32xf32>
    %c3_i32_216 = arith.constant 3 : i32
    %c8_i32_217 = arith.constant 8 : i32
    %643 = arith.muli %c3_i32_216, %c8_i32_217 : i32
    %644 = arith.index_cast %643 : i32 to index
    %c0_218 = arith.constant 0 : index
    %645 = vector.load %arg25[%644, %c0_218] : memref<64x128xf32, #tpu.memory_space<vmem>>, vector<8x128xf32>
    %cst_219 = arith.constant dense<0.000000e+00> : vector<8x128xf32>
    %646 = tpu.matmul %617, %490, %cst_219 {dimension_numbers = #tpu.dot_dimension_numbers<[1], [0], [0], [1], [0, 0, 1, 1], [], []>} : vector<8x32xf32>, vector<32x128xf32>, vector<8x128xf32> -> vector<8x128xf32>
    %647 = arith.addf %645, %646 : vector<8x128xf32>
    %648 = arith.negf %647 : vector<8x128xf32>
    %649 = math.exp %648 : vector<8x128xf32>
    %cst_220 = arith.constant 1.000000e+00 : f32
    %650 = vector.broadcast %cst_220 : f32 to vector<8x128xf32>
    %651 = arith.addf %650, %649 : vector<8x128xf32>
    %652 = arith.divf %650, %651 : vector<8x128xf32>
    %cst_221 = arith.constant 2.000000e+00 : f32
    %653 = vector.broadcast %cst_221 : f32 to vector<8x128xf32>
    %654 = arith.mulf %653, %652 : vector<8x128xf32>
    %cst_222 = arith.constant 1.000000e+00 : f32
    %655 = vector.broadcast %cst_222 : f32 to vector<8x128xf32>
    %656 = arith.subf %654, %655 : vector<8x128xf32>
    %657 = arith.select %5, %656, %652 : vector<8x128xi1>, vector<8x128xf32>
    %658 = vector.extract_strided_slice %657 {offsets = [0, 0], sizes = [8, 32], strides = [1, 1]} : vector<8x128xf32> to vector<8x32xf32>
    %659 = vector.extract_strided_slice %657 {offsets = [0, 32], sizes = [8, 32], strides = [1, 1]} : vector<8x128xf32> to vector<8x32xf32>
    %660 = vector.extract_strided_slice %657 {offsets = [0, 64], sizes = [8, 32], strides = [1, 1]} : vector<8x128xf32> to vector<8x32xf32>
    %661 = vector.extract_strided_slice %657 {offsets = [0, 96], sizes = [8, 32], strides = [1, 1]} : vector<8x128xf32> to vector<8x32xf32>
    %662 = arith.mulf %659, %615 : vector<8x32xf32>
    %663 = arith.mulf %658, %660 : vector<8x32xf32>
    %664 = arith.addf %662, %663 : vector<8x32xf32>
    %665 = math.tanh %664 : vector<8x32xf32>
    %666 = arith.mulf %661, %665 : vector<8x32xf32>
    %c7_i32_223 = arith.constant 7 : i32
    %667 = arith.subi %c7_i32_223, %c3_i32_216 : i32
    %c8_i32_224 = arith.constant 8 : i32
    %668 = arith.muli %667, %c8_i32_224 : i32
    %669 = arith.index_cast %668 : i32 to index
    %c0_225 = arith.constant 0 : index
    %670 = vector.load %arg26[%669, %c0_225] : memref<64x128xf32, #tpu.memory_space<vmem>>, vector<8x128xf32>
    %cst_226 = arith.constant dense<0.000000e+00> : vector<8x128xf32>
    %671 = tpu.matmul %642, %493, %cst_226 {dimension_numbers = #tpu.dot_dimension_numbers<[1], [0], [0], [1], [0, 0, 1, 1], [], []>} : vector<8x32xf32>, vector<32x128xf32>, vector<8x128xf32> -> vector<8x128xf32>
    %672 = arith.addf %670, %671 : vector<8x128xf32>
    %673 = arith.negf %672 : vector<8x128xf32>
    %674 = math.exp %673 : vector<8x128xf32>
    %cst_227 = arith.constant 1.000000e+00 : f32
    %675 = vector.broadcast %cst_227 : f32 to vector<8x128xf32>
    %676 = arith.addf %675, %674 : vector<8x128xf32>
    %677 = arith.divf %675, %676 : vector<8x128xf32>
    %cst_228 = arith.constant 2.000000e+00 : f32
    %678 = vector.broadcast %cst_228 : f32 to vector<8x128xf32>
    %679 = arith.mulf %678, %677 : vector<8x128xf32>
    %cst_229 = arith.constant 1.000000e+00 : f32
    %680 = vector.broadcast %cst_229 : f32 to vector<8x128xf32>
    %681 = arith.subf %679, %680 : vector<8x128xf32>
    %682 = arith.select %5, %681, %677 : vector<8x128xi1>, vector<8x128xf32>
    %683 = vector.extract_strided_slice %682 {offsets = [0, 0], sizes = [8, 32], strides = [1, 1]} : vector<8x128xf32> to vector<8x32xf32>
    %684 = vector.extract_strided_slice %682 {offsets = [0, 32], sizes = [8, 32], strides = [1, 1]} : vector<8x128xf32> to vector<8x32xf32>
    %685 = vector.extract_strided_slice %682 {offsets = [0, 64], sizes = [8, 32], strides = [1, 1]} : vector<8x128xf32> to vector<8x32xf32>
    %686 = vector.extract_strided_slice %682 {offsets = [0, 96], sizes = [8, 32], strides = [1, 1]} : vector<8x128xf32> to vector<8x32xf32>
    %687 = arith.mulf %684, %640 : vector<8x32xf32>
    %688 = arith.mulf %683, %685 : vector<8x32xf32>
    %689 = arith.addf %687, %688 : vector<8x32xf32>
    %690 = math.tanh %689 : vector<8x32xf32>
    %691 = arith.mulf %686, %690 : vector<8x32xf32>
    %c4_i32_230 = arith.constant 4 : i32
    %c8_i32_231 = arith.constant 8 : i32
    %692 = arith.muli %c4_i32_230, %c8_i32_231 : i32
    %693 = arith.index_cast %692 : i32 to index
    %c0_232 = arith.constant 0 : index
    %694 = vector.load %arg25[%693, %c0_232] : memref<64x128xf32, #tpu.memory_space<vmem>>, vector<8x128xf32>
    %cst_233 = arith.constant dense<0.000000e+00> : vector<8x128xf32>
    %695 = tpu.matmul %666, %490, %cst_233 {dimension_numbers = #tpu.dot_dimension_numbers<[1], [0], [0], [1], [0, 0, 1, 1], [], []>} : vector<8x32xf32>, vector<32x128xf32>, vector<8x128xf32> -> vector<8x128xf32>
    %696 = arith.addf %694, %695 : vector<8x128xf32>
    %697 = arith.negf %696 : vector<8x128xf32>
    %698 = math.exp %697 : vector<8x128xf32>
    %cst_234 = arith.constant 1.000000e+00 : f32
    %699 = vector.broadcast %cst_234 : f32 to vector<8x128xf32>
    %700 = arith.addf %699, %698 : vector<8x128xf32>
    %701 = arith.divf %699, %700 : vector<8x128xf32>
    %cst_235 = arith.constant 2.000000e+00 : f32
    %702 = vector.broadcast %cst_235 : f32 to vector<8x128xf32>
    %703 = arith.mulf %702, %701 : vector<8x128xf32>
    %cst_236 = arith.constant 1.000000e+00 : f32
    %704 = vector.broadcast %cst_236 : f32 to vector<8x128xf32>
    %705 = arith.subf %703, %704 : vector<8x128xf32>
    %706 = arith.select %5, %705, %701 : vector<8x128xi1>, vector<8x128xf32>
    %707 = vector.extract_strided_slice %706 {offsets = [0, 0], sizes = [8, 32], strides = [1, 1]} : vector<8x128xf32> to vector<8x32xf32>
    %708 = vector.extract_strided_slice %706 {offsets = [0, 32], sizes = [8, 32], strides = [1, 1]} : vector<8x128xf32> to vector<8x32xf32>
    %709 = vector.extract_strided_slice %706 {offsets = [0, 64], sizes = [8, 32], strides = [1, 1]} : vector<8x128xf32> to vector<8x32xf32>
    %710 = vector.extract_strided_slice %706 {offsets = [0, 96], sizes = [8, 32], strides = [1, 1]} : vector<8x128xf32> to vector<8x32xf32>
    %711 = arith.mulf %708, %664 : vector<8x32xf32>
    %712 = arith.mulf %707, %709 : vector<8x32xf32>
    %713 = arith.addf %711, %712 : vector<8x32xf32>
    %714 = math.tanh %713 : vector<8x32xf32>
    %715 = arith.mulf %710, %714 : vector<8x32xf32>
    %c7_i32_237 = arith.constant 7 : i32
    %716 = arith.subi %c7_i32_237, %c4_i32_230 : i32
    %c8_i32_238 = arith.constant 8 : i32
    %717 = arith.muli %716, %c8_i32_238 : i32
    %718 = arith.index_cast %717 : i32 to index
    %c0_239 = arith.constant 0 : index
    %719 = vector.load %arg26[%718, %c0_239] : memref<64x128xf32, #tpu.memory_space<vmem>>, vector<8x128xf32>
    %cst_240 = arith.constant dense<0.000000e+00> : vector<8x128xf32>
    %720 = tpu.matmul %691, %493, %cst_240 {dimension_numbers = #tpu.dot_dimension_numbers<[1], [0], [0], [1], [0, 0, 1, 1], [], []>} : vector<8x32xf32>, vector<32x128xf32>, vector<8x128xf32> -> vector<8x128xf32>
    %721 = arith.addf %719, %720 : vector<8x128xf32>
    %722 = arith.negf %721 : vector<8x128xf32>
    %723 = math.exp %722 : vector<8x128xf32>
    %cst_241 = arith.constant 1.000000e+00 : f32
    %724 = vector.broadcast %cst_241 : f32 to vector<8x128xf32>
    %725 = arith.addf %724, %723 : vector<8x128xf32>
    %726 = arith.divf %724, %725 : vector<8x128xf32>
    %cst_242 = arith.constant 2.000000e+00 : f32
    %727 = vector.broadcast %cst_242 : f32 to vector<8x128xf32>
    %728 = arith.mulf %727, %726 : vector<8x128xf32>
    %cst_243 = arith.constant 1.000000e+00 : f32
    %729 = vector.broadcast %cst_243 : f32 to vector<8x128xf32>
    %730 = arith.subf %728, %729 : vector<8x128xf32>
    %731 = arith.select %5, %730, %726 : vector<8x128xi1>, vector<8x128xf32>
    %732 = vector.extract_strided_slice %731 {offsets = [0, 0], sizes = [8, 32], strides = [1, 1]} : vector<8x128xf32> to vector<8x32xf32>
    %733 = vector.extract_strided_slice %731 {offsets = [0, 32], sizes = [8, 32], strides = [1, 1]} : vector<8x128xf32> to vector<8x32xf32>
    %734 = vector.extract_strided_slice %731 {offsets = [0, 64], sizes = [8, 32], strides = [1, 1]} : vector<8x128xf32> to vector<8x32xf32>
    %735 = vector.extract_strided_slice %731 {offsets = [0, 96], sizes = [8, 32], strides = [1, 1]} : vector<8x128xf32> to vector<8x32xf32>
    %736 = arith.mulf %733, %689 : vector<8x32xf32>
    %737 = arith.mulf %732, %734 : vector<8x32xf32>
    %738 = arith.addf %736, %737 : vector<8x32xf32>
    %739 = math.tanh %738 : vector<8x32xf32>
    %740 = arith.mulf %735, %739 : vector<8x32xf32>
    %c5_i32_244 = arith.constant 5 : i32
    %c8_i32_245 = arith.constant 8 : i32
    %741 = arith.muli %c5_i32_244, %c8_i32_245 : i32
    %742 = arith.index_cast %741 : i32 to index
    %c0_246 = arith.constant 0 : index
    %743 = vector.load %arg25[%742, %c0_246] : memref<64x128xf32, #tpu.memory_space<vmem>>, vector<8x128xf32>
    %cst_247 = arith.constant dense<0.000000e+00> : vector<8x128xf32>
    %744 = tpu.matmul %715, %490, %cst_247 {dimension_numbers = #tpu.dot_dimension_numbers<[1], [0], [0], [1], [0, 0, 1, 1], [], []>} : vector<8x32xf32>, vector<32x128xf32>, vector<8x128xf32> -> vector<8x128xf32>
    %745 = arith.addf %743, %744 : vector<8x128xf32>
    %746 = arith.negf %745 : vector<8x128xf32>
    %747 = math.exp %746 : vector<8x128xf32>
    %cst_248 = arith.constant 1.000000e+00 : f32
    %748 = vector.broadcast %cst_248 : f32 to vector<8x128xf32>
    %749 = arith.addf %748, %747 : vector<8x128xf32>
    %750 = arith.divf %748, %749 : vector<8x128xf32>
    %cst_249 = arith.constant 2.000000e+00 : f32
    %751 = vector.broadcast %cst_249 : f32 to vector<8x128xf32>
    %752 = arith.mulf %751, %750 : vector<8x128xf32>
    %cst_250 = arith.constant 1.000000e+00 : f32
    %753 = vector.broadcast %cst_250 : f32 to vector<8x128xf32>
    %754 = arith.subf %752, %753 : vector<8x128xf32>
    %755 = arith.select %5, %754, %750 : vector<8x128xi1>, vector<8x128xf32>
    %756 = vector.extract_strided_slice %755 {offsets = [0, 0], sizes = [8, 32], strides = [1, 1]} : vector<8x128xf32> to vector<8x32xf32>
    %757 = vector.extract_strided_slice %755 {offsets = [0, 32], sizes = [8, 32], strides = [1, 1]} : vector<8x128xf32> to vector<8x32xf32>
    %758 = vector.extract_strided_slice %755 {offsets = [0, 64], sizes = [8, 32], strides = [1, 1]} : vector<8x128xf32> to vector<8x32xf32>
    %759 = vector.extract_strided_slice %755 {offsets = [0, 96], sizes = [8, 32], strides = [1, 1]} : vector<8x128xf32> to vector<8x32xf32>
    %760 = arith.mulf %757, %713 : vector<8x32xf32>
    %761 = arith.mulf %756, %758 : vector<8x32xf32>
    %762 = arith.addf %760, %761 : vector<8x32xf32>
    %763 = math.tanh %762 : vector<8x32xf32>
    %764 = arith.mulf %759, %763 : vector<8x32xf32>
    %c7_i32_251 = arith.constant 7 : i32
    %765 = arith.subi %c7_i32_251, %c5_i32_244 : i32
    %c8_i32_252 = arith.constant 8 : i32
    %766 = arith.muli %765, %c8_i32_252 : i32
    %767 = arith.index_cast %766 : i32 to index
    %c0_253 = arith.constant 0 : index
    %768 = vector.load %arg26[%767, %c0_253] : memref<64x128xf32, #tpu.memory_space<vmem>>, vector<8x128xf32>
    %cst_254 = arith.constant dense<0.000000e+00> : vector<8x128xf32>
    %769 = tpu.matmul %740, %493, %cst_254 {dimension_numbers = #tpu.dot_dimension_numbers<[1], [0], [0], [1], [0, 0, 1, 1], [], []>} : vector<8x32xf32>, vector<32x128xf32>, vector<8x128xf32> -> vector<8x128xf32>
    %770 = arith.addf %768, %769 : vector<8x128xf32>
    %771 = arith.negf %770 : vector<8x128xf32>
    %772 = math.exp %771 : vector<8x128xf32>
    %cst_255 = arith.constant 1.000000e+00 : f32
    %773 = vector.broadcast %cst_255 : f32 to vector<8x128xf32>
    %774 = arith.addf %773, %772 : vector<8x128xf32>
    %775 = arith.divf %773, %774 : vector<8x128xf32>
    %cst_256 = arith.constant 2.000000e+00 : f32
    %776 = vector.broadcast %cst_256 : f32 to vector<8x128xf32>
    %777 = arith.mulf %776, %775 : vector<8x128xf32>
    %cst_257 = arith.constant 1.000000e+00 : f32
    %778 = vector.broadcast %cst_257 : f32 to vector<8x128xf32>
    %779 = arith.subf %777, %778 : vector<8x128xf32>
    %780 = arith.select %5, %779, %775 : vector<8x128xi1>, vector<8x128xf32>
    %781 = vector.extract_strided_slice %780 {offsets = [0, 0], sizes = [8, 32], strides = [1, 1]} : vector<8x128xf32> to vector<8x32xf32>
    %782 = vector.extract_strided_slice %780 {offsets = [0, 32], sizes = [8, 32], strides = [1, 1]} : vector<8x128xf32> to vector<8x32xf32>
    %783 = vector.extract_strided_slice %780 {offsets = [0, 64], sizes = [8, 32], strides = [1, 1]} : vector<8x128xf32> to vector<8x32xf32>
    %784 = vector.extract_strided_slice %780 {offsets = [0, 96], sizes = [8, 32], strides = [1, 1]} : vector<8x128xf32> to vector<8x32xf32>
    %785 = arith.mulf %782, %738 : vector<8x32xf32>
    %786 = arith.mulf %781, %783 : vector<8x32xf32>
    %787 = arith.addf %785, %786 : vector<8x32xf32>
    %788 = math.tanh %787 : vector<8x32xf32>
    %789 = arith.mulf %784, %788 : vector<8x32xf32>
    %c6_i32_258 = arith.constant 6 : i32
    %c8_i32_259 = arith.constant 8 : i32
    %790 = arith.muli %c6_i32_258, %c8_i32_259 : i32
    %791 = arith.index_cast %790 : i32 to index
    %c0_260 = arith.constant 0 : index
    %792 = vector.load %arg25[%791, %c0_260] : memref<64x128xf32, #tpu.memory_space<vmem>>, vector<8x128xf32>
    %cst_261 = arith.constant dense<0.000000e+00> : vector<8x128xf32>
    %793 = tpu.matmul %764, %490, %cst_261 {dimension_numbers = #tpu.dot_dimension_numbers<[1], [0], [0], [1], [0, 0, 1, 1], [], []>} : vector<8x32xf32>, vector<32x128xf32>, vector<8x128xf32> -> vector<8x128xf32>
    %794 = arith.addf %792, %793 : vector<8x128xf32>
    %795 = arith.negf %794 : vector<8x128xf32>
    %796 = math.exp %795 : vector<8x128xf32>
    %cst_262 = arith.constant 1.000000e+00 : f32
    %797 = vector.broadcast %cst_262 : f32 to vector<8x128xf32>
    %798 = arith.addf %797, %796 : vector<8x128xf32>
    %799 = arith.divf %797, %798 : vector<8x128xf32>
    %cst_263 = arith.constant 2.000000e+00 : f32
    %800 = vector.broadcast %cst_263 : f32 to vector<8x128xf32>
    %801 = arith.mulf %800, %799 : vector<8x128xf32>
    %cst_264 = arith.constant 1.000000e+00 : f32
    %802 = vector.broadcast %cst_264 : f32 to vector<8x128xf32>
    %803 = arith.subf %801, %802 : vector<8x128xf32>
    %804 = arith.select %5, %803, %799 : vector<8x128xi1>, vector<8x128xf32>
    %805 = vector.extract_strided_slice %804 {offsets = [0, 0], sizes = [8, 32], strides = [1, 1]} : vector<8x128xf32> to vector<8x32xf32>
    %806 = vector.extract_strided_slice %804 {offsets = [0, 32], sizes = [8, 32], strides = [1, 1]} : vector<8x128xf32> to vector<8x32xf32>
    %807 = vector.extract_strided_slice %804 {offsets = [0, 64], sizes = [8, 32], strides = [1, 1]} : vector<8x128xf32> to vector<8x32xf32>
    %808 = vector.extract_strided_slice %804 {offsets = [0, 96], sizes = [8, 32], strides = [1, 1]} : vector<8x128xf32> to vector<8x32xf32>
    %809 = arith.mulf %806, %762 : vector<8x32xf32>
    %810 = arith.mulf %805, %807 : vector<8x32xf32>
    %811 = arith.addf %809, %810 : vector<8x32xf32>
    %812 = math.tanh %811 : vector<8x32xf32>
    %813 = arith.mulf %808, %812 : vector<8x32xf32>
    %c7_i32_265 = arith.constant 7 : i32
    %814 = arith.subi %c7_i32_265, %c6_i32_258 : i32
    %c8_i32_266 = arith.constant 8 : i32
    %815 = arith.muli %814, %c8_i32_266 : i32
    %816 = arith.index_cast %815 : i32 to index
    %c0_267 = arith.constant 0 : index
    %817 = vector.load %arg26[%816, %c0_267] : memref<64x128xf32, #tpu.memory_space<vmem>>, vector<8x128xf32>
    %cst_268 = arith.constant dense<0.000000e+00> : vector<8x128xf32>
    %818 = tpu.matmul %789, %493, %cst_268 {dimension_numbers = #tpu.dot_dimension_numbers<[1], [0], [0], [1], [0, 0, 1, 1], [], []>} : vector<8x32xf32>, vector<32x128xf32>, vector<8x128xf32> -> vector<8x128xf32>
    %819 = arith.addf %817, %818 : vector<8x128xf32>
    %820 = arith.negf %819 : vector<8x128xf32>
    %821 = math.exp %820 : vector<8x128xf32>
    %cst_269 = arith.constant 1.000000e+00 : f32
    %822 = vector.broadcast %cst_269 : f32 to vector<8x128xf32>
    %823 = arith.addf %822, %821 : vector<8x128xf32>
    %824 = arith.divf %822, %823 : vector<8x128xf32>
    %cst_270 = arith.constant 2.000000e+00 : f32
    %825 = vector.broadcast %cst_270 : f32 to vector<8x128xf32>
    %826 = arith.mulf %825, %824 : vector<8x128xf32>
    %cst_271 = arith.constant 1.000000e+00 : f32
    %827 = vector.broadcast %cst_271 : f32 to vector<8x128xf32>
    %828 = arith.subf %826, %827 : vector<8x128xf32>
    %829 = arith.select %5, %828, %824 : vector<8x128xi1>, vector<8x128xf32>
    %830 = vector.extract_strided_slice %829 {offsets = [0, 0], sizes = [8, 32], strides = [1, 1]} : vector<8x128xf32> to vector<8x32xf32>
    %831 = vector.extract_strided_slice %829 {offsets = [0, 32], sizes = [8, 32], strides = [1, 1]} : vector<8x128xf32> to vector<8x32xf32>
    %832 = vector.extract_strided_slice %829 {offsets = [0, 64], sizes = [8, 32], strides = [1, 1]} : vector<8x128xf32> to vector<8x32xf32>
    %833 = vector.extract_strided_slice %829 {offsets = [0, 96], sizes = [8, 32], strides = [1, 1]} : vector<8x128xf32> to vector<8x32xf32>
    %834 = arith.mulf %831, %787 : vector<8x32xf32>
    %835 = arith.mulf %830, %832 : vector<8x32xf32>
    %836 = arith.addf %834, %835 : vector<8x32xf32>
    %837 = math.tanh %836 : vector<8x32xf32>
    %838 = arith.mulf %833, %837 : vector<8x32xf32>
    %c7_i32_272 = arith.constant 7 : i32
    %c8_i32_273 = arith.constant 8 : i32
    %839 = arith.muli %c7_i32_272, %c8_i32_273 : i32
    %840 = arith.index_cast %839 : i32 to index
    %c0_274 = arith.constant 0 : index
    %841 = vector.load %arg25[%840, %c0_274] : memref<64x128xf32, #tpu.memory_space<vmem>>, vector<8x128xf32>
    %cst_275 = arith.constant dense<0.000000e+00> : vector<8x128xf32>
    %842 = tpu.matmul %813, %490, %cst_275 {dimension_numbers = #tpu.dot_dimension_numbers<[1], [0], [0], [1], [0, 0, 1, 1], [], []>} : vector<8x32xf32>, vector<32x128xf32>, vector<8x128xf32> -> vector<8x128xf32>
    %843 = arith.addf %841, %842 : vector<8x128xf32>
    %844 = arith.negf %843 : vector<8x128xf32>
    %845 = math.exp %844 : vector<8x128xf32>
    %cst_276 = arith.constant 1.000000e+00 : f32
    %846 = vector.broadcast %cst_276 : f32 to vector<8x128xf32>
    %847 = arith.addf %846, %845 : vector<8x128xf32>
    %848 = arith.divf %846, %847 : vector<8x128xf32>
    %cst_277 = arith.constant 2.000000e+00 : f32
    %849 = vector.broadcast %cst_277 : f32 to vector<8x128xf32>
    %850 = arith.mulf %849, %848 : vector<8x128xf32>
    %cst_278 = arith.constant 1.000000e+00 : f32
    %851 = vector.broadcast %cst_278 : f32 to vector<8x128xf32>
    %852 = arith.subf %850, %851 : vector<8x128xf32>
    %853 = arith.select %5, %852, %848 : vector<8x128xi1>, vector<8x128xf32>
    %854 = vector.extract_strided_slice %853 {offsets = [0, 0], sizes = [8, 32], strides = [1, 1]} : vector<8x128xf32> to vector<8x32xf32>
    %855 = vector.extract_strided_slice %853 {offsets = [0, 32], sizes = [8, 32], strides = [1, 1]} : vector<8x128xf32> to vector<8x32xf32>
    %856 = vector.extract_strided_slice %853 {offsets = [0, 64], sizes = [8, 32], strides = [1, 1]} : vector<8x128xf32> to vector<8x32xf32>
    %857 = vector.extract_strided_slice %853 {offsets = [0, 96], sizes = [8, 32], strides = [1, 1]} : vector<8x128xf32> to vector<8x32xf32>
    %858 = arith.mulf %855, %811 : vector<8x32xf32>
    %859 = arith.mulf %854, %856 : vector<8x32xf32>
    %860 = arith.addf %858, %859 : vector<8x32xf32>
    %861 = math.tanh %860 : vector<8x32xf32>
    %862 = arith.mulf %857, %861 : vector<8x32xf32>
    %c7_i32_279 = arith.constant 7 : i32
    %863 = arith.subi %c7_i32_279, %c7_i32_272 : i32
    %c8_i32_280 = arith.constant 8 : i32
    %864 = arith.muli %863, %c8_i32_280 : i32
    %865 = arith.index_cast %864 : i32 to index
    %c0_281 = arith.constant 0 : index
    %866 = vector.load %arg26[%865, %c0_281] : memref<64x128xf32, #tpu.memory_space<vmem>>, vector<8x128xf32>
    %cst_282 = arith.constant dense<0.000000e+00> : vector<8x128xf32>
    %867 = tpu.matmul %838, %493, %cst_282 {dimension_numbers = #tpu.dot_dimension_numbers<[1], [0], [0], [1], [0, 0, 1, 1], [], []>} : vector<8x32xf32>, vector<32x128xf32>, vector<8x128xf32> -> vector<8x128xf32>
    %868 = arith.addf %866, %867 : vector<8x128xf32>
    %869 = arith.negf %868 : vector<8x128xf32>
    %870 = math.exp %869 : vector<8x128xf32>
    %cst_283 = arith.constant 1.000000e+00 : f32
    %871 = vector.broadcast %cst_283 : f32 to vector<8x128xf32>
    %872 = arith.addf %871, %870 : vector<8x128xf32>
    %873 = arith.divf %871, %872 : vector<8x128xf32>
    %cst_284 = arith.constant 2.000000e+00 : f32
    %874 = vector.broadcast %cst_284 : f32 to vector<8x128xf32>
    %875 = arith.mulf %874, %873 : vector<8x128xf32>
    %cst_285 = arith.constant 1.000000e+00 : f32
    %876 = vector.broadcast %cst_285 : f32 to vector<8x128xf32>
    %877 = arith.subf %875, %876 : vector<8x128xf32>
    %878 = arith.select %5, %877, %873 : vector<8x128xi1>, vector<8x128xf32>
    %879 = vector.extract_strided_slice %878 {offsets = [0, 0], sizes = [8, 32], strides = [1, 1]} : vector<8x128xf32> to vector<8x32xf32>
    %880 = vector.extract_strided_slice %878 {offsets = [0, 32], sizes = [8, 32], strides = [1, 1]} : vector<8x128xf32> to vector<8x32xf32>
    %881 = vector.extract_strided_slice %878 {offsets = [0, 64], sizes = [8, 32], strides = [1, 1]} : vector<8x128xf32> to vector<8x32xf32>
    %882 = vector.extract_strided_slice %878 {offsets = [0, 96], sizes = [8, 32], strides = [1, 1]} : vector<8x128xf32> to vector<8x32xf32>
    %883 = arith.mulf %880, %836 : vector<8x32xf32>
    %884 = arith.mulf %879, %881 : vector<8x32xf32>
    %885 = arith.addf %883, %884 : vector<8x32xf32>
    %886 = math.tanh %885 : vector<8x32xf32>
    %887 = arith.mulf %882, %886 : vector<8x32xf32>
    %c8_i32_286 = arith.constant 8 : i32
    %c0_287 = arith.constant 0 : index
    %c0_288 = arith.constant 0 : index
    %888 = vector.load %arg15[%c0_287, %c0_288] : memref<32x16xf32, #tpu.memory_space<vmem>>, vector<32x16xf32>
    %cst_289 = arith.constant dense<0.000000e+00> : vector<8x16xf32>
    %889 = tpu.matmul %862, %888, %cst_289 {dimension_numbers = #tpu.dot_dimension_numbers<[1], [0], [0], [1], [0, 0, 1, 1], [], []>} : vector<8x32xf32>, vector<32x16xf32>, vector<8x16xf32> -> vector<8x16xf32>
    %c0_290 = arith.constant 0 : index
    %c0_291 = arith.constant 0 : index
    %890 = vector.load %arg17[%c0_290, %c0_291] : memref<1x16xf32, #tpu.memory_space<vmem>>, vector<1x16xf32>
    %891 = vector.broadcast %890 : vector<1x16xf32> to vector<8x16xf32>
    %892 = arith.addf %889, %891 : vector<8x16xf32>
    %c0_292 = arith.constant 0 : index
    %c0_293 = arith.constant 0 : index
    %893 = vector.load %arg18[%c0_292, %c0_293] : memref<32x16xf32, #tpu.memory_space<vmem>>, vector<32x16xf32>
    %cst_294 = arith.constant dense<0.000000e+00> : vector<8x16xf32>
    %894 = tpu.matmul %862, %893, %cst_294 {dimension_numbers = #tpu.dot_dimension_numbers<[1], [0], [0], [1], [0, 0, 1, 1], [], []>} : vector<8x32xf32>, vector<32x16xf32>, vector<8x16xf32> -> vector<8x16xf32>
    %c0_295 = arith.constant 0 : index
    %c0_296 = arith.constant 0 : index
    %895 = vector.load %arg20[%c0_295, %c0_296] : memref<1x16xf32, #tpu.memory_space<vmem>>, vector<1x16xf32>
    %896 = vector.broadcast %895 : vector<1x16xf32> to vector<8x16xf32>
    %897 = arith.addf %894, %896 : vector<8x16xf32>
    %c0_297 = arith.constant 0 : index
    %c0_298 = arith.constant 0 : index
    %898 = vector.load %arg16[%c0_297, %c0_298] : memref<32x16xf32, #tpu.memory_space<vmem>>, vector<32x16xf32>
    %cst_299 = arith.constant dense<0.000000e+00> : vector<8x16xf32>
    %899 = tpu.matmul %887, %898, %cst_299 {dimension_numbers = #tpu.dot_dimension_numbers<[1], [0], [0], [1], [0, 0, 1, 1], [], []>} : vector<8x32xf32>, vector<32x16xf32>, vector<8x16xf32> -> vector<8x16xf32>
    %900 = arith.addf %892, %899 : vector<8x16xf32>
    %c0_300 = arith.constant 0 : index
    %c0_301 = arith.constant 0 : index
    %901 = vector.load %arg19[%c0_300, %c0_301] : memref<32x16xf32, #tpu.memory_space<vmem>>, vector<32x16xf32>
    %cst_302 = arith.constant dense<0.000000e+00> : vector<8x16xf32>
    %902 = tpu.matmul %887, %901, %cst_302 {dimension_numbers = #tpu.dot_dimension_numbers<[1], [0], [0], [1], [0, 0, 1, 1], [], []>} : vector<8x32xf32>, vector<32x16xf32>, vector<8x16xf32> -> vector<8x16xf32>
    %903 = arith.addf %897, %902 : vector<8x16xf32>
    %cst_303 = arith.constant 5.000000e-01 : f32
    %904 = vector.broadcast %cst_303 : f32 to vector<8x16xf32>
    %905 = arith.mulf %904, %903 : vector<8x16xf32>
    %906 = math.exp %905 : vector<8x16xf32>
    %c0_304 = arith.constant 0 : index
    %c0_305 = arith.constant 0 : index
    %907 = vector.load %arg21[%c0_304, %c0_305] : memref<8x16xf32, #tpu.memory_space<vmem>>, vector<8x16xf32>
    %908 = arith.mulf %906, %907 : vector<8x16xf32>
    %909 = arith.addf %900, %908 : vector<8x16xf32>
    %c0_306 = arith.constant 0 : index
    %c0_307 = arith.constant 0 : index
    %910 = vector.load %arg22[%c0_306, %c0_307] : memref<8x16xf32, #tpu.memory_space<vmem>>, vector<8x16xf32>
    tpu.vector_store %arg22[%c0_306, %c0_307], %909 {strides = array<i32>} : memref<8x16xf32, #tpu.memory_space<vmem>>, vector<8x16xf32>,
    %c0_308 = arith.constant 0 : index
    %c0_309 = arith.constant 0 : index
    %911 = vector.load %arg23[%c0_308, %c0_309] : memref<8x16xf32, #tpu.memory_space<vmem>>, vector<8x16xf32>
    tpu.vector_store %arg23[%c0_308, %c0_309], %900 {strides = array<i32>} : memref<8x16xf32, #tpu.memory_space<vmem>>, vector<8x16xf32>,
    %c0_310 = arith.constant 0 : index
    %c0_311 = arith.constant 0 : index
    %912 = vector.load %arg24[%c0_310, %c0_311] : memref<8x16xf32, #tpu.memory_space<vmem>>, vector<8x16xf32>
    tpu.vector_store %arg24[%c0_310, %c0_311], %903 {strides = array<i32>} : memref<8x16xf32, #tpu.memory_space<vmem>>, vector<8x16xf32>,
    return
  }
}

</mosaic_0001>

<llo_original>
// kernel: encoder_forward.1
$region0: #{encoder_forward.1}
  #allocation0 [shape = 'u32[]', space=smem, size = 0x4, offset = 0x4, fixed_abs, tag = 'smem constant byte address 0x4 - core index']
  #allocation1 [shape = 'u32[72,128]{1,0:T(1,128)}', space=vmem, size = 0x9000, scoped, tag = 'internal scratch']
  #allocation2 [shape = 'f32[64,128]{1,0:T(8,128)}', space=vmem, size = 0x8000, scoped, tag = 'scratch operand']
  #allocation3 [shape = 'f32[64,128]{1,0:T(8,128)}', space=vmem, size = 0x8000, scoped, tag = 'scratch operand']
  #allocation4 [shape = 'f32[64,32]{1,0:T(8,128)}', space=vmem, size = 0x8000, scoped, tag = 'scratch operand']
  #allocation5 [shape = 'f32[64,32]{1,0:T(8,128)}', space=vmem, size = 0x8000, scoped, tag = 'scratch operand']
  %s0 = inlined_call_operand.vmem [shape: f32[64,8], index: 0, kind: input, shape index: {}]
  %s1 = inlined_call_operand.vmem [shape: f32[8,128], index: 1, kind: input, shape index: {}]
  %s2 = inlined_call_operand.vmem [shape: f32[32,128], index: 2, kind: input, shape index: {}]
  %s3 = inlined_call_operand.vmem [shape: f32[1,128], index: 3, kind: input, shape index: {}]
  %s4 = inlined_call_operand.vmem [shape: f32[8,128], index: 4, kind: input, shape index: {}]
  %s5 = inlined_call_operand.vmem [shape: f32[32,128], index: 5, kind: input, shape index: {}]
  %s6 = inlined_call_operand.vmem [shape: f32[1,128], index: 6, kind: input, shape index: {}]
  %s7 = inlined_call_operand.vmem [shape: f32[32,128], index: 7, kind: input, shape index: {}]
  %s8 = inlined_call_operand.vmem [shape: f32[32,128], index: 8, kind: input, shape index: {}]
  %s9 = inlined_call_operand.vmem [shape: f32[32,128], index: 9, kind: input, shape index: {}]
  %s10 = inlined_call_operand.vmem [shape: f32[1,128], index: 10, kind: input, shape index: {}]
  %s11 = inlined_call_operand.vmem [shape: f32[32,128], index: 11, kind: input, shape index: {}]
  %s12 = inlined_call_operand.vmem [shape: f32[32,128], index: 12, kind: input, shape index: {}]
  %s13 = inlined_call_operand.vmem [shape: f32[32,128], index: 13, kind: input, shape index: {}]
  %s14 = inlined_call_operand.vmem [shape: f32[1,128], index: 14, kind: input, shape index: {}]
  %s15 = inlined_call_operand.vmem [shape: f32[32,16], index: 15, kind: input, shape index: {}]
  %s16 = inlined_call_operand.vmem [shape: f32[32,16], index: 16, kind: input, shape index: {}]
  %s17 = inlined_call_operand.vmem [shape: f32[1,16], index: 17, kind: input, shape index: {}]
  %s18 = inlined_call_operand.vmem [shape: f32[32,16], index: 18, kind: input, shape index: {}]
  %s19 = inlined_call_operand.vmem [shape: f32[32,16], index: 19, kind: input, shape index: {}]
  %s20 = inlined_call_operand.vmem [shape: f32[1,16], index: 20, kind: input, shape index: {}]
  %s21 = inlined_call_operand.vmem [shape: f32[8,16], index: 21, kind: input, shape index: {}]
  %s22 = inlined_call_operand.vmem [shape: f32[8,16], index: 22, kind: output, shape index: {0}]
  %s23 = inlined_call_operand.vmem [shape: f32[8,16], index: 23, kind: output, shape index: {1}]
  %s24 = inlined_call_operand.vmem [shape: f32[8,16], index: 24, kind: output, shape index: {2}]
  %25 = xla_tuple %s22, %s23, %s24
  %s26 = sld [smem:[#allocation0]]
  $region114: #{encoder_forward.1} parent=0
    _
  %s28 = ssub.s32 1, %s26
  %s29 = scalar_select 0, %s28, %s26
  // Predicated region
  $region2: #{encoder_forward.1} parent=0 // pred_check
    _
  $region3: #{encoder_forward.1} parent=0 // pred_check_branch
    %31 = sbr.rel (0) target = $region5
  $region4: #{encoder_forward.1} parent=0 // pred_region
    _
  $region5: #{encoder_forward.1} parent=0 // pred_fallthru
    _
  // Predicated region
  $region6: #{encoder_forward.1} parent=0 // pred_check
    _
  $region7: #{encoder_forward.1} parent=0 // pred_check_branch
    %33 = sbr.rel (0) target = $region9
  $region8: #{encoder_forward.1} parent=0 // pred_region
    _
  $region9: #{encoder_forward.1} parent=0 // pred_fallthru
    _
  // Predicated region
  $region10: #{encoder_forward.1} parent=0 // pred_check
    _
  $region11: #{encoder_forward.1} parent=0 // pred_check_branch
    %35 = sbr.rel (0) target = $region13
  $region12: #{encoder_forward.1} parent=0 // pred_region
    _
  $region13: #{encoder_forward.1} parent=0 // pred_fallthru
    _
  // Predicated region
  $region14: #{encoder_forward.1} parent=0 // pred_check
    _
  $region15: #{encoder_forward.1} parent=0 // pred_check_branch
    %37 = sbr.rel (0) target = $region17
  $region16: #{encoder_forward.1} parent=0 // pred_region
    _
  $region17: #{encoder_forward.1} parent=0 // pred_fallthru
    _
  // Predicated region
  $region18: #{encoder_forward.1} parent=0 // pred_check
    _
  $region19: #{encoder_forward.1} parent=0 // pred_check_branch
    %39 = sbr.rel (0) target = $region21
  $region20: #{encoder_forward.1} parent=0 // pred_region
    _
  $region21: #{encoder_forward.1} parent=0 // pred_fallthru
    _
  // Predicated region
  $region22: #{encoder_forward.1} parent=0 // pred_check
    _
  $region23: #{encoder_forward.1} parent=0 // pred_check_branch
    %41 = sbr.rel (0) target = $region25
  $region24: #{encoder_forward.1} parent=0 // pred_region
    _
  $region25: #{encoder_forward.1} parent=0 // pred_fallthru
    _
  // Predicated region
  $region26: #{encoder_forward.1} parent=0 // pred_check
    _
  $region27: #{encoder_forward.1} parent=0 // pred_check_branch
    %43 = sbr.rel (0) target = $region29
  $region28: #{encoder_forward.1} parent=0 // pred_region
    _
  $region29: #{encoder_forward.1} parent=0 // pred_fallthru
    _
  // Predicated region
  $region30: #{encoder_forward.1} parent=0 // pred_check
    _
  $region31: #{encoder_forward.1} parent=0 // pred_check_branch
    %45 = sbr.rel (0) target = $region33
  $region32: #{encoder_forward.1} parent=0 // pred_region
    _
  $region33: #{encoder_forward.1} parent=0 // pred_fallthru
    _
  // Predicated region
  $region34: #{encoder_forward.1} parent=0 // pred_check
    _
  $region35: #{encoder_forward.1} parent=0 // pred_check_branch
    %47 = sbr.rel (0) target = $region37
  $region36: #{encoder_forward.1} parent=0 // pred_region
    _
  $region37: #{encoder_forward.1} parent=0 // pred_fallthru
    _
  // Predicated region
  $region38: #{encoder_forward.1} parent=0 // pred_check
    _
  $region39: #{encoder_forward.1} parent=0 // pred_check_branch
    %49 = sbr.rel (0) target = $region41
  $region40: #{encoder_forward.1} parent=0 // pred_region
    _
  $region41: #{encoder_forward.1} parent=0 // pred_fallthru
    _
  // Predicated region
  $region42: #{encoder_forward.1} parent=0 // pred_check
    _
  $region43: #{encoder_forward.1} parent=0 // pred_check_branch
    %51 = sbr.rel (0) target = $region45
  $region44: #{encoder_forward.1} parent=0 // pred_region
    _
  $region45: #{encoder_forward.1} parent=0 // pred_fallthru
    _
  // Predicated region
  $region46: #{encoder_forward.1} parent=0 // pred_check
    _
  $region47: #{encoder_forward.1} parent=0 // pred_check_branch
    %53 = sbr.rel (0) target = $region49
  $region48: #{encoder_forward.1} parent=0 // pred_region
    _
  $region49: #{encoder_forward.1} parent=0 // pred_fallthru
    _
  // Predicated region
  $region50: #{encoder_forward.1} parent=0 // pred_check
    _
  $region51: #{encoder_forward.1} parent=0 // pred_check_branch
    %55 = sbr.rel (0) target = $region53
  $region52: #{encoder_forward.1} parent=0 // pred_region
    _
  $region53: #{encoder_forward.1} parent=0 // pred_fallthru
    _
  // Predicated region
  $region54: #{encoder_forward.1} parent=0 // pred_check
    _
  $region55: #{encoder_forward.1} parent=0 // pred_check_branch
    %57 = sbr.rel (0) target = $region57
  $region56: #{encoder_forward.1} parent=0 // pred_region
    _
  $region57: #{encoder_forward.1} parent=0 // pred_fallthru
    _
  // Predicated region
  $region58: #{encoder_forward.1} parent=0 // pred_check
    _
  $region59: #{encoder_forward.1} parent=0 // pred_check_branch
    %59 = sbr.rel (0) target = $region61
  $region60: #{encoder_forward.1} parent=0 // pred_region
    _
  $region61: #{encoder_forward.1} parent=0 // pred_fallthru
    _
  // Predicated region
  $region62: #{encoder_forward.1} parent=0 // pred_check
    _
  $region63: #{encoder_forward.1} parent=0 // pred_check_branch
    %61 = sbr.rel (0) target = $region65
  $region64: #{encoder_forward.1} parent=0 // pred_region
    _
  $region65: #{encoder_forward.1} parent=0 // pred_fallthru
    _
  // Predicated region
  $region66: #{encoder_forward.1} parent=0 // pred_check
    _
  $region67: #{encoder_forward.1} parent=0 // pred_check_branch
    %63 = sbr.rel (0) target = $region69
  $region68: #{encoder_forward.1} parent=0 // pred_region
    _
  $region69: #{encoder_forward.1} parent=0 // pred_fallthru
    _
  // Predicated region
  $region70: #{encoder_forward.1} parent=0 // pred_check
    _
  $region71: #{encoder_forward.1} parent=0 // pred_check_branch
    %65 = sbr.rel (0) target = $region73
  $region72: #{encoder_forward.1} parent=0 // pred_region
    _
  $region73: #{encoder_forward.1} parent=0 // pred_fallthru
    _
  // Predicated region
  $region74: #{encoder_forward.1} parent=0 // pred_check
    _
  $region75: #{encoder_forward.1} parent=0 // pred_check_branch
    %67 = sbr.rel (0) target = $region77
  $region76: #{encoder_forward.1} parent=0 // pred_region
    _
  $region77: #{encoder_forward.1} parent=0 // pred_fallthru
    _
  // Predicated region
  $region78: #{encoder_forward.1} parent=0 // pred_check
    _
  $region79: #{encoder_forward.1} parent=0 // pred_check_branch
    %69 = sbr.rel (0) target = $region81
  $region80: #{encoder_forward.1} parent=0 // pred_region
    _
  $region81: #{encoder_forward.1} parent=0 // pred_fallthru
    _
  // Predicated region
  $region82: #{encoder_forward.1} parent=0 // pred_check
    _
  $region83: #{encoder_forward.1} parent=0 // pred_check_branch
    %71 = sbr.rel (0) target = $region85
  $region84: #{encoder_forward.1} parent=0 // pred_region
    _
  $region85: #{encoder_forward.1} parent=0 // pred_fallthru
    _
  // Predicated region
  $region86: #{encoder_forward.1} parent=0 // pred_check
    _
  $region87: #{encoder_forward.1} parent=0 // pred_check_branch
    %73 = sbr.rel (0) target = $region89
  $region88: #{encoder_forward.1} parent=0 // pred_region
    _
  $region89: #{encoder_forward.1} parent=0 // pred_fallthru
    _
  %v74 = vlaneseq
  %v75 = vand.u32 %v74, 127
  %vm76 = vcmp.ge.s32.totalorder %v75, 64
  %vm77 = vcmp.lt.s32.totalorder %v75, 96
  %vm78 = vmand %vm76, %vm77
  %v79 = vsel %vm78, 2.0, 1.0
  %v80 = vld [vmem:[%s0] sm:$0xff]
  %v81 = vld [vmem:[%s0 + $0x8] sm:$0xff]
  %v82 = vld [vmem:[%s0 + $0x10] sm:$0xff]
  %v83 = vld [vmem:[%s0 + $0x18] sm:$0xff]
  %v84 = vld [vmem:[%s0 + $0x20] sm:$0xff]
  %v85 = vld [vmem:[%s0 + $0x28] sm:$0xff]
  %v86 = vld [vmem:[%s0 + $0x30] sm:$0xff]
  %v87 = vld [vmem:[%s0 + $0x38] sm:$0xff]
  %v88 = vld [vmem:[%s1] sm:$0xff]
  %v89 = vld [vmem:[%s3] sm:$0x1]
  %v91 = vperm.slane %v89, 0
  %vm93 = vcmask 64512
  %v95 = vsel %vm93, %v80, 0
  %v98 = vsel %vm93, %v81, 0
  %v101 = vsel %vm93, %v82, 0
  %v104 = vsel %vm93, %v83, 0
  %v107 = vsel %vm93, %v84, 0
  %v110 = vsel %vm93, %v85, 0
  %v113 = vsel %vm93, %v86, 0
  %v116 = vsel %vm93, %v87, 0
  %118 = vmatpush.msra.mxu0 0.0
  %119 = vmatpush.msra.mxu0 0.0
  %120 = vmatpush.msra.mxu0 0.0
  %121 = vmatpush.msra.mxu0 0.0
  %122 = vmatpush.msra.mxu0 0.0
  %123 = vmatpush.msra.mxu0 0.0
  %124 = vmatpush.msra.mxu0 0.0
  %125 = vmatpush.msra.mxu0 0.0
  %126 = vmatpush.msra.mxu0 0.0
  %127 = vmatpush.msra.mxu0 0.0
  %128 = vmatpush.msra.mxu0 0.0
  %129 = vmatpush.msra.mxu0 0.0
  %130 = vmatpush.msra.mxu0 0.0
  %131 = vmatpush.msra.mxu0 0.0
  %132 = vmatpush.msra.mxu0 0.0
  %133 = vmatpush.msra.mxu0 %v88
  %134 = vmatmul.f32.gmra.mxu0 %v95
  %v135 = vpop.f32.mrf.mxu0
  %v136 = vadd.f32 %v91, %v135
  %137 = vmatmul.f32.gmra.mxu0 %v98
  %v138 = vpop.f32.mrf.mxu0
  %v139 = vadd.f32 %v91, %v138
  %140 = vmatmul.f32.gmra.mxu0 %v101
  %v141 = vpop.f32.mrf.mxu0
  %v142 = vadd.f32 %v91, %v141
  %143 = vmatmul.f32.gmra.mxu0 %v104
  %v144 = vpop.f32.mrf.mxu0
  %v145 = vadd.f32 %v91, %v144
  %146 = vmatmul.f32.gmra.mxu0 %v107
  %v147 = vpop.f32.mrf.mxu0
  %v148 = vadd.f32 %v91, %v147
  %149 = vmatmul.f32.gmra.mxu0 %v110
  %v150 = vpop.f32.mrf.mxu0
  %v151 = vadd.f32 %v91, %v150
  %152 = vmatmul.f32.gmra.mxu0 %v113
  %v153 = vpop.f32.mrf.mxu0
  %v154 = vadd.f32 %v91, %v153
  %155 = vmatmul.f32.gmra.mxu0 %v116
  %v156 = vpop.f32.mrf.mxu0
  %v157 = vadd.f32 %v91, %v156
  %158 = vdwg.mxu0
  %v159 = vmul.f32 %v136, %v79
  %v160 = vmul.f32 %v139, %v79
  %v161 = vmul.f32 %v142, %v79
  %v162 = vmul.f32 %v145, %v79
  %v163 = vmul.f32 %v148, %v79
  %v164 = vmul.f32 %v151, %v79
  %v165 = vmul.f32 %v154, %v79
  %v166 = vmul.f32 %v157, %v79
  %167 = vst [vmem:[#allocation2] sm:$0xff] %v159
  %168 = vst [vmem:[#allocation2 + $0x8] sm:$0xff] %v160
  %169 = vst [vmem:[#allocation2 + $0x10] sm:$0xff] %v161
  %170 = vst [vmem:[#allocation2 + $0x18] sm:$0xff] %v162
  %171 = vst [vmem:[#allocation2 + $0x20] sm:$0xff] %v163
  %172 = vst [vmem:[#allocation2 + $0x28] sm:$0xff] %v164
  %173 = vst [vmem:[#allocation2 + $0x30] sm:$0xff] %v165
  %174 = vst [vmem:[#allocation2 + $0x38] sm:$0xff] %v166
  %v175 = vld [vmem:[%s4] sm:$0xff]
  %v176 = vld [vmem:[%s6] sm:$0x1]
  %v178 = vperm.slane %v176, 0
  %180 = vmatpush.msra.mxu0 0.0
  %181 = vmatpush.msra.mxu0 0.0
  %182 = vmatpush.msra.mxu0 0.0
  %183 = vmatpush.msra.mxu0 0.0
  %184 = vmatpush.msra.mxu0 0.0
  %185 = vmatpush.msra.mxu0 0.0
  %186 = vmatpush.msra.mxu0 0.0
  %187 = vmatpush.msra.mxu0 0.0
  %188 = vmatpush.msra.mxu0 0.0
  %189 = vmatpush.msra.mxu0 0.0
  %190 = vmatpush.msra.mxu0 0.0
  %191 = vmatpush.msra.mxu0 0.0
  %192 = vmatpush.msra.mxu0 0.0
  %193 = vmatpush.msra.mxu0 0.0
  %194 = vmatpush.msra.mxu0 0.0
  %195 = vmatpush.msra.mxu0 %v175
  %196 = vmatmul.f32.gmra.mxu0 %v95
  %v197 = vpop.f32.mrf.mxu0
  %v198 = vadd.f32 %v178, %v197
  %199 = vmatmul.f32.gmra.mxu0 %v98
  %v200 = vpop.f32.mrf.mxu0
  %v201 = vadd.f32 %v178, %v200
  %202 = vmatmul.f32.gmra.mxu0 %v101
  %v203 = vpop.f32.mrf.mxu0
  %v204 = vadd.f32 %v178, %v203
  %205 = vmatmul.f32.gmra.mxu0 %v104
  %v206 = vpop.f32.mrf.mxu0
  %v207 = vadd.f32 %v178, %v206
  %208 = vmatmul.f32.gmra.mxu0 %v107
  %v209 = vpop.f32.mrf.mxu0
  %v210 = vadd.f32 %v178, %v209
  %211 = vmatmul.f32.gmra.mxu0 %v110
  %v212 = vpop.f32.mrf.mxu0
  %v213 = vadd.f32 %v178, %v212
  %214 = vmatmul.f32.gmra.mxu0 %v113
  %v215 = vpop.f32.mrf.mxu0
  %v216 = vadd.f32 %v178, %v215
  %217 = vmatmul.f32.gmra.mxu0 %v116
  %v218 = vpop.f32.mrf.mxu0
  %v219 = vadd.f32 %v178, %v218
  %220 = vdwg.mxu0
  %v221 = vmul.f32 %v198, %v79
  %v222 = vmul.f32 %v201, %v79
  %v223 = vmul.f32 %v204, %v79
  %v224 = vmul.f32 %v207, %v79
  %v225 = vmul.f32 %v210, %v79
  %v226 = vmul.f32 %v213, %v79
  %v227 = vmul.f32 %v216, %v79
  %v228 = vmul.f32 %v219, %v79
  %229 = vst [vmem:[#allocation3] sm:$0xff] %v221
  %230 = vst [vmem:[#allocation3 + $0x8] sm:$0xff] %v222
  %231 = vst [vmem:[#allocation3 + $0x10] sm:$0xff] %v223
  %232 = vst [vmem:[#allocation3 + $0x18] sm:$0xff] %v224
  %233 = vst [vmem:[#allocation3 + $0x20] sm:$0xff] %v225
  %234 = vst [vmem:[#allocation3 + $0x28] sm:$0xff] %v226
  %235 = vst [vmem:[#allocation3 + $0x30] sm:$0xff] %v227
  %236 = vst [vmem:[#allocation3 + $0x38] sm:$0xff] %v228
  %v237 = vld [vmem:[%s2] sm:$0xff]
  %v238 = vld [vmem:[%s2 + $0x8] sm:$0xff]
  %v239 = vld [vmem:[%s2 + $0x10] sm:$0xff]
  %v240 = vld [vmem:[%s2 + $0x18] sm:$0xff]
  %v241 = vmul.f32 %v237, %v79
  %v242 = vmul.f32 %v238, %v79
  %v243 = vmul.f32 %v239, %v79
  %v244 = vmul.f32 %v240, %v79
  %v245 = vld [vmem:[%s5] sm:$0xff]
  %v246 = vld [vmem:[%s5 + $0x8] sm:$0xff]
  %v247 = vld [vmem:[%s5 + $0x10] sm:$0xff]
  %v248 = vld [vmem:[%s5 + $0x18] sm:$0xff]
  %v249 = vmul.f32 %v245, %v79
  %v250 = vmul.f32 %v246, %v79
  %v251 = vmul.f32 %v247, %v79
  %v252 = vmul.f32 %v248, %v79
  %v253 = vld [vmem:[#allocation2] sm:$0xff]
  %vm254 = vcmask 261120
  %v256 = vsel %vm254, 0.0, 0
  %258 = vmatpush.msra.mxu0 0.0
  %259 = vmatpush.msra.mxu0 0.0
  %260 = vmatpush.msra.mxu0 0.0
  %261 = vmatpush.msra.mxu0 0.0
  %262 = vmatpush.msra.mxu0 0.0
  %263 = vmatpush.msra.mxu0 0.0
  %264 = vmatpush.msra.mxu0 0.0
  %265 = vmatpush.msra.mxu0 0.0
  %266 = vmatpush.msra.mxu0 0.0
  %267 = vmatpush.msra.mxu0 0.0
  %268 = vmatpush.msra.mxu0 0.0
  %269 = vmatpush.msra.mxu0 0.0
  %270 = vmatpush.msra.mxu0 %v244
  %271 = vmatpush.msra.mxu0 %v243
  %272 = vmatpush.msra.mxu0 %v242
  %273 = vmatpush.msra.mxu0 %v241
  %274 = vmatmul.f32.gmra.mxu0 %v256
  %v275 = vpop.f32.mrf.mxu0
  %v276 = vadd.f32 0.0, %v275
  %277 = vdwg.mxu0
  %v278 = vadd.f32 %v253, %v276
  %v279 = vxor.u32 %v278, 2147483648
  %v280 = vmul.f32 %v279, 1.442695
  %v281 = vpow.pop %v280
  %v282 = vadd.f32 %v281, 1.0
  %v283 = vrcp.pop %v282
  %v284 = vmul.f32 %v282, %v283
  %v285 = vsub.f32 1.0, %v284
  %v286 = vmul.f32 %v283, %v285
  %v287 = vadd.f32 %v283, %v286
  %vm288 = vweird.f32 %v282
  %vm289 = vweird.f32 %v283
  %vm290 = vmor %vm288, %vm289
  %v291 = vsel %vm290, %v283, %v287
  %v292 = vand.u32 2147483647, %v282
  %vm293 = vcmp.eq.f32.partialorder %v292, 8.507059e+37
  %v294 = vand.u32 %v282, 2147483648
  %v295 = vor.u32 1.1754944e-38, %v294
  %v296 = vsel %vm293, %v295, %v291
  %v297 = vmul.f32 1.0, %v296
  %v298 = vmul.f32 %v297, 2.0
  %v299 = vsub.f32 %v298, 1.0
  %v300 = vsel %vm78, %v299, %v297
  %v301 = vmul.f32 %v300, 0.0
  %303 = vrot.lane.b32.xlu0 %v300, 64
  %v304 = vpop.permute.xlu0 %303
  %v306 = vmul.f32 %v300, %v304
  %308 = vrot.lane.b32.xlu0 %v306, 32
  %v309 = vpop.permute.xlu0 %308
  %v311 = vadd.f32 %v301, %v309
  %v312 = vtanh.pop %v311
  %314 = vrot.lane.b32.xlu0 %v312, 64
  %v315 = vpop.permute.xlu0 %314
  %v317 = vmul.f32 %v300, %v315
  %319 = vrot.lane.b32.xlu0 %v317, 32
  %v320 = vpop.permute.xlu0 %319
  %322 = vst.msk [vmem:[#allocation4] sm:$0xff] %vm254, %v320
  %v323 = vld [vmem:[#allocation3 + $0x38] sm:$0xff]
  %324 = vmatpush.msra.mxu0 0.0
  %325 = vmatpush.msra.mxu0 0.0
  %326 = vmatpush.msra.mxu0 0.0
  %327 = vmatpush.msra.mxu0 0.0
  %328 = vmatpush.msra.mxu0 0.0
  %329 = vmatpush.msra.mxu0 0.0
  %330 = vmatpush.msra.mxu0 0.0
  %331 = vmatpush.msra.mxu0 0.0
  %332 = vmatpush.msra.mxu0 0.0
  %333 = vmatpush.msra.mxu0 0.0
  %334 = vmatpush.msra.mxu0 0.0
  %335 = vmatpush.msra.mxu0 0.0
  %336 = vmatpush.msra.mxu0 %v252
  %337 = vmatpush.msra.mxu0 %v251
  %338 = vmatpush.msra.mxu0 %v250
  %339 = vmatpush.msra.mxu0 %v249
  %340 = vmatmul.f32.gmra.mxu0 %v256
  %v341 = vpop.f32.mrf.mxu0
  %v342 = vadd.f32 0.0, %v341
  %343 = vdwg.mxu0
  %v344 = vadd.f32 %v323, %v342
  %v345 = vxor.u32 %v344, 2147483648
  %v346 = vmul.f32 %v345, 1.442695
  %v347 = vpow.pop %v346
  %v348 = vadd.f32 %v347, 1.0
  %v349 = vrcp.pop %v348
  %v350 = vmul.f32 %v348, %v349
  %v351 = vsub.f32 1.0, %v350
  %v352 = vmul.f32 %v349, %v351
  %v353 = vadd.f32 %v349, %v352
  %vm354 = vweird.f32 %v348
  %vm355 = vweird.f32 %v349
  %vm356 = vmor %vm354, %vm355
  %v357 = vsel %vm356, %v349, %v353
  %v358 = vand.u32 2147483647, %v348
  %vm359 = vcmp.eq.f32.partialorder %v358, 8.507059e+37
  %v360 = vand.u32 %v348, 2147483648
  %v361 = vor.u32 1.1754944e-38, %v360
  %v362 = vsel %vm359, %v361, %v357
  %v363 = vmul.f32 1.0, %v362
  %v364 = vmul.f32 %v363, 2.0
  %v365 = vsub.f32 %v364, 1.0
  %v366 = vsel %vm78, %v365, %v363
  %v367 = vmul.f32 %v366, 0.0
  %369 = vrot.lane.b32.xlu0 %v366, 64
  %v370 = vpop.permute.xlu0 %369
  %v372 = vmul.f32 %v366, %v370
  %374 = vrot.lane.b32.xlu0 %v372, 32
  %v375 = vpop.permute.xlu0 %374
  %v377 = vadd.f32 %v367, %v375
  %v378 = vtanh.pop %v377
  %380 = vrot.lane.b32.xlu0 %v378, 64
  %v381 = vpop.permute.xlu0 %380
  %v383 = vmul.f32 %v366, %v381
  %385 = vrot.lane.b32.xlu0 %v383, 32
  %v386 = vpop.permute.xlu0 %385
  %388 = vst.msk [vmem:[#allocation5 + $0x38] sm:$0xff] %vm254, %v386
  %v389 = vld [vmem:[#allocation2 + $0x8] sm:$0xff]
  %v390 = vsel %vm254, %v320, 0
  %392 = vmatpush.msra.mxu0 0.0
  %393 = vmatpush.msra.mxu0 0.0
  %394 = vmatpush.msra.mxu0 0.0
  %395 = vmatpush.msra.mxu0 0.0
  %396 = vmatpush.msra.mxu0 0.0
  %397 = vmatpush.msra.mxu0 0.0
  %398 = vmatpush.msra.mxu0 0.0
  %399 = vmatpush.msra.mxu0 0.0
  %400 = vmatpush.msra.mxu0 0.0
  %401 = vmatpush.msra.mxu0 0.0
  %402 = vmatpush.msra.mxu0 0.0
  %403 = vmatpush.msra.mxu0 0.0
  %404 = vmatpush.msra.mxu0 %v244
  %405 = vmatpush.msra.mxu0 %v243
  %406 = vmatpush.msra.mxu0 %v242
  %407 = vmatpush.msra.mxu0 %v241
  %408 = vmatmul.f32.gmra.mxu0 %v390
  %v409 = vpop.f32.mrf.mxu0
  %v410 = vadd.f32 0.0, %v409
  %411 = vdwg.mxu0
  %v412 = vadd.f32 %v389, %v410
  %v413 = vxor.u32 %v412, 2147483648
  %v414 = vmul.f32 %v413, 1.442695
  %v415 = vpow.pop %v414
  %v416 = vadd.f32 %v415, 1.0
  %v417 = vrcp.pop %v416
  %v418 = vmul.f32 %v416, %v417
  %v419 = vsub.f32 1.0, %v418
  %v420 = vmul.f32 %v417, %v419
  %v421 = vadd.f32 %v417, %v420
  %vm422 = vweird.f32 %v416
  %vm423 = vweird.f32 %v417
  %vm424 = vmor %vm422, %vm423
  %v425 = vsel %vm424, %v417, %v421
  %v426 = vand.u32 2147483647, %v416
  %vm427 = vcmp.eq.f32.partialorder %v426, 8.507059e+37
  %v428 = vand.u32 %v416, 2147483648
  %v429 = vor.u32 1.1754944e-38, %v428
  %v430 = vsel %vm427, %v429, %v425
  %v431 = vmul.f32 1.0, %v430
  %v432 = vmul.f32 %v431, 2.0
  %v433 = vsub.f32 %v432, 1.0
  %v434 = vsel %vm78, %v433, %v431
  %v435 = vmul.f32 %v434, %v311
  %437 = vrot.lane.b32.xlu0 %v434, 64
  %v438 = vpop.permute.xlu0 %437
  %v440 = vmul.f32 %v434, %v438
  %442 = vrot.lane.b32.xlu0 %v440, 32
  %v443 = vpop.permute.xlu0 %442
  %v445 = vadd.f32 %v435, %v443
  %v446 = vtanh.pop %v445
  %448 = vrot.lane.b32.xlu0 %v446, 64
  %v449 = vpop.permute.xlu0 %448
  %v451 = vmul.f32 %v434, %v449
  %453 = vrot.lane.b32.xlu0 %v451, 32
  %v454 = vpop.permute.xlu0 %453
  %456 = vst.msk [vmem:[#allocation4 + $0x8] sm:$0xff] %vm254, %v454
  %v457 = vld [vmem:[#allocation3 + $0x30] sm:$0xff]
  %v458 = vsel %vm254, %v386, 0
  %460 = vmatpush.msra.mxu0 0.0
  %461 = vmatpush.msra.mxu0 0.0
  %462 = vmatpush.msra.mxu0 0.0
  %463 = vmatpush.msra.mxu0 0.0
  %464 = vmatpush.msra.mxu0 0.0
  %465 = vmatpush.msra.mxu0 0.0
  %466 = vmatpush.msra.mxu0 0.0
  %467 = vmatpush.msra.mxu0 0.0
  %468 = vmatpush.msra.mxu0 0.0
  %469 = vmatpush.msra.mxu0 0.0
  %470 = vmatpush.msra.mxu0 0.0
  %471 = vmatpush.msra.mxu0 0.0
  %472 = vmatpush.msra.mxu0 %v252
  %473 = vmatpush.msra.mxu0 %v251
  %474 = vmatpush.msra.mxu0 %v250
  %475 = vmatpush.msra.mxu0 %v249
  %476 = vmatmul.f32.gmra.mxu0 %v458
  %v477 = vpop.f32.mrf.mxu0
  %v478 = vadd.f32 0.0, %v477
  %479 = vdwg.mxu0
  %v480 = vadd.f32 %v457, %v478
  %v481 = vxor.u32 %v480, 2147483648
  %v482 = vmul.f32 %v481, 1.442695
  %v483 = vpow.pop %v482
  %v484 = vadd.f32 %v483, 1.0
  %v485 = vrcp.pop %v484
  %v486 = vmul.f32 %v484, %v485
  %v487 = vsub.f32 1.0, %v486
  %v488 = vmul.f32 %v485, %v487
  %v489 = vadd.f32 %v485, %v488
  %vm490 = vweird.f32 %v484
  %vm491 = vweird.f32 %v485
  %vm492 = vmor %vm490, %vm491
  %v493 = vsel %vm492, %v485, %v489
  %v494 = vand.u32 2147483647, %v484
  %vm495 = vcmp.eq.f32.partialorder %v494, 8.507059e+37
  %v496 = vand.u32 %v484, 2147483648
  %v497 = vor.u32 1.1754944e-38, %v496
  %v498 = vsel %vm495, %v497, %v493
  %v499 = vmul.f32 1.0, %v498
  %v500 = vmul.f32 %v499, 2.0
  %v501 = vsub.f32 %v500, 1.0
  %v502 = vsel %vm78, %v501, %v499
  %v503 = vmul.f32 %v502, %v377
  %505 = vrot.lane.b32.xlu0 %v502, 64
  %v506 = vpop.permute.xlu0 %505
  %v508 = vmul.f32 %v502, %v506
  %510 = vrot.lane.b32.xlu0 %v508, 32
  %v511 = vpop.permute.xlu0 %510
  %v513 = vadd.f32 %v503, %v511
  %v514 = vtanh.pop %v513
  %516 = vrot.lane.b32.xlu0 %v514, 64
  %v517 = vpop.permute.xlu0 %516
  %v519 = vmul.f32 %v502, %v517
  %521 = vrot.lane.b32.xlu0 %v519, 32
  %v522 = vpop.permute.xlu0 %521
  %524 = vst.msk [vmem:[#allocation5 + $0x30] sm:$0xff] %vm254, %v522
  %v525 = vld [vmem:[#allocation2 + $0x10] sm:$0xff]
  %v526 = vsel %vm254, %v454, 0
  %528 = vmatpush.msra.mxu0 0.0
  %529 = vmatpush.msra.mxu0 0.0
  %530 = vmatpush.msra.mxu0 0.0
  %531 = vmatpush.msra.mxu0 0.0
  %532 = vmatpush.msra.mxu0 0.0
  %533 = vmatpush.msra.mxu0 0.0
  %534 = vmatpush.msra.mxu0 0.0
  %535 = vmatpush.msra.mxu0 0.0
  %536 = vmatpush.msra.mxu0 0.0
  %537 = vmatpush.msra.mxu0 0.0
  %538 = vmatpush.msra.mxu0 0.0
  %539 = vmatpush.msra.mxu0 0.0
  %540 = vmatpush.msra.mxu0 %v244
  %541 = vmatpush.msra.mxu0 %v243
  %542 = vmatpush.msra.mxu0 %v242
  %543 = vmatpush.msra.mxu0 %v241
  %544 = vmatmul.f32.gmra.mxu0 %v526
  %v545 = vpop.f32.mrf.mxu0
  %v546 = vadd.f32 0.0, %v545
  %547 = vdwg.mxu0
  %v548 = vadd.f32 %v525, %v546
  %v549 = vxor.u32 %v548, 2147483648
  %v550 = vmul.f32 %v549, 1.442695
  %v551 = vpow.pop %v550
  %v552 = vadd.f32 %v551, 1.0
  %v553 = vrcp.pop %v552
  %v554 = vmul.f32 %v552, %v553
  %v555 = vsub.f32 1.0, %v554
  %v556 = vmul.f32 %v553, %v555
  %v557 = vadd.f32 %v553, %v556
  %vm558 = vweird.f32 %v552
  %vm559 = vweird.f32 %v553
  %vm560 = vmor %vm558, %vm559
  %v561 = vsel %vm560, %v553, %v557
  %v562 = vand.u32 2147483647, %v552
  %vm563 = vcmp.eq.f32.partialorder %v562, 8.507059e+37
  %v564 = vand.u32 %v552, 2147483648
  %v565 = vor.u32 1.1754944e-38, %v564
  %v566 = vsel %vm563, %v565, %v561
  %v567 = vmul.f32 1.0, %v566
  %v568 = vmul.f32 %v567, 2.0
  %v569 = vsub.f32 %v568, 1.0
  %v570 = vsel %vm78, %v569, %v567
  %v571 = vmul.f32 %v570, %v445
  %573 = vrot.lane.b32.xlu0 %v570, 64
  %v574 = vpop.permute.xlu0 %573
  %v576 = vmul.f32 %v570, %v574
  %578 = vrot.lane.b32.xlu0 %v576, 32
  %v579 = vpop.permute.xlu0 %578
  %v581 = vadd.f32 %v571, %v579
  %v582 = vtanh.pop %v581
  %584 = vrot.lane.b32.xlu0 %v582, 64
  %v585 = vpop.permute.xlu0 %584
  %v587 = vmul.f32 %v570, %v585
  %589 = vrot.lane.b32.xlu0 %v587, 32
  %v590 = vpop.permute.xlu0 %589
  %592 = vst.msk [vmem:[#allocation4 + $0x10] sm:$0xff] %vm254, %v590
  %v593 = vld [vmem:[#allocation3 + $0x28] sm:$0xff]
  %v594 = vsel %vm254, %v522, 0
  %596 = vmatpush.msra.mxu0 0.0
  %597 = vmatpush.msra.mxu0 0.0
  %598 = vmatpush.msra.mxu0 0.0
  %599 = vmatpush.msra.mxu0 0.0
  %600 = vmatpush.msra.mxu0 0.0
  %601 = vmatpush.msra.mxu0 0.0
  %602 = vmatpush.msra.mxu0 0.0
  %603 = vmatpush.msra.mxu0 0.0
  %604 = vmatpush.msra.mxu0 0.0
  %605 = vmatpush.msra.mxu0 0.0
  %606 = vmatpush.msra.mxu0 0.0
  %607 = vmatpush.msra.mxu0 0.0
  %608 = vmatpush.msra.mxu0 %v252
  %609 = vmatpush.msra.mxu0 %v251
  %610 = vmatpush.msra.mxu0 %v250
  %611 = vmatpush.msra.mxu0 %v249
  %612 = vmatmul.f32.gmra.mxu0 %v594
  %v613 = vpop.f32.mrf.mxu0
  %v614 = vadd.f32 0.0, %v613
  %615 = vdwg.mxu0
  %v616 = vadd.f32 %v593, %v614
  %v617 = vxor.u32 %v616, 2147483648
  %v618 = vmul.f32 %v617, 1.442695
  %v619 = vpow.pop %v618
  %v620 = vadd.f32 %v619, 1.0
  %v621 = vrcp.pop %v620
  %v622 = vmul.f32 %v620, %v621
  %v623 = vsub.f32 1.0, %v622
  %v624 = vmul.f32 %v621, %v623
  %v625 = vadd.f32 %v621, %v624
  %vm626 = vweird.f32 %v620
  %vm627 = vweird.f32 %v621
  %vm628 = vmor %vm626, %vm627
  %v629 = vsel %vm628, %v621, %v625
  %v630 = vand.u32 2147483647, %v620
  %vm631 = vcmp.eq.f32.partialorder %v630, 8.507059e+37
  %v632 = vand.u32 %v620, 2147483648
  %v633 = vor.u32 1.1754944e-38, %v632
  %v634 = vsel %vm631, %v633, %v629
  %v635 = vmul.f32 1.0, %v634
  %v636 = vmul.f32 %v635, 2.0
  %v637 = vsub.f32 %v636, 1.0
  %v638 = vsel %vm78, %v637, %v635
  %v639 = vmul.f32 %v638, %v513
  %641 = vrot.lane.b32.xlu0 %v638, 64
  %v642 = vpop.permute.xlu0 %641
  %v644 = vmul.f32 %v638, %v642
  %646 = vrot.lane.b32.xlu0 %v644, 32
  %v647 = vpop.permute.xlu0 %646
  %v649 = vadd.f32 %v639, %v647
  %v650 = vtanh.pop %v649
  %652 = vrot.lane.b32.xlu0 %v650, 64
  %v653 = vpop.permute.xlu0 %652
  %v655 = vmul.f32 %v638, %v653
  %657 = vrot.lane.b32.xlu0 %v655, 32
  %v658 = vpop.permute.xlu0 %657
  %660 = vst.msk [vmem:[#allocation5 + $0x28] sm:$0xff] %vm254, %v658
  %v661 = vld [vmem:[#allocation2 + $0x18] sm:$0xff]
  %v662 = vsel %vm254, %v590, 0
  %664 = vmatpush.msra.mxu0 0.0
  %665 = vmatpush.msra.mxu0 0.0
  %666 = vmatpush.msra.mxu0 0.0
  %667 = vmatpush.msra.mxu0 0.0
  %668 = vmatpush.msra.mxu0 0.0
  %669 = vmatpush.msra.mxu0 0.0
  %670 = vmatpush.msra.mxu0 0.0
  %671 = vmatpush.msra.mxu0 0.0
  %672 = vmatpush.msra.mxu0 0.0
  %673 = vmatpush.msra.mxu0 0.0
  %674 = vmatpush.msra.mxu0 0.0
  %675 = vmatpush.msra.mxu0 0.0
  %676 = vmatpush.msra.mxu0 %v244
  %677 = vmatpush.msra.mxu0 %v243
  %678 = vmatpush.msra.mxu0 %v242
  %679 = vmatpush.msra.mxu0 %v241
  %680 = vmatmul.f32.gmra.mxu0 %v662
  %v681 = vpop.f32.mrf.mxu0
  %v682 = vadd.f32 0.0, %v681
  %683 = vdwg.mxu0
  %v684 = vadd.f32 %v661, %v682
  %v685 = vxor.u32 %v684, 2147483648
  %v686 = vmul.f32 %v685, 1.442695
  %v687 = vpow.pop %v686
  %v688 = vadd.f32 %v687, 1.0
  %v689 = vrcp.pop %v688
  %v690 = vmul.f32 %v688, %v689
  %v691 = vsub.f32 1.0, %v690
  %v692 = vmul.f32 %v689, %v691
  %v693 = vadd.f32 %v689, %v692
  %vm694 = vweird.f32 %v688
  %vm695 = vweird.f32 %v689
  %vm696 = vmor %vm694, %vm695
  %v697 = vsel %vm696, %v689, %v693
  %v698 = vand.u32 2147483647, %v688
  %vm699 = vcmp.eq.f32.partialorder %v698, 8.507059e+37
  %v700 = vand.u32 %v688, 2147483648
  %v701 = vor.u32 1.1754944e-38, %v700
  %v702 = vsel %vm699, %v701, %v697
  %v703 = vmul.f32 1.0, %v702
  %v704 = vmul.f32 %v703, 2.0
  %v705 = vsub.f32 %v704, 1.0
  %v706 = vsel %vm78, %v705, %v703
  %v707 = vmul.f32 %v706, %v581
  %709 = vrot.lane.b32.xlu0 %v706, 64
  %v710 = vpop.permute.xlu0 %709
  %v712 = vmul.f32 %v706, %v710
  %714 = vrot.lane.b32.xlu0 %v712, 32
  %v715 = vpop.permute.xlu0 %714
  %v717 = vadd.f32 %v707, %v715
  %v718 = vtanh.pop %v717
  %720 = vrot.lane.b32.xlu0 %v718, 64
  %v721 = vpop.permute.xlu0 %720
  %v723 = vmul.f32 %v706, %v721
  %725 = vrot.lane.b32.xlu0 %v723, 32
  %v726 = vpop.permute.xlu0 %725
  %728 = vst.msk [vmem:[#allocation4 + $0x18] sm:$0xff] %vm254, %v726
  %v729 = vld [vmem:[#allocation3 + $0x20] sm:$0xff]
  %v730 = vsel %vm254, %v658, 0
  %732 = vmatpush.msra.mxu0 0.0
  %733 = vmatpush.msra.mxu0 0.0
  %734 = vmatpush.msra.mxu0 0.0
  %735 = vmatpush.msra.mxu0 0.0
  %736 = vmatpush.msra.mxu0 0.0
  %737 = vmatpush.msra.mxu0 0.0
  %738 = vmatpush.msra.mxu0 0.0
  %739 = vmatpush.msra.mxu0 0.0
  %740 = vmatpush.msra.mxu0 0.0
  %741 = vmatpush.msra.mxu0 0.0
  %742 = vmatpush.msra.mxu0 0.0
  %743 = vmatpush.msra.mxu0 0.0
  %744 = vmatpush.msra.mxu0 %v252
  %745 = vmatpush.msra.mxu0 %v251
  %746 = vmatpush.msra.mxu0 %v250
  %747 = vmatpush.msra.mxu0 %v249
  %748 = vmatmul.f32.gmra.mxu0 %v730
  %v749 = vpop.f32.mrf.mxu0
  %v750 = vadd.f32 0.0, %v749
  %751 = vdwg.mxu0
  %v752 = vadd.f32 %v729, %v750
  %v753 = vxor.u32 %v752, 2147483648
  %v754 = vmul.f32 %v753, 1.442695
  %v755 = vpow.pop %v754
  %v756 = vadd.f32 %v755, 1.0
  %v757 = vrcp.pop %v756
  %v758 = vmul.f32 %v756, %v757
  %v759 = vsub.f32 1.0, %v758
  %v760 = vmul.f32 %v757, %v759
  %v761 = vadd.f32 %v757, %v760
  %vm762 = vweird.f32 %v756
  %vm763 = vweird.f32 %v757
  %vm764 = vmor %vm762, %vm763
  %v765 = vsel %vm764, %v757, %v761
  %v766 = vand.u32 2147483647, %v756
  %vm767 = vcmp.eq.f32.partialorder %v766, 8.507059e+37
  %v768 = vand.u32 %v756, 2147483648
  %v769 = vor.u32 1.1754944e-38, %v768
  %v770 = vsel %vm767, %v769, %v765
  %v771 = vmul.f32 1.0, %v770
  %v772 = vmul.f32 %v771, 2.0
  %v773 = vsub.f32 %v772, 1.0
  %v774 = vsel %vm78, %v773, %v771
  %v775 = vmul.f32 %v774, %v649
  %777 = vrot.lane.b32.xlu0 %v774, 64
  %v778 = vpop.permute.xlu0 %777
  %v780 = vmul.f32 %v774, %v778
  %782 = vrot.lane.b32.xlu0 %v780, 32
  %v783 = vpop.permute.xlu0 %782
  %v785 = vadd.f32 %v775, %v783
  %v786 = vtanh.pop %v785
  %788 = vrot.lane.b32.xlu0 %v786, 64
  %v789 = vpop.permute.xlu0 %788
  %v791 = vmul.f32 %v774, %v789
  %793 = vrot.lane.b32.xlu0 %v791, 32
  %v794 = vpop.permute.xlu0 %793
  %796 = vst.msk [vmem:[#allocation5 + $0x20] sm:$0xff] %vm254, %v794
  %v797 = vld [vmem:[#allocation2 + $0x20] sm:$0xff]
  %v798 = vsel %vm254, %v726, 0
  %800 = vmatpush.msra.mxu0 0.0
  %801 = vmatpush.msra.mxu0 0.0
  %802 = vmatpush.msra.mxu0 0.0
  %803 = vmatpush.msra.mxu0 0.0
  %804 = vmatpush.msra.mxu0 0.0
  %805 = vmatpush.msra.mxu0 0.0
  %806 = vmatpush.msra.mxu0 0.0
  %807 = vmatpush.msra.mxu0 0.0
  %808 = vmatpush.msra.mxu0 0.0
  %809 = vmatpush.msra.mxu0 0.0
  %810 = vmatpush.msra.mxu0 0.0
  %811 = vmatpush.msra.mxu0 0.0
  %812 = vmatpush.msra.mxu0 %v244
  %813 = vmatpush.msra.mxu0 %v243
  %814 = vmatpush.msra.mxu0 %v242
  %815 = vmatpush.msra.mxu0 %v241
  %816 = vmatmul.f32.gmra.mxu0 %v798
  %v817 = vpop.f32.mrf.mxu0
  %v818 = vadd.f32 0.0, %v817
  %819 = vdwg.mxu0
  %v820 = vadd.f32 %v797, %v818
  %v821 = vxor.u32 %v820, 2147483648
  %v822 = vmul.f32 %v821, 1.442695
  %v823 = vpow.pop %v822
  %v824 = vadd.f32 %v823, 1.0
  %v825 = vrcp.pop %v824
  %v826 = vmul.f32 %v824, %v825
  %v827 = vsub.f32 1.0, %v826
  %v828 = vmul.f32 %v825, %v827
  %v829 = vadd.f32 %v825, %v828
  %vm830 = vweird.f32 %v824
  %vm831 = vweird.f32 %v825
  %vm832 = vmor %vm830, %vm831
  %v833 = vsel %vm832, %v825, %v829
  %v834 = vand.u32 2147483647, %v824
  %vm835 = vcmp.eq.f32.partialorder %v834, 8.507059e+37
  %v836 = vand.u32 %v824, 2147483648
  %v837 = vor.u32 1.1754944e-38, %v836
  %v838 = vsel %vm835, %v837, %v833
  %v839 = vmul.f32 1.0, %v838
  %v840 = vmul.f32 %v839, 2.0
  %v841 = vsub.f32 %v840, 1.0
  %v842 = vsel %vm78, %v841, %v839
  %v843 = vmul.f32 %v842, %v717
  %845 = vrot.lane.b32.xlu0 %v842, 64
  %v846 = vpop.permute.xlu0 %845
  %v848 = vmul.f32 %v842, %v846
  %850 = vrot.lane.b32.xlu0 %v848, 32
  %v851 = vpop.permute.xlu0 %850
  %v853 = vadd.f32 %v843, %v851
  %v854 = vtanh.pop %v853
  %856 = vrot.lane.b32.xlu0 %v854, 64
  %v857 = vpop.permute.xlu0 %856
  %v859 = vmul.f32 %v842, %v857
  %861 = vrot.lane.b32.xlu0 %v859, 32
  %v862 = vpop.permute.xlu0 %861
  %864 = vst.msk [vmem:[#allocation4 + $0x20] sm:$0xff] %vm254, %v862
  %v865 = vld [vmem:[#allocation3 + $0x18] sm:$0xff]
  %v866 = vsel %vm254, %v794, 0
  %868 = vmatpush.msra.mxu0 0.0
  %869 = vmatpush.msra.mxu0 0.0
  %870 = vmatpush.msra.mxu0 0.0
  %871 = vmatpush.msra.mxu0 0.0
  %872 = vmatpush.msra.mxu0 0.0
  %873 = vmatpush.msra.mxu0 0.0
  %874 = vmatpush.msra.mxu0 0.0
  %875 = vmatpush.msra.mxu0 0.0
  %876 = vmatpush.msra.mxu0 0.0
  %877 = vmatpush.msra.mxu0 0.0
  %878 = vmatpush.msra.mxu0 0.0
  %879 = vmatpush.msra.mxu0 0.0
  %880 = vmatpush.msra.mxu0 %v252
  %881 = vmatpush.msra.mxu0 %v251
  %882 = vmatpush.msra.mxu0 %v250
  %883 = vmatpush.msra.mxu0 %v249
  %884 = vmatmul.f32.gmra.mxu0 %v866
  %v885 = vpop.f32.mrf.mxu0
  %v886 = vadd.f32 0.0, %v885
  %887 = vdwg.mxu0
  %v888 = vadd.f32 %v865, %v886
  %v889 = vxor.u32 %v888, 2147483648
  %v890 = vmul.f32 %v889, 1.442695
  %v891 = vpow.pop %v890
  %v892 = vadd.f32 %v891, 1.0
  %v893 = vrcp.pop %v892
  %v894 = vmul.f32 %v892, %v893
  %v895 = vsub.f32 1.0, %v894
  %v896 = vmul.f32 %v893, %v895
  %v897 = vadd.f32 %v893, %v896
  %vm898 = vweird.f32 %v892
  %vm899 = vweird.f32 %v893
  %vm900 = vmor %vm898, %vm899
  %v901 = vsel %vm900, %v893, %v897
  %v902 = vand.u32 2147483647, %v892
  %vm903 = vcmp.eq.f32.partialorder %v902, 8.507059e+37
  %v904 = vand.u32 %v892, 2147483648
  %v905 = vor.u32 1.1754944e-38, %v904
  %v906 = vsel %vm903, %v905, %v901
  %v907 = vmul.f32 1.0, %v906
  %v908 = vmul.f32 %v907, 2.0
  %v909 = vsub.f32 %v908, 1.0
  %v910 = vsel %vm78, %v909, %v907
  %v911 = vmul.f32 %v910, %v785
  %913 = vrot.lane.b32.xlu0 %v910, 64
  %v914 = vpop.permute.xlu0 %913
  %v916 = vmul.f32 %v910, %v914
  %918 = vrot.lane.b32.xlu0 %v916, 32
  %v919 = vpop.permute.xlu0 %918
  %v921 = vadd.f32 %v911, %v919
  %v922 = vtanh.pop %v921
  %924 = vrot.lane.b32.xlu0 %v922, 64
  %v925 = vpop.permute.xlu0 %924
  %v927 = vmul.f32 %v910, %v925
  %929 = vrot.lane.b32.xlu0 %v927, 32
  %v930 = vpop.permute.xlu0 %929
  %932 = vst.msk [vmem:[#allocation5 + $0x18] sm:$0xff] %vm254, %v930
  %v933 = vld [vmem:[#allocation2 + $0x28] sm:$0xff]
  %v934 = vsel %vm254, %v862, 0
  %936 = vmatpush.msra.mxu0 0.0
  %937 = vmatpush.msra.mxu0 0.0
  %938 = vmatpush.msra.mxu0 0.0
  %939 = vmatpush.msra.mxu0 0.0
  %940 = vmatpush.msra.mxu0 0.0
  %941 = vmatpush.msra.mxu0 0.0
  %942 = vmatpush.msra.mxu0 0.0
  %943 = vmatpush.msra.mxu0 0.0
  %944 = vmatpush.msra.mxu0 0.0
  %945 = vmatpush.msra.mxu0 0.0
  %946 = vmatpush.msra.mxu0 0.0
  %947 = vmatpush.msra.mxu0 0.0
  %948 = vmatpush.msra.mxu0 %v244
  %949 = vmatpush.msra.mxu0 %v243
  %950 = vmatpush.msra.mxu0 %v242
  %951 = vmatpush.msra.mxu0 %v241
  %952 = vmatmul.f32.gmra.mxu0 %v934
  %v953 = vpop.f32.mrf.mxu0
  %v954 = vadd.f32 0.0, %v953
  %955 = vdwg.mxu0
  %v956 = vadd.f32 %v933, %v954
  %v957 = vxor.u32 %v956, 2147483648
  %v958 = vmul.f32 %v957, 1.442695
  %v959 = vpow.pop %v958
  %v960 = vadd.f32 %v959, 1.0
  %v961 = vrcp.pop %v960
  %v962 = vmul.f32 %v960, %v961
  %v963 = vsub.f32 1.0, %v962
  %v964 = vmul.f32 %v961, %v963
  %v965 = vadd.f32 %v961, %v964
  %vm966 = vweird.f32 %v960
  %vm967 = vweird.f32 %v961
  %vm968 = vmor %vm966, %vm967
  %v969 = vsel %vm968, %v961, %v965
  %v970 = vand.u32 2147483647, %v960
  %vm971 = vcmp.eq.f32.partialorder %v970, 8.507059e+37
  %v972 = vand.u32 %v960, 2147483648
  %v973 = vor.u32 1.1754944e-38, %v972
  %v974 = vsel %vm971, %v973, %v969
  %v975 = vmul.f32 1.0, %v974
  %v976 = vmul.f32 %v975, 2.0
  %v977 = vsub.f32 %v976, 1.0
  %v978 = vsel %vm78, %v977, %v975
  %v979 = vmul.f32 %v978, %v853
  %981 = vrot.lane.b32.xlu0 %v978, 64
  %v982 = vpop.permute.xlu0 %981
  %v984 = vmul.f32 %v978, %v982
  %986 = vrot.lane.b32.xlu0 %v984, 32
  %v987 = vpop.permute.xlu0 %986
  %v989 = vadd.f32 %v979, %v987
  %v990 = vtanh.pop %v989
  %992 = vrot.lane.b32.xlu0 %v990, 64
  %v993 = vpop.permute.xlu0 %992
  %v995 = vmul.f32 %v978, %v993
  %997 = vrot.lane.b32.xlu0 %v995, 32
  %v998 = vpop.permute.xlu0 %997
  %1000 = vst.msk [vmem:[#allocation4 + $0x28] sm:$0xff] %vm254, %v998
  %v1001 = vld [vmem:[#allocation3 + $0x10] sm:$0xff]
  %v1002 = vsel %vm254, %v930, 0
  %1004 = vmatpush.msra.mxu0 0.0
  %1005 = vmatpush.msra.mxu0 0.0
  %1006 = vmatpush.msra.mxu0 0.0
  %1007 = vmatpush.msra.mxu0 0.0
  %1008 = vmatpush.msra.mxu0 0.0
  %1009 = vmatpush.msra.mxu0 0.0
  %1010 = vmatpush.msra.mxu0 0.0
  %1011 = vmatpush.msra.mxu0 0.0
  %1012 = vmatpush.msra.mxu0 0.0
  %1013 = vmatpush.msra.mxu0 0.0
  %1014 = vmatpush.msra.mxu0 0.0
  %1015 = vmatpush.msra.mxu0 0.0
  %1016 = vmatpush.msra.mxu0 %v252
  %1017 = vmatpush.msra.mxu0 %v251
  %1018 = vmatpush.msra.mxu0 %v250
  %1019 = vmatpush.msra.mxu0 %v249
  %1020 = vmatmul.f32.gmra.mxu0 %v1002
  %v1021 = vpop.f32.mrf.mxu0
  %v1022 = vadd.f32 0.0, %v1021
  %1023 = vdwg.mxu0
  %v1024 = vadd.f32 %v1001, %v1022
  %v1025 = vxor.u32 %v1024, 2147483648
  %v1026 = vmul.f32 %v1025, 1.442695
  %v1027 = vpow.pop %v1026
  %v1028 = vadd.f32 %v1027, 1.0
  %v1029 = vrcp.pop %v1028
  %v1030 = vmul.f32 %v1028, %v1029
  %v1031 = vsub.f32 1.0, %v1030
  %v1032 = vmul.f32 %v1029, %v1031
  %v1033 = vadd.f32 %v1029, %v1032
  %vm1034 = vweird.f32 %v1028
  %vm1035 = vweird.f32 %v1029
  %vm1036 = vmor %vm1034, %vm1035
  %v1037 = vsel %vm1036, %v1029, %v1033
  %v1038 = vand.u32 2147483647, %v1028
  %vm1039 = vcmp.eq.f32.partialorder %v1038, 8.507059e+37
  %v1040 = vand.u32 %v1028, 2147483648
  %v1041 = vor.u32 1.1754944e-38, %v1040
  %v1042 = vsel %vm1039, %v1041, %v1037
  %v1043 = vmul.f32 1.0, %v1042
  %v1044 = vmul.f32 %v1043, 2.0
  %v1045 = vsub.f32 %v1044, 1.0
  %v1046 = vsel %vm78, %v1045, %v1043
  %v1047 = vmul.f32 %v1046, %v921
  %1049 = vrot.lane.b32.xlu0 %v1046, 64
  %v1050 = vpop.permute.xlu0 %1049
  %v1052 = vmul.f32 %v1046, %v1050
  %1054 = vrot.lane.b32.xlu0 %v1052, 32
  %v1055 = vpop.permute.xlu0 %1054
  %v1057 = vadd.f32 %v1047, %v1055
  %v1058 = vtanh.pop %v1057
  %1060 = vrot.lane.b32.xlu0 %v1058, 64
  %v1061 = vpop.permute.xlu0 %1060
  %v1063 = vmul.f32 %v1046, %v1061
  %1065 = vrot.lane.b32.xlu0 %v1063, 32
  %v1066 = vpop.permute.xlu0 %1065
  %1068 = vst.msk [vmem:[#allocation5 + $0x10] sm:$0xff] %vm254, %v1066
  %v1069 = vld [vmem:[#allocation2 + $0x30] sm:$0xff]
  %v1070 = vsel %vm254, %v998, 0
  %1072 = vmatpush.msra.mxu0 0.0
  %1073 = vmatpush.msra.mxu0 0.0
  %1074 = vmatpush.msra.mxu0 0.0
  %1075 = vmatpush.msra.mxu0 0.0
  %1076 = vmatpush.msra.mxu0 0.0
  %1077 = vmatpush.msra.mxu0 0.0
  %1078 = vmatpush.msra.mxu0 0.0
  %1079 = vmatpush.msra.mxu0 0.0
  %1080 = vmatpush.msra.mxu0 0.0
  %1081 = vmatpush.msra.mxu0 0.0
  %1082 = vmatpush.msra.mxu0 0.0
  %1083 = vmatpush.msra.mxu0 0.0
  %1084 = vmatpush.msra.mxu0 %v244
  %1085 = vmatpush.msra.mxu0 %v243
  %1086 = vmatpush.msra.mxu0 %v242
  %1087 = vmatpush.msra.mxu0 %v241
  %1088 = vmatmul.f32.gmra.mxu0 %v1070
  %v1089 = vpop.f32.mrf.mxu0
  %v1090 = vadd.f32 0.0, %v1089
  %1091 = vdwg.mxu0
  %v1092 = vadd.f32 %v1069, %v1090
  %v1093 = vxor.u32 %v1092, 2147483648
  %v1094 = vmul.f32 %v1093, 1.442695
  %v1095 = vpow.pop %v1094
  %v1096 = vadd.f32 %v1095, 1.0
  %v1097 = vrcp.pop %v1096
  %v1098 = vmul.f32 %v1096, %v1097
  %v1099 = vsub.f32 1.0, %v1098
  %v1100 = vmul.f32 %v1097, %v1099
  %v1101 = vadd.f32 %v1097, %v1100
  %vm1102 = vweird.f32 %v1096
  %vm1103 = vweird.f32 %v1097
  %vm1104 = vmor %vm1102, %vm1103
  %v1105 = vsel %vm1104, %v1097, %v1101
  %v1106 = vand.u32 2147483647, %v1096
  %vm1107 = vcmp.eq.f32.partialorder %v1106, 8.507059e+37
  %v1108 = vand.u32 %v1096, 2147483648
  %v1109 = vor.u32 1.1754944e-38, %v1108
  %v1110 = vsel %vm1107, %v1109, %v1105
  %v1111 = vmul.f32 1.0, %v1110
  %v1112 = vmul.f32 %v1111, 2.0
  %v1113 = vsub.f32 %v1112, 1.0
  %v1114 = vsel %vm78, %v1113, %v1111
  %v1115 = vmul.f32 %v1114, %v989
  %1117 = vrot.lane.b32.xlu0 %v1114, 64
  %v1118 = vpop.permute.xlu0 %1117
  %v1120 = vmul.f32 %v1114, %v1118
  %1122 = vrot.lane.b32.xlu0 %v1120, 32
  %v1123 = vpop.permute.xlu0 %1122
  %v1125 = vadd.f32 %v1115, %v1123
  %v1126 = vtanh.pop %v1125
  %1128 = vrot.lane.b32.xlu0 %v1126, 64
  %v1129 = vpop.permute.xlu0 %1128
  %v1131 = vmul.f32 %v1114, %v1129
  %1133 = vrot.lane.b32.xlu0 %v1131, 32
  %v1134 = vpop.permute.xlu0 %1133
  %1136 = vst.msk [vmem:[#allocation4 + $0x30] sm:$0xff] %vm254, %v1134
  %v1137 = vld [vmem:[#allocation3 + $0x8] sm:$0xff]
  %v1138 = vsel %vm254, %v1066, 0
  %1140 = vmatpush.msra.mxu0 0.0
  %1141 = vmatpush.msra.mxu0 0.0
  %1142 = vmatpush.msra.mxu0 0.0
  %1143 = vmatpush.msra.mxu0 0.0
  %1144 = vmatpush.msra.mxu0 0.0
  %1145 = vmatpush.msra.mxu0 0.0
  %1146 = vmatpush.msra.mxu0 0.0
  %1147 = vmatpush.msra.mxu0 0.0
  %1148 = vmatpush.msra.mxu0 0.0
  %1149 = vmatpush.msra.mxu0 0.0
  %1150 = vmatpush.msra.mxu0 0.0
  %1151 = vmatpush.msra.mxu0 0.0
  %1152 = vmatpush.msra.mxu0 %v252
  %1153 = vmatpush.msra.mxu0 %v251
  %1154 = vmatpush.msra.mxu0 %v250
  %1155 = vmatpush.msra.mxu0 %v249
  %1156 = vmatmul.f32.gmra.mxu0 %v1138
  %v1157 = vpop.f32.mrf.mxu0
  %v1158 = vadd.f32 0.0, %v1157
  %1159 = vdwg.mxu0
  %v1160 = vadd.f32 %v1137, %v1158
  %v1161 = vxor.u32 %v1160, 2147483648
  %v1162 = vmul.f32 %v1161, 1.442695
  %v1163 = vpow.pop %v1162
  %v1164 = vadd.f32 %v1163, 1.0
  %v1165 = vrcp.pop %v1164
  %v1166 = vmul.f32 %v1164, %v1165
  %v1167 = vsub.f32 1.0, %v1166
  %v1168 = vmul.f32 %v1165, %v1167
  %v1169 = vadd.f32 %v1165, %v1168
  %vm1170 = vweird.f32 %v1164
  %vm1171 = vweird.f32 %v1165
  %vm1172 = vmor %vm1170, %vm1171
  %v1173 = vsel %vm1172, %v1165, %v1169
  %v1174 = vand.u32 2147483647, %v1164
  %vm1175 = vcmp.eq.f32.partialorder %v1174, 8.507059e+37
  %v1176 = vand.u32 %v1164, 2147483648
  %v1177 = vor.u32 1.1754944e-38, %v1176
  %v1178 = vsel %vm1175, %v1177, %v1173
  %v1179 = vmul.f32 1.0, %v1178
  %v1180 = vmul.f32 %v1179, 2.0
  %v1181 = vsub.f32 %v1180, 1.0
  %v1182 = vsel %vm78, %v1181, %v1179
  %v1183 = vmul.f32 %v1182, %v1057
  %1185 = vrot.lane.b32.xlu0 %v1182, 64
  %v1186 = vpop.permute.xlu0 %1185
  %v1188 = vmul.f32 %v1182, %v1186
  %1190 = vrot.lane.b32.xlu0 %v1188, 32
  %v1191 = vpop.permute.xlu0 %1190
  %v1193 = vadd.f32 %v1183, %v1191
  %v1194 = vtanh.pop %v1193
  %1196 = vrot.lane.b32.xlu0 %v1194, 64
  %v1197 = vpop.permute.xlu0 %1196
  %v1199 = vmul.f32 %v1182, %v1197
  %1201 = vrot.lane.b32.xlu0 %v1199, 32
  %v1202 = vpop.permute.xlu0 %1201
  %1204 = vst.msk [vmem:[#allocation5 + $0x8] sm:$0xff] %vm254, %v1202
  %v1205 = vld [vmem:[#allocation2 + $0x38] sm:$0xff]
  %v1206 = vsel %vm254, %v1134, 0
  %1208 = vmatpush.msra.mxu0 0.0
  %1209 = vmatpush.msra.mxu0 0.0
  %1210 = vmatpush.msra.mxu0 0.0
  %1211 = vmatpush.msra.mxu0 0.0
  %1212 = vmatpush.msra.mxu0 0.0
  %1213 = vmatpush.msra.mxu0 0.0
  %1214 = vmatpush.msra.mxu0 0.0
  %1215 = vmatpush.msra.mxu0 0.0
  %1216 = vmatpush.msra.mxu0 0.0
  %1217 = vmatpush.msra.mxu0 0.0
  %1218 = vmatpush.msra.mxu0 0.0
  %1219 = vmatpush.msra.mxu0 0.0
  %1220 = vmatpush.msra.mxu0 %v244
  %1221 = vmatpush.msra.mxu0 %v243
  %1222 = vmatpush.msra.mxu0 %v242
  %1223 = vmatpush.msra.mxu0 %v241
  %1224 = vmatmul.f32.gmra.mxu0 %v1206
  %v1225 = vpop.f32.mrf.mxu0
  %v1226 = vadd.f32 0.0, %v1225
  %1227 = vdwg.mxu0
  %v1228 = vadd.f32 %v1205, %v1226
  %v1229 = vxor.u32 %v1228, 2147483648
  %v1230 = vmul.f32 %v1229, 1.442695
  %v1231 = vpow.pop %v1230
  %v1232 = vadd.f32 %v1231, 1.0
  %v1233 = vrcp.pop %v1232
  %v1234 = vmul.f32 %v1232, %v1233
  %v1235 = vsub.f32 1.0, %v1234
  %v1236 = vmul.f32 %v1233, %v1235
  %v1237 = vadd.f32 %v1233, %v1236
  %vm1238 = vweird.f32 %v1232
  %vm1239 = vweird.f32 %v1233
  %vm1240 = vmor %vm1238, %vm1239
  %v1241 = vsel %vm1240, %v1233, %v1237
  %v1242 = vand.u32 2147483647, %v1232
  %vm1243 = vcmp.eq.f32.partialorder %v1242, 8.507059e+37
  %v1244 = vand.u32 %v1232, 2147483648
  %v1245 = vor.u32 1.1754944e-38, %v1244
  %v1246 = vsel %vm1243, %v1245, %v1241
  %v1247 = vmul.f32 1.0, %v1246
  %v1248 = vmul.f32 %v1247, 2.0
  %v1249 = vsub.f32 %v1248, 1.0
  %v1250 = vsel %vm78, %v1249, %v1247
  %v1251 = vmul.f32 %v1250, %v1125
  %1253 = vrot.lane.b32.xlu0 %v1250, 64
  %v1254 = vpop.permute.xlu0 %1253
  %v1256 = vmul.f32 %v1250, %v1254
  %1258 = vrot.lane.b32.xlu0 %v1256, 32
  %v1259 = vpop.permute.xlu0 %1258
  %v1261 = vadd.f32 %v1251, %v1259
  %v1262 = vtanh.pop %v1261
  %1264 = vrot.lane.b32.xlu0 %v1262, 64
  %v1265 = vpop.permute.xlu0 %1264
  %v1267 = vmul.f32 %v1250, %v1265
  %1269 = vrot.lane.b32.xlu0 %v1267, 32
  %v1270 = vpop.permute.xlu0 %1269
  %1272 = vst.msk [vmem:[#allocation4 + $0x38] sm:$0xff] %vm254, %v1270
  %v1273 = vld [vmem:[#allocation3] sm:$0xff]
  %v1274 = vsel %vm254, %v1202, 0
  %1276 = vmatpush.msra.mxu0 0.0
  %1277 = vmatpush.msra.mxu0 0.0
  %1278 = vmatpush.msra.mxu0 0.0
  %1279 = vmatpush.msra.mxu0 0.0
  %1280 = vmatpush.msra.mxu0 0.0
  %1281 = vmatpush.msra.mxu0 0.0
  %1282 = vmatpush.msra.mxu0 0.0
  %1283 = vmatpush.msra.mxu0 0.0
  %1284 = vmatpush.msra.mxu0 0.0
  %1285 = vmatpush.msra.mxu0 0.0
  %1286 = vmatpush.msra.mxu0 0.0
  %1287 = vmatpush.msra.mxu0 0.0
  %1288 = vmatpush.msra.mxu0 %v252
  %1289 = vmatpush.msra.mxu0 %v251
  %1290 = vmatpush.msra.mxu0 %v250
  %1291 = vmatpush.msra.mxu0 %v249
  %1292 = vmatmul.f32.gmra.mxu0 %v1274
  %v1293 = vpop.f32.mrf.mxu0
  %v1294 = vadd.f32 0.0, %v1293
  %1295 = vdwg.mxu0
  %v1296 = vadd.f32 %v1273, %v1294
  %v1297 = vxor.u32 %v1296, 2147483648
  %v1298 = vmul.f32 %v1297, 1.442695
  %v1299 = vpow.pop %v1298
  %v1300 = vadd.f32 %v1299, 1.0
  %v1301 = vrcp.pop %v1300
  %v1302 = vmul.f32 %v1300, %v1301
  %v1303 = vsub.f32 1.0, %v1302
  %v1304 = vmul.f32 %v1301, %v1303
  %v1305 = vadd.f32 %v1301, %v1304
  %vm1306 = vweird.f32 %v1300
  %vm1307 = vweird.f32 %v1301
  %vm1308 = vmor %vm1306, %vm1307
  %v1309 = vsel %vm1308, %v1301, %v1305
  %v1310 = vand.u32 2147483647, %v1300
  %vm1311 = vcmp.eq.f32.partialorder %v1310, 8.507059e+37
  %v1312 = vand.u32 %v1300, 2147483648
  %v1313 = vor.u32 1.1754944e-38, %v1312
  %v1314 = vsel %vm1311, %v1313, %v1309
  %v1315 = vmul.f32 1.0, %v1314
  %v1316 = vmul.f32 %v1315, 2.0
  %v1317 = vsub.f32 %v1316, 1.0
  %v1318 = vsel %vm78, %v1317, %v1315
  %v1319 = vmul.f32 %v1318, %v1193
  %1321 = vrot.lane.b32.xlu0 %v1318, 64
  %v1322 = vpop.permute.xlu0 %1321
  %v1324 = vmul.f32 %v1318, %v1322
  %1326 = vrot.lane.b32.xlu0 %v1324, 32
  %v1327 = vpop.permute.xlu0 %1326
  %v1329 = vadd.f32 %v1319, %v1327
  %v1330 = vtanh.pop %v1329
  %1332 = vrot.lane.b32.xlu0 %v1330, 64
  %v1333 = vpop.permute.xlu0 %1332
  %v1335 = vmul.f32 %v1318, %v1333
  %1337 = vrot.lane.b32.xlu0 %v1335, 32
  %v1338 = vpop.permute.xlu0 %1337
  %1340 = vst.msk [vmem:[#allocation5] sm:$0xff] %vm254, %v1338
  %v1341 = vld [vmem:[#allocation4] sm:$0xff]
  %v1342 = vld [vmem:[#allocation4 + $0x8] sm:$0xff]
  %v1343 = vld [vmem:[#allocation4 + $0x10] sm:$0xff]
  %v1344 = vld [vmem:[#allocation4 + $0x18] sm:$0xff]
  %v1345 = vld [vmem:[#allocation4 + $0x20] sm:$0xff]
  %v1346 = vld [vmem:[#allocation4 + $0x28] sm:$0xff]
  %v1347 = vld [vmem:[#allocation4 + $0x30] sm:$0xff]
  %v1348 = vld [vmem:[#allocation4 + $0x38] sm:$0xff]
  %v1349 = vld [vmem:[#allocation5] sm:$0xff]
  %v1350 = vld [vmem:[#allocation5 + $0x8] sm:$0xff]
  %v1351 = vld [vmem:[#allocation5 + $0x10] sm:$0xff]
  %v1352 = vld [vmem:[#allocation5 + $0x18] sm:$0xff]
  %v1353 = vld [vmem:[#allocation5 + $0x20] sm:$0xff]
  %v1354 = vld [vmem:[#allocation5 + $0x28] sm:$0xff]
  %v1355 = vld [vmem:[#allocation5 + $0x30] sm:$0xff]
  %v1356 = vld [vmem:[#allocation5 + $0x38] sm:$0xff]
  %v1357 = vld [vmem:[%s7] sm:$0xff]
  %v1358 = vld [vmem:[%s7 + $0x8] sm:$0xff]
  %v1359 = vld [vmem:[%s7 + $0x10] sm:$0xff]
  %v1360 = vld [vmem:[%s7 + $0x18] sm:$0xff]
  %v1361 = vld [vmem:[%s8] sm:$0xff]
  %v1362 = vld [vmem:[%s8 + $0x8] sm:$0xff]
  %v1363 = vld [vmem:[%s8 + $0x10] sm:$0xff]
  %v1364 = vld [vmem:[%s8 + $0x18] sm:$0xff]
  %v1366 = vsel %vm254, %v1349, 0
  %v1369 = vsel %vm254, %v1350, 0
  %v1372 = vsel %vm254, %v1351, 0
  %v1375 = vsel %vm254, %v1352, 0
  %v1378 = vsel %vm254, %v1353, 0
  %v1381 = vsel %vm254, %v1354, 0
  %v1384 = vsel %vm254, %v1355, 0
  %v1387 = vsel %vm254, %v1356, 0
  %1389 = vmatpush.msra.mxu0 0.0
  %1390 = vmatpush.msra.mxu0 0.0
  %1391 = vmatpush.msra.mxu0 0.0
  %1392 = vmatpush.msra.mxu0 0.0
  %1393 = vmatpush.msra.mxu0 0.0
  %1394 = vmatpush.msra.mxu0 0.0
  %1395 = vmatpush.msra.mxu0 0.0
  %1396 = vmatpush.msra.mxu0 0.0
  %1397 = vmatpush.msra.mxu0 0.0
  %1398 = vmatpush.msra.mxu0 0.0
  %1399 = vmatpush.msra.mxu0 0.0
  %1400 = vmatpush.msra.mxu0 0.0
  %1401 = vmatpush.msra.mxu0 %v1364
  %1402 = vmatpush.msra.mxu0 %v1363
  %1403 = vmatpush.msra.mxu0 %v1362
  %1404 = vmatpush.msra.mxu0 %v1361
  %1405 = vmatmul.f32.gmra.mxu0 %v1366
  %v1406 = vpop.f32.mrf.mxu0
  %v1407 = vadd.f32 0.0, %v1406
  %1408 = vmatmul.f32.gmra.mxu0 %v1369
  %v1409 = vpop.f32.mrf.mxu0
  %v1410 = vadd.f32 0.0, %v1409
  %1411 = vmatmul.f32.gmra.mxu0 %v1372
  %v1412 = vpop.f32.mrf.mxu0
  %v1413 = vadd.f32 0.0, %v1412
  %1414 = vmatmul.f32.gmra.mxu0 %v1375
  %v1415 = vpop.f32.mrf.mxu0
  %v1416 = vadd.f32 0.0, %v1415
  %1417 = vmatmul.f32.gmra.mxu0 %v1378
  %v1418 = vpop.f32.mrf.mxu0
  %v1419 = vadd.f32 0.0, %v1418
  %1420 = vmatmul.f32.gmra.mxu0 %v1381
  %v1421 = vpop.f32.mrf.mxu0
  %v1422 = vadd.f32 0.0, %v1421
  %1423 = vmatmul.f32.gmra.mxu0 %v1384
  %v1424 = vpop.f32.mrf.mxu0
  %v1425 = vadd.f32 0.0, %v1424
  %1426 = vmatmul.f32.gmra.mxu0 %v1387
  %v1427 = vpop.f32.mrf.mxu0
  %v1428 = vadd.f32 0.0, %v1427
  %1429 = vdwg.mxu0
  %v1431 = vsel %vm254, %v1341, 0
  %v1434 = vsel %vm254, %v1342, 0
  %v1437 = vsel %vm254, %v1343, 0
  %v1440 = vsel %vm254, %v1344, 0
  %v1443 = vsel %vm254, %v1345, 0
  %v1446 = vsel %vm254, %v1346, 0
  %v1449 = vsel %vm254, %v1347, 0
  %v1452 = vsel %vm254, %v1348, 0
  %1454 = vmatpush.msra.mxu0 0.0
  %1455 = vmatpush.msra.mxu0 0.0
  %1456 = vmatpush.msra.mxu0 0.0
  %1457 = vmatpush.msra.mxu0 0.0
  %1458 = vmatpush.msra.mxu0 0.0
  %1459 = vmatpush.msra.mxu0 0.0
  %1460 = vmatpush.msra.mxu0 0.0
  %1461 = vmatpush.msra.mxu0 0.0
  %1462 = vmatpush.msra.mxu0 0.0
  %1463 = vmatpush.msra.mxu0 0.0
  %1464 = vmatpush.msra.mxu0 0.0
  %1465 = vmatpush.msra.mxu0 0.0
  %1466 = vmatpush.msra.mxu0 %v1360
  %1467 = vmatpush.msra.mxu0 %v1359
  %1468 = vmatpush.msra.mxu0 %v1358
  %1469 = vmatpush.msra.mxu0 %v1357
  %1470 = vmatmul.f32.gmra.mxu0 %v1431
  %v1471 = vpop.f32.mrf.mxu0
  %v1472 = vadd.f32 %v1407, %v1471
  %1473 = vmatmul.f32.gmra.mxu0 %v1434
  %v1474 = vpop.f32.mrf.mxu0
  %v1475 = vadd.f32 %v1410, %v1474
  %1476 = vmatmul.f32.gmra.mxu0 %v1437
  %v1477 = vpop.f32.mrf.mxu0
  %v1478 = vadd.f32 %v1413, %v1477
  %1479 = vmatmul.f32.gmra.mxu0 %v1440
  %v1480 = vpop.f32.mrf.mxu0
  %v1481 = vadd.f32 %v1416, %v1480
  %1482 = vmatmul.f32.gmra.mxu0 %v1443
  %v1483 = vpop.f32.mrf.mxu0
  %v1484 = vadd.f32 %v1419, %v1483
  %1485 = vmatmul.f32.gmra.mxu0 %v1446
  %v1486 = vpop.f32.mrf.mxu0
  %v1487 = vadd.f32 %v1422, %v1486
  %1488 = vmatmul.f32.gmra.mxu0 %v1449
  %v1489 = vpop.f32.mrf.mxu0
  %v1490 = vadd.f32 %v1425, %v1489
  %1491 = vmatmul.f32.gmra.mxu0 %v1452
  %v1492 = vpop.f32.mrf.mxu0
  %v1493 = vadd.f32 %v1428, %v1492
  %1494 = vdwg.mxu0
  %v1495 = vld [vmem:[%s10] sm:$0x1]
  %v1497 = vperm.slane %v1495, 0
  %v1499 = vadd.f32 %v1472, %v1497
  %v1500 = vadd.f32 %v1475, %v1497
  %v1501 = vadd.f32 %v1478, %v1497
  %v1502 = vadd.f32 %v1481, %v1497
  %v1503 = vadd.f32 %v1484, %v1497
  %v1504 = vadd.f32 %v1487, %v1497
  %v1505 = vadd.f32 %v1490, %v1497
  %v1506 = vadd.f32 %v1493, %v1497
  %v1507 = vmul.f32 %v1499, %v79
  %v1508 = vmul.f32 %v1500, %v79
  %v1509 = vmul.f32 %v1501, %v79
  %v1510 = vmul.f32 %v1502, %v79
  %v1511 = vmul.f32 %v1503, %v79
  %v1512 = vmul.f32 %v1504, %v79
  %v1513 = vmul.f32 %v1505, %v79
  %v1514 = vmul.f32 %v1506, %v79
  %1515 = vst [vmem:[#allocation2] sm:$0xff] %v1507
  %1516 = vst [vmem:[#allocation2 + $0x8] sm:$0xff] %v1508
  %1517 = vst [vmem:[#allocation2 + $0x10] sm:$0xff] %v1509
  %1518 = vst [vmem:[#allocation2 + $0x18] sm:$0xff] %v1510
  %1519 = vst [vmem:[#allocation2 + $0x20] sm:$0xff] %v1511
  %1520 = vst [vmem:[#allocation2 + $0x28] sm:$0xff] %v1512
  %1521 = vst [vmem:[#allocation2 + $0x30] sm:$0xff] %v1513
  %1522 = vst [vmem:[#allocation2 + $0x38] sm:$0xff] %v1514
  %v1523 = vld [vmem:[%s11] sm:$0xff]
  %v1524 = vld [vmem:[%s11 + $0x8] sm:$0xff]
  %v1525 = vld [vmem:[%s11 + $0x10] sm:$0xff]
  %v1526 = vld [vmem:[%s11 + $0x18] sm:$0xff]
  %v1527 = vld [vmem:[%s12] sm:$0xff]
  %v1528 = vld [vmem:[%s12 + $0x8] sm:$0xff]
  %v1529 = vld [vmem:[%s12 + $0x10] sm:$0xff]
  %v1530 = vld [vmem:[%s12 + $0x18] sm:$0xff]
  %1531 = vmatpush.msra.mxu0 0.0
  %1532 = vmatpush.msra.mxu0 0.0
  %1533 = vmatpush.msra.mxu0 0.0
  %1534 = vmatpush.msra.mxu0 0.0
  %1535 = vmatpush.msra.mxu0 0.0
  %1536 = vmatpush.msra.mxu0 0.0
  %1537 = vmatpush.msra.mxu0 0.0
  %1538 = vmatpush.msra.mxu0 0.0
  %1539 = vmatpush.msra.mxu0 0.0
  %1540 = vmatpush.msra.mxu0 0.0
  %1541 = vmatpush.msra.mxu0 0.0
  %1542 = vmatpush.msra.mxu0 0.0
  %1543 = vmatpush.msra.mxu0 %v1530
  %1544 = vmatpush.msra.mxu0 %v1529
  %1545 = vmatpush.msra.mxu0 %v1528
  %1546 = vmatpush.msra.mxu0 %v1527
  %1547 = vmatmul.f32.gmra.mxu0 %v1366
  %v1548 = vpop.f32.mrf.mxu0
  %v1549 = vadd.f32 0.0, %v1548
  %1550 = vmatmul.f32.gmra.mxu0 %v1369
  %v1551 = vpop.f32.mrf.mxu0
  %v1552 = vadd.f32 0.0, %v1551
  %1553 = vmatmul.f32.gmra.mxu0 %v1372
  %v1554 = vpop.f32.mrf.mxu0
  %v1555 = vadd.f32 0.0, %v1554
  %1556 = vmatmul.f32.gmra.mxu0 %v1375
  %v1557 = vpop.f32.mrf.mxu0
  %v1558 = vadd.f32 0.0, %v1557
  %1559 = vmatmul.f32.gmra.mxu0 %v1378
  %v1560 = vpop.f32.mrf.mxu0
  %v1561 = vadd.f32 0.0, %v1560
  %1562 = vmatmul.f32.gmra.mxu0 %v1381
  %v1563 = vpop.f32.mrf.mxu0
  %v1564 = vadd.f32 0.0, %v1563
  %1565 = vmatmul.f32.gmra.mxu0 %v1384
  %v1566 = vpop.f32.mrf.mxu0
  %v1567 = vadd.f32 0.0, %v1566
  %1568 = vmatmul.f32.gmra.mxu0 %v1387
  %v1569 = vpop.f32.mrf.mxu0
  %v1570 = vadd.f32 0.0, %v1569
  %1571 = vdwg.mxu0
  %1572 = vmatpush.msra.mxu0 0.0
  %1573 = vmatpush.msra.mxu0 0.0
  %1574 = vmatpush.msra.mxu0 0.0
  %1575 = vmatpush.msra.mxu0 0.0
  %1576 = vmatpush.msra.mxu0 0.0
  %1577 = vmatpush.msra.mxu0 0.0
  %1578 = vmatpush.msra.mxu0 0.0
  %1579 = vmatpush.msra.mxu0 0.0
  %1580 = vmatpush.msra.mxu0 0.0
  %1581 = vmatpush.msra.mxu0 0.0
  %1582 = vmatpush.msra.mxu0 0.0
  %1583 = vmatpush.msra.mxu0 0.0
  %1584 = vmatpush.msra.mxu0 %v1526
  %1585 = vmatpush.msra.mxu0 %v1525
  %1586 = vmatpush.msra.mxu0 %v1524
  %1587 = vmatpush.msra.mxu0 %v1523
  %1588 = vmatmul.f32.gmra.mxu0 %v1431
  %v1589 = vpop.f32.mrf.mxu0
  %v1590 = vadd.f32 %v1549, %v1589
  %1591 = vmatmul.f32.gmra.mxu0 %v1434
  %v1592 = vpop.f32.mrf.mxu0
  %v1593 = vadd.f32 %v1552, %v1592
  %1594 = vmatmul.f32.gmra.mxu0 %v1437
  %v1595 = vpop.f32.mrf.mxu0
  %v1596 = vadd.f32 %v1555, %v1595
  %1597 = vmatmul.f32.gmra.mxu0 %v1440
  %v1598 = vpop.f32.mrf.mxu0
  %v1599 = vadd.f32 %v1558, %v1598
  %1600 = vmatmul.f32.gmra.mxu0 %v1443
  %v1601 = vpop.f32.mrf.mxu0
  %v1602 = vadd.f32 %v1561, %v1601
  %1603 = vmatmul.f32.gmra.mxu0 %v1446
  %v1604 = vpop.f32.mrf.mxu0
  %v1605 = vadd.f32 %v1564, %v1604
  %1606 = vmatmul.f32.gmra.mxu0 %v1449
  %v1607 = vpop.f32.mrf.mxu0
  %v1608 = vadd.f32 %v1567, %v1607
  %1609 = vmatmul.f32.gmra.mxu0 %v1452
  %v1610 = vpop.f32.mrf.mxu0
  %v1611 = vadd.f32 %v1570, %v1610
  %1612 = vdwg.mxu0
  %v1613 = vld [vmem:[%s14] sm:$0x1]
  %v1615 = vperm.slane %v1613, 0
  %v1617 = vadd.f32 %v1590, %v1615
  %v1618 = vadd.f32 %v1593, %v1615
  %v1619 = vadd.f32 %v1596, %v1615
  %v1620 = vadd.f32 %v1599, %v1615
  %v1621 = vadd.f32 %v1602, %v1615
  %v1622 = vadd.f32 %v1605, %v1615
  %v1623 = vadd.f32 %v1608, %v1615
  %v1624 = vadd.f32 %v1611, %v1615
  %v1625 = vmul.f32 %v1617, %v79
  %v1626 = vmul.f32 %v1618, %v79
  %v1627 = vmul.f32 %v1619, %v79
  %v1628 = vmul.f32 %v1620, %v79
  %v1629 = vmul.f32 %v1621, %v79
  %v1630 = vmul.f32 %v1622, %v79
  %v1631 = vmul.f32 %v1623, %v79
  %v1632 = vmul.f32 %v1624, %v79
  %1633 = vst [vmem:[#allocation3] sm:$0xff] %v1625
  %1634 = vst [vmem:[#allocation3 + $0x8] sm:$0xff] %v1626
  %1635 = vst [vmem:[#allocation3 + $0x10] sm:$0xff] %v1627
  %1636 = vst [vmem:[#allocation3 + $0x18] sm:$0xff] %v1628
  %1637 = vst [vmem:[#allocation3 + $0x20] sm:$0xff] %v1629
  %1638 = vst [vmem:[#allocation3 + $0x28] sm:$0xff] %v1630
  %1639 = vst [vmem:[#allocation3 + $0x30] sm:$0xff] %v1631
  %1640 = vst [vmem:[#allocation3 + $0x38] sm:$0xff] %v1632
  %v1641 = vld [vmem:[%s9] sm:$0xff]
  %v1642 = vld [vmem:[%s9 + $0x8] sm:$0xff]
  %v1643 = vld [vmem:[%s9 + $0x10] sm:$0xff]
  %v1644 = vld [vmem:[%s9 + $0x18] sm:$0xff]
  %v1645 = vmul.f32 %v1641, %v79
  %v1646 = vmul.f32 %v1642, %v79
  %v1647 = vmul.f32 %v1643, %v79
  %v1648 = vmul.f32 %v1644, %v79
  %v1649 = vld [vmem:[%s13] sm:$0xff]
  %v1650 = vld [vmem:[%s13 + $0x8] sm:$0xff]
  %v1651 = vld [vmem:[%s13 + $0x10] sm:$0xff]
  %v1652 = vld [vmem:[%s13 + $0x18] sm:$0xff]
  %v1653 = vmul.f32 %v1649, %v79
  %v1654 = vmul.f32 %v1650, %v79
  %v1655 = vmul.f32 %v1651, %v79
  %v1656 = vmul.f32 %v1652, %v79
  %v1657 = vld [vmem:[#allocation2] sm:$0xff]
  %1658 = vmatpush.msra.mxu0 0.0
  %1659 = vmatpush.msra.mxu0 0.0
  %1660 = vmatpush.msra.mxu0 0.0
  %1661 = vmatpush.msra.mxu0 0.0
  %1662 = vmatpush.msra.mxu0 0.0
  %1663 = vmatpush.msra.mxu0 0.0
  %1664 = vmatpush.msra.mxu0 0.0
  %1665 = vmatpush.msra.mxu0 0.0
  %1666 = vmatpush.msra.mxu0 0.0
  %1667 = vmatpush.msra.mxu0 0.0
  %1668 = vmatpush.msra.mxu0 0.0
  %1669 = vmatpush.msra.mxu0 0.0
  %1670 = vmatpush.msra.mxu0 %v1648
  %1671 = vmatpush.msra.mxu0 %v1647
  %1672 = vmatpush.msra.mxu0 %v1646
  %1673 = vmatpush.msra.mxu0 %v1645
  %1674 = vmatmul.f32.gmra.mxu0 %v256
  %v1675 = vpop.f32.mrf.mxu0
  %v1676 = vadd.f32 0.0, %v1675
  %1677 = vdwg.mxu0
  %v1678 = vadd.f32 %v1657, %v1676
  %v1679 = vxor.u32 %v1678, 2147483648
  %v1680 = vmul.f32 %v1679, 1.442695
  %v1681 = vpow.pop %v1680
  %v1682 = vadd.f32 %v1681, 1.0
  %v1683 = vrcp.pop %v1682
  %v1684 = vmul.f32 %v1682, %v1683
  %v1685 = vsub.f32 1.0, %v1684
  %v1686 = vmul.f32 %v1683, %v1685
  %v1687 = vadd.f32 %v1683, %v1686
  %vm1688 = vweird.f32 %v1682
  %vm1689 = vweird.f32 %v1683
  %vm1690 = vmor %vm1688, %vm1689
  %v1691 = vsel %vm1690, %v1683, %v1687
  %v1692 = vand.u32 2147483647, %v1682
  %vm1693 = vcmp.eq.f32.partialorder %v1692, 8.507059e+37
  %v1694 = vand.u32 %v1682, 2147483648
  %v1695 = vor.u32 1.1754944e-38, %v1694
  %v1696 = vsel %vm1693, %v1695, %v1691
  %v1697 = vmul.f32 1.0, %v1696
  %v1698 = vmul.f32 %v1697, 2.0
  %v1699 = vsub.f32 %v1698, 1.0
  %v1700 = vsel %vm78, %v1699, %v1697
  %v1701 = vmul.f32 %v1700, 0.0
  %1703 = vrot.lane.b32.xlu0 %v1700, 64
  %v1704 = vpop.permute.xlu0 %1703
  %v1706 = vmul.f32 %v1700, %v1704
  %1708 = vrot.lane.b32.xlu0 %v1706, 32
  %v1709 = vpop.permute.xlu0 %1708
  %v1711 = vadd.f32 %v1701, %v1709
  %v1712 = vtanh.pop %v1711
  %1714 = vrot.lane.b32.xlu0 %v1712, 64
  %v1715 = vpop.permute.xlu0 %1714
  %v1717 = vmul.f32 %v1700, %v1715
  %v1718 = vld [vmem:[#allocation3 + $0x38] sm:$0xff]
  %1719 = vmatpush.msra.mxu0 0.0
  %1720 = vmatpush.msra.mxu0 0.0
  %1721 = vmatpush.msra.mxu0 0.0
  %1722 = vmatpush.msra.mxu0 0.0
  %1723 = vmatpush.msra.mxu0 0.0
  %1724 = vmatpush.msra.mxu0 0.0
  %1725 = vmatpush.msra.mxu0 0.0
  %1726 = vmatpush.msra.mxu0 0.0
  %1727 = vmatpush.msra.mxu0 0.0
  %1728 = vmatpush.msra.mxu0 0.0
  %1729 = vmatpush.msra.mxu0 0.0
  %1730 = vmatpush.msra.mxu0 0.0
  %1731 = vmatpush.msra.mxu0 %v1656
  %1732 = vmatpush.msra.mxu0 %v1655
  %1733 = vmatpush.msra.mxu0 %v1654
  %1734 = vmatpush.msra.mxu0 %v1653
  %1735 = vmatmul.f32.gmra.mxu0 %v256
  %v1736 = vpop.f32.mrf.mxu0
  %v1737 = vadd.f32 0.0, %v1736
  %1738 = vdwg.mxu0
  %v1739 = vadd.f32 %v1718, %v1737
  %v1740 = vxor.u32 %v1739, 2147483648
  %v1741 = vmul.f32 %v1740, 1.442695
  %v1742 = vpow.pop %v1741
  %v1743 = vadd.f32 %v1742, 1.0
  %v1744 = vrcp.pop %v1743
  %v1745 = vmul.f32 %v1743, %v1744
  %v1746 = vsub.f32 1.0, %v1745
  %v1747 = vmul.f32 %v1744, %v1746
  %v1748 = vadd.f32 %v1744, %v1747
  %vm1749 = vweird.f32 %v1743
  %vm1750 = vweird.f32 %v1744
  %vm1751 = vmor %vm1749, %vm1750
  %v1752 = vsel %vm1751, %v1744, %v1748
  %v1753 = vand.u32 2147483647, %v1743
  %vm1754 = vcmp.eq.f32.partialorder %v1753, 8.507059e+37
  %v1755 = vand.u32 %v1743, 2147483648
  %v1756 = vor.u32 1.1754944e-38, %v1755
  %v1757 = vsel %vm1754, %v1756, %v1752
  %v1758 = vmul.f32 1.0, %v1757
  %v1759 = vmul.f32 %v1758, 2.0
  %v1760 = vsub.f32 %v1759, 1.0
  %v1761 = vsel %vm78, %v1760, %v1758
  %v1762 = vmul.f32 %v1761, 0.0
  %1764 = vrot.lane.b32.xlu0 %v1761, 64
  %v1765 = vpop.permute.xlu0 %1764
  %v1767 = vmul.f32 %v1761, %v1765
  %1769 = vrot.lane.b32.xlu0 %v1767, 32
  %v1770 = vpop.permute.xlu0 %1769
  %v1772 = vadd.f32 %v1762, %v1770
  %v1773 = vtanh.pop %v1772
  %1775 = vrot.lane.b32.xlu0 %v1773, 64
  %v1776 = vpop.permute.xlu0 %1775
  %v1778 = vmul.f32 %v1761, %v1776
  %v1779 = vld [vmem:[#allocation2 + $0x8] sm:$0xff]
  %1781 = vrot.lane.b32.xlu0 %v1717, 32
  %v1782 = vpop.permute.xlu0 %1781
  %v1783 = vsel %vm254, %v1782, 0
  %1785 = vmatpush.msra.mxu0 0.0
  %1786 = vmatpush.msra.mxu0 0.0
  %1787 = vmatpush.msra.mxu0 0.0
  %1788 = vmatpush.msra.mxu0 0.0
  %1789 = vmatpush.msra.mxu0 0.0
  %1790 = vmatpush.msra.mxu0 0.0
  %1791 = vmatpush.msra.mxu0 0.0
  %1792 = vmatpush.msra.mxu0 0.0
  %1793 = vmatpush.msra.mxu0 0.0
  %1794 = vmatpush.msra.mxu0 0.0
  %1795 = vmatpush.msra.mxu0 0.0
  %1796 = vmatpush.msra.mxu0 0.0
  %1797 = vmatpush.msra.mxu0 %v1648
  %1798 = vmatpush.msra.mxu0 %v1647
  %1799 = vmatpush.msra.mxu0 %v1646
  %1800 = vmatpush.msra.mxu0 %v1645
  %1801 = vmatmul.f32.gmra.mxu0 %v1783
  %v1802 = vpop.f32.mrf.mxu0
  %v1803 = vadd.f32 0.0, %v1802
  %1804 = vdwg.mxu0
  %v1805 = vadd.f32 %v1779, %v1803
  %v1806 = vxor.u32 %v1805, 2147483648
  %v1807 = vmul.f32 %v1806, 1.442695
  %v1808 = vpow.pop %v1807
  %v1809 = vadd.f32 %v1808, 1.0
  %v1810 = vrcp.pop %v1809
  %v1811 = vmul.f32 %v1809, %v1810
  %v1812 = vsub.f32 1.0, %v1811
  %v1813 = vmul.f32 %v1810, %v1812
  %v1814 = vadd.f32 %v1810, %v1813
  %vm1815 = vweird.f32 %v1809
  %vm1816 = vweird.f32 %v1810
  %vm1817 = vmor %vm1815, %vm1816
  %v1818 = vsel %vm1817, %v1810, %v1814
  %v1819 = vand.u32 2147483647, %v1809
  %vm1820 = vcmp.eq.f32.partialorder %v1819, 8.507059e+37
  %v1821 = vand.u32 %v1809, 2147483648
  %v1822 = vor.u32 1.1754944e-38, %v1821
  %v1823 = vsel %vm1820, %v1822, %v1818
  %v1824 = vmul.f32 1.0, %v1823
  %v1825 = vmul.f32 %v1824, 2.0
  %v1826 = vsub.f32 %v1825, 1.0
  %v1827 = vsel %vm78, %v1826, %v1824
  %v1828 = vmul.f32 %v1827, %v1711
  %1830 = vrot.lane.b32.xlu0 %v1827, 64
  %v1831 = vpop.permute.xlu0 %1830
  %v1833 = vmul.f32 %v1827, %v1831
  %1835 = vrot.lane.b32.xlu0 %v1833, 32
  %v1836 = vpop.permute.xlu0 %1835
  %v1838 = vadd.f32 %v1828, %v1836
  %v1839 = vtanh.pop %v1838
  %1841 = vrot.lane.b32.xlu0 %v1839, 64
  %v1842 = vpop.permute.xlu0 %1841
  %v1844 = vmul.f32 %v1827, %v1842
  %v1845 = vld [vmem:[#allocation3 + $0x30] sm:$0xff]
  %1847 = vrot.lane.b32.xlu0 %v1778, 32
  %v1848 = vpop.permute.xlu0 %1847
  %v1849 = vsel %vm254, %v1848, 0
  %1851 = vmatpush.msra.mxu0 0.0
  %1852 = vmatpush.msra.mxu0 0.0
  %1853 = vmatpush.msra.mxu0 0.0
  %1854 = vmatpush.msra.mxu0 0.0
  %1855 = vmatpush.msra.mxu0 0.0
  %1856 = vmatpush.msra.mxu0 0.0
  %1857 = vmatpush.msra.mxu0 0.0
  %1858 = vmatpush.msra.mxu0 0.0
  %1859 = vmatpush.msra.mxu0 0.0
  %1860 = vmatpush.msra.mxu0 0.0
  %1861 = vmatpush.msra.mxu0 0.0
  %1862 = vmatpush.msra.mxu0 0.0
  %1863 = vmatpush.msra.mxu0 %v1656
  %1864 = vmatpush.msra.mxu0 %v1655
  %1865 = vmatpush.msra.mxu0 %v1654
  %1866 = vmatpush.msra.mxu0 %v1653
  %1867 = vmatmul.f32.gmra.mxu0 %v1849
  %v1868 = vpop.f32.mrf.mxu0
  %v1869 = vadd.f32 0.0, %v1868
  %1870 = vdwg.mxu0
  %v1871 = vadd.f32 %v1845, %v1869
  %v1872 = vxor.u32 %v1871, 2147483648
  %v1873 = vmul.f32 %v1872, 1.442695
  %v1874 = vpow.pop %v1873
  %v1875 = vadd.f32 %v1874, 1.0
  %v1876 = vrcp.pop %v1875
  %v1877 = vmul.f32 %v1875, %v1876
  %v1878 = vsub.f32 1.0, %v1877
  %v1879 = vmul.f32 %v1876, %v1878
  %v1880 = vadd.f32 %v1876, %v1879
  %vm1881 = vweird.f32 %v1875
  %vm1882 = vweird.f32 %v1876
  %vm1883 = vmor %vm1881, %vm1882
  %v1884 = vsel %vm1883, %v1876, %v1880
  %v1885 = vand.u32 2147483647, %v1875
  %vm1886 = vcmp.eq.f32.partialorder %v1885, 8.507059e+37
  %v1887 = vand.u32 %v1875, 2147483648
  %v1888 = vor.u32 1.1754944e-38, %v1887
  %v1889 = vsel %vm1886, %v1888, %v1884
  %v1890 = vmul.f32 1.0, %v1889
  %v1891 = vmul.f32 %v1890, 2.0
  %v1892 = vsub.f32 %v1891, 1.0
  %v1893 = vsel %vm78, %v1892, %v1890
  %v1894 = vmul.f32 %v1893, %v1772
  %1896 = vrot.lane.b32.xlu0 %v1893, 64
  %v1897 = vpop.permute.xlu0 %1896
  %v1899 = vmul.f32 %v1893, %v1897
  %1901 = vrot.lane.b32.xlu0 %v1899, 32
  %v1902 = vpop.permute.xlu0 %1901
  %v1904 = vadd.f32 %v1894, %v1902
  %v1905 = vtanh.pop %v1904
  %1907 = vrot.lane.b32.xlu0 %v1905, 64
  %v1908 = vpop.permute.xlu0 %1907
  %v1910 = vmul.f32 %v1893, %v1908
  %v1911 = vld [vmem:[#allocation2 + $0x10] sm:$0xff]
  %1913 = vrot.lane.b32.xlu0 %v1844, 32
  %v1914 = vpop.permute.xlu0 %1913
  %v1915 = vsel %vm254, %v1914, 0
  %1917 = vmatpush.msra.mxu0 0.0
  %1918 = vmatpush.msra.mxu0 0.0
  %1919 = vmatpush.msra.mxu0 0.0
  %1920 = vmatpush.msra.mxu0 0.0
  %1921 = vmatpush.msra.mxu0 0.0
  %1922 = vmatpush.msra.mxu0 0.0
  %1923 = vmatpush.msra.mxu0 0.0
  %1924 = vmatpush.msra.mxu0 0.0
  %1925 = vmatpush.msra.mxu0 0.0
  %1926 = vmatpush.msra.mxu0 0.0
  %1927 = vmatpush.msra.mxu0 0.0
  %1928 = vmatpush.msra.mxu0 0.0
  %1929 = vmatpush.msra.mxu0 %v1648
  %1930 = vmatpush.msra.mxu0 %v1647
  %1931 = vmatpush.msra.mxu0 %v1646
  %1932 = vmatpush.msra.mxu0 %v1645
  %1933 = vmatmul.f32.gmra.mxu0 %v1915
  %v1934 = vpop.f32.mrf.mxu0
  %v1935 = vadd.f32 0.0, %v1934
  %1936 = vdwg.mxu0
  %v1937 = vadd.f32 %v1911, %v1935
  %v1938 = vxor.u32 %v1937, 2147483648
  %v1939 = vmul.f32 %v1938, 1.442695
  %v1940 = vpow.pop %v1939
  %v1941 = vadd.f32 %v1940, 1.0
  %v1942 = vrcp.pop %v1941
  %v1943 = vmul.f32 %v1941, %v1942
  %v1944 = vsub.f32 1.0, %v1943
  %v1945 = vmul.f32 %v1942, %v1944
  %v1946 = vadd.f32 %v1942, %v1945
  %vm1947 = vweird.f32 %v1941
  %vm1948 = vweird.f32 %v1942
  %vm1949 = vmor %vm1947, %vm1948
  %v1950 = vsel %vm1949, %v1942, %v1946
  %v1951 = vand.u32 2147483647, %v1941
  %vm1952 = vcmp.eq.f32.partialorder %v1951, 8.507059e+37
  %v1953 = vand.u32 %v1941, 2147483648
  %v1954 = vor.u32 1.1754944e-38, %v1953
  %v1955 = vsel %vm1952, %v1954, %v1950
  %v1956 = vmul.f32 1.0, %v1955
  %v1957 = vmul.f32 %v1956, 2.0
  %v1958 = vsub.f32 %v1957, 1.0
  %v1959 = vsel %vm78, %v1958, %v1956
  %v1960 = vmul.f32 %v1959, %v1838
  %1962 = vrot.lane.b32.xlu0 %v1959, 64
  %v1963 = vpop.permute.xlu0 %1962
  %v1965 = vmul.f32 %v1959, %v1963
  %1967 = vrot.lane.b32.xlu0 %v1965, 32
  %v1968 = vpop.permute.xlu0 %1967
  %v1970 = vadd.f32 %v1960, %v1968
  %v1971 = vtanh.pop %v1970
  %1973 = vrot.lane.b32.xlu0 %v1971, 64
  %v1974 = vpop.permute.xlu0 %1973
  %v1976 = vmul.f32 %v1959, %v1974
  %v1977 = vld [vmem:[#allocation3 + $0x28] sm:$0xff]
  %1979 = vrot.lane.b32.xlu0 %v1910, 32
  %v1980 = vpop.permute.xlu0 %1979
  %v1981 = vsel %vm254, %v1980, 0
  %1983 = vmatpush.msra.mxu0 0.0
  %1984 = vmatpush.msra.mxu0 0.0
  %1985 = vmatpush.msra.mxu0 0.0
  %1986 = vmatpush.msra.mxu0 0.0
  %1987 = vmatpush.msra.mxu0 0.0
  %1988 = vmatpush.msra.mxu0 0.0
  %1989 = vmatpush.msra.mxu0 0.0
  %1990 = vmatpush.msra.mxu0 0.0
  %1991 = vmatpush.msra.mxu0 0.0
  %1992 = vmatpush.msra.mxu0 0.0
  %1993 = vmatpush.msra.mxu0 0.0
  %1994 = vmatpush.msra.mxu0 0.0
  %1995 = vmatpush.msra.mxu0 %v1656
  %1996 = vmatpush.msra.mxu0 %v1655
  %1997 = vmatpush.msra.mxu0 %v1654
  %1998 = vmatpush.msra.mxu0 %v1653
  %1999 = vmatmul.f32.gmra.mxu0 %v1981
  %v2000 = vpop.f32.mrf.mxu0
  %v2001 = vadd.f32 0.0, %v2000
  %2002 = vdwg.mxu0
  %v2003 = vadd.f32 %v1977, %v2001
  %v2004 = vxor.u32 %v2003, 2147483648
  %v2005 = vmul.f32 %v2004, 1.442695
  %v2006 = vpow.pop %v2005
  %v2007 = vadd.f32 %v2006, 1.0
  %v2008 = vrcp.pop %v2007
  %v2009 = vmul.f32 %v2007, %v2008
  %v2010 = vsub.f32 1.0, %v2009
  %v2011 = vmul.f32 %v2008, %v2010
  %v2012 = vadd.f32 %v2008, %v2011
  %vm2013 = vweird.f32 %v2007
  %vm2014 = vweird.f32 %v2008
  %vm2015 = vmor %vm2013, %vm2014
  %v2016 = vsel %vm2015, %v2008, %v2012
  %v2017 = vand.u32 2147483647, %v2007
  %vm2018 = vcmp.eq.f32.partialorder %v2017, 8.507059e+37
  %v2019 = vand.u32 %v2007, 2147483648
  %v2020 = vor.u32 1.1754944e-38, %v2019
  %v2021 = vsel %vm2018, %v2020, %v2016
  %v2022 = vmul.f32 1.0, %v2021
  %v2023 = vmul.f32 %v2022, 2.0
  %v2024 = vsub.f32 %v2023, 1.0
  %v2025 = vsel %vm78, %v2024, %v2022
  %v2026 = vmul.f32 %v2025, %v1904
  %2028 = vrot.lane.b32.xlu0 %v2025, 64
  %v2029 = vpop.permute.xlu0 %2028
  %v2031 = vmul.f32 %v2025, %v2029
  %2033 = vrot.lane.b32.xlu0 %v2031, 32
  %v2034 = vpop.permute.xlu0 %2033
  %v2036 = vadd.f32 %v2026, %v2034
  %v2037 = vtanh.pop %v2036
  %2039 = vrot.lane.b32.xlu0 %v2037, 64
  %v2040 = vpop.permute.xlu0 %2039
  %v2042 = vmul.f32 %v2025, %v2040
  %v2043 = vld [vmem:[#allocation2 + $0x18] sm:$0xff]
  %2045 = vrot.lane.b32.xlu0 %v1976, 32
  %v2046 = vpop.permute.xlu0 %2045
  %v2047 = vsel %vm254, %v2046, 0
  %2049 = vmatpush.msra.mxu0 0.0
  %2050 = vmatpush.msra.mxu0 0.0
  %2051 = vmatpush.msra.mxu0 0.0
  %2052 = vmatpush.msra.mxu0 0.0
  %2053 = vmatpush.msra.mxu0 0.0
  %2054 = vmatpush.msra.mxu0 0.0
  %2055 = vmatpush.msra.mxu0 0.0
  %2056 = vmatpush.msra.mxu0 0.0
  %2057 = vmatpush.msra.mxu0 0.0
  %2058 = vmatpush.msra.mxu0 0.0
  %2059 = vmatpush.msra.mxu0 0.0
  %2060 = vmatpush.msra.mxu0 0.0
  %2061 = vmatpush.msra.mxu0 %v1648
  %2062 = vmatpush.msra.mxu0 %v1647
  %2063 = vmatpush.msra.mxu0 %v1646
  %2064 = vmatpush.msra.mxu0 %v1645
  %2065 = vmatmul.f32.gmra.mxu0 %v2047
  %v2066 = vpop.f32.mrf.mxu0
  %v2067 = vadd.f32 0.0, %v2066
  %2068 = vdwg.mxu0
  %v2069 = vadd.f32 %v2043, %v2067
  %v2070 = vxor.u32 %v2069, 2147483648
  %v2071 = vmul.f32 %v2070, 1.442695
  %v2072 = vpow.pop %v2071
  %v2073 = vadd.f32 %v2072, 1.0
  %v2074 = vrcp.pop %v2073
  %v2075 = vmul.f32 %v2073, %v2074
  %v2076 = vsub.f32 1.0, %v2075
  %v2077 = vmul.f32 %v2074, %v2076
  %v2078 = vadd.f32 %v2074, %v2077
  %vm2079 = vweird.f32 %v2073
  %vm2080 = vweird.f32 %v2074
  %vm2081 = vmor %vm2079, %vm2080
  %v2082 = vsel %vm2081, %v2074, %v2078
  %v2083 = vand.u32 2147483647, %v2073
  %vm2084 = vcmp.eq.f32.partialorder %v2083, 8.507059e+37
  %v2085 = vand.u32 %v2073, 2147483648
  %v2086 = vor.u32 1.1754944e-38, %v2085
  %v2087 = vsel %vm2084, %v2086, %v2082
  %v2088 = vmul.f32 1.0, %v2087
  %v2089 = vmul.f32 %v2088, 2.0
  %v2090 = vsub.f32 %v2089, 1.0
  %v2091 = vsel %vm78, %v2090, %v2088
  %v2092 = vmul.f32 %v2091, %v1970
  %2094 = vrot.lane.b32.xlu0 %v2091, 64
  %v2095 = vpop.permute.xlu0 %2094
  %v2097 = vmul.f32 %v2091, %v2095
  %2099 = vrot.lane.b32.xlu0 %v2097, 32
  %v2100 = vpop.permute.xlu0 %2099
  %v2102 = vadd.f32 %v2092, %v2100
  %v2103 = vtanh.pop %v2102
  %2105 = vrot.lane.b32.xlu0 %v2103, 64
  %v2106 = vpop.permute.xlu0 %2105
  %v2108 = vmul.f32 %v2091, %v2106
  %v2109 = vld [vmem:[#allocation3 + $0x20] sm:$0xff]
  %2111 = vrot.lane.b32.xlu0 %v2042, 32
  %v2112 = vpop.permute.xlu0 %2111
  %v2113 = vsel %vm254, %v2112, 0
  %2115 = vmatpush.msra.mxu0 0.0
  %2116 = vmatpush.msra.mxu0 0.0
  %2117 = vmatpush.msra.mxu0 0.0
  %2118 = vmatpush.msra.mxu0 0.0
  %2119 = vmatpush.msra.mxu0 0.0
  %2120 = vmatpush.msra.mxu0 0.0
  %2121 = vmatpush.msra.mxu0 0.0
  %2122 = vmatpush.msra.mxu0 0.0
  %2123 = vmatpush.msra.mxu0 0.0
  %2124 = vmatpush.msra.mxu0 0.0
  %2125 = vmatpush.msra.mxu0 0.0
  %2126 = vmatpush.msra.mxu0 0.0
  %2127 = vmatpush.msra.mxu0 %v1656
  %2128 = vmatpush.msra.mxu0 %v1655
  %2129 = vmatpush.msra.mxu0 %v1654
  %2130 = vmatpush.msra.mxu0 %v1653
  %2131 = vmatmul.f32.gmra.mxu0 %v2113
  %v2132 = vpop.f32.mrf.mxu0
  %v2133 = vadd.f32 0.0, %v2132
  %2134 = vdwg.mxu0
  %v2135 = vadd.f32 %v2109, %v2133
  %v2136 = vxor.u32 %v2135, 2147483648
  %v2137 = vmul.f32 %v2136, 1.442695
  %v2138 = vpow.pop %v2137
  %v2139 = vadd.f32 %v2138, 1.0
  %v2140 = vrcp.pop %v2139
  %v2141 = vmul.f32 %v2139, %v2140
  %v2142 = vsub.f32 1.0, %v2141
  %v2143 = vmul.f32 %v2140, %v2142
  %v2144 = vadd.f32 %v2140, %v2143
  %vm2145 = vweird.f32 %v2139
  %vm2146 = vweird.f32 %v2140
  %vm2147 = vmor %vm2145, %vm2146
  %v2148 = vsel %vm2147, %v2140, %v2144
  %v2149 = vand.u32 2147483647, %v2139
  %vm2150 = vcmp.eq.f32.partialorder %v2149, 8.507059e+37
  %v2151 = vand.u32 %v2139, 2147483648
  %v2152 = vor.u32 1.1754944e-38, %v2151
  %v2153 = vsel %vm2150, %v2152, %v2148
  %v2154 = vmul.f32 1.0, %v2153
  %v2155 = vmul.f32 %v2154, 2.0
  %v2156 = vsub.f32 %v2155, 1.0
  %v2157 = vsel %vm78, %v2156, %v2154
  %v2158 = vmul.f32 %v2157, %v2036
  %2160 = vrot.lane.b32.xlu0 %v2157, 64
  %v2161 = vpop.permute.xlu0 %2160
  %v2163 = vmul.f32 %v2157, %v2161
  %2165 = vrot.lane.b32.xlu0 %v2163, 32
  %v2166 = vpop.permute.xlu0 %2165
  %v2168 = vadd.f32 %v2158, %v2166
  %v2169 = vtanh.pop %v2168
  %2171 = vrot.lane.b32.xlu0 %v2169, 64
  %v2172 = vpop.permute.xlu0 %2171
  %v2174 = vmul.f32 %v2157, %v2172
  %v2175 = vld [vmem:[#allocation2 + $0x20] sm:$0xff]
  %2177 = vrot.lane.b32.xlu0 %v2108, 32
  %v2178 = vpop.permute.xlu0 %2177
  %v2179 = vsel %vm254, %v2178, 0
  %2181 = vmatpush.msra.mxu0 0.0
  %2182 = vmatpush.msra.mxu0 0.0
  %2183 = vmatpush.msra.mxu0 0.0
  %2184 = vmatpush.msra.mxu0 0.0
  %2185 = vmatpush.msra.mxu0 0.0
  %2186 = vmatpush.msra.mxu0 0.0
  %2187 = vmatpush.msra.mxu0 0.0
  %2188 = vmatpush.msra.mxu0 0.0
  %2189 = vmatpush.msra.mxu0 0.0
  %2190 = vmatpush.msra.mxu0 0.0
  %2191 = vmatpush.msra.mxu0 0.0
  %2192 = vmatpush.msra.mxu0 0.0
  %2193 = vmatpush.msra.mxu0 %v1648
  %2194 = vmatpush.msra.mxu0 %v1647
  %2195 = vmatpush.msra.mxu0 %v1646
  %2196 = vmatpush.msra.mxu0 %v1645
  %2197 = vmatmul.f32.gmra.mxu0 %v2179
  %v2198 = vpop.f32.mrf.mxu0
  %v2199 = vadd.f32 0.0, %v2198
  %2200 = vdwg.mxu0
  %v2201 = vadd.f32 %v2175, %v2199
  %v2202 = vxor.u32 %v2201, 2147483648
  %v2203 = vmul.f32 %v2202, 1.442695
  %v2204 = vpow.pop %v2203
  %v2205 = vadd.f32 %v2204, 1.0
  %v2206 = vrcp.pop %v2205
  %v2207 = vmul.f32 %v2205, %v2206
  %v2208 = vsub.f32 1.0, %v2207
  %v2209 = vmul.f32 %v2206, %v2208
  %v2210 = vadd.f32 %v2206, %v2209
  %vm2211 = vweird.f32 %v2205
  %vm2212 = vweird.f32 %v2206
  %vm2213 = vmor %vm2211, %vm2212
  %v2214 = vsel %vm2213, %v2206, %v2210
  %v2215 = vand.u32 2147483647, %v2205
  %vm2216 = vcmp.eq.f32.partialorder %v2215, 8.507059e+37
  %v2217 = vand.u32 %v2205, 2147483648
  %v2218 = vor.u32 1.1754944e-38, %v2217
  %v2219 = vsel %vm2216, %v2218, %v2214
  %v2220 = vmul.f32 1.0, %v2219
  %v2221 = vmul.f32 %v2220, 2.0
  %v2222 = vsub.f32 %v2221, 1.0
  %v2223 = vsel %vm78, %v2222, %v2220
  %v2224 = vmul.f32 %v2223, %v2102
  %2226 = vrot.lane.b32.xlu0 %v2223, 64
  %v2227 = vpop.permute.xlu0 %2226
  %v2229 = vmul.f32 %v2223, %v2227
  %2231 = vrot.lane.b32.xlu0 %v2229, 32
  %v2232 = vpop.permute.xlu0 %2231
  %v2234 = vadd.f32 %v2224, %v2232
  %v2235 = vtanh.pop %v2234
  %2237 = vrot.lane.b32.xlu0 %v2235, 64
  %v2238 = vpop.permute.xlu0 %2237
  %v2240 = vmul.f32 %v2223, %v2238
  %v2241 = vld [vmem:[#allocation3 + $0x18] sm:$0xff]
  %2243 = vrot.lane.b32.xlu0 %v2174, 32
  %v2244 = vpop.permute.xlu0 %2243
  %v2245 = vsel %vm254, %v2244, 0
  %2247 = vmatpush.msra.mxu0 0.0
  %2248 = vmatpush.msra.mxu0 0.0
  %2249 = vmatpush.msra.mxu0 0.0
  %2250 = vmatpush.msra.mxu0 0.0
  %2251 = vmatpush.msra.mxu0 0.0
  %2252 = vmatpush.msra.mxu0 0.0
  %2253 = vmatpush.msra.mxu0 0.0
  %2254 = vmatpush.msra.mxu0 0.0
  %2255 = vmatpush.msra.mxu0 0.0
  %2256 = vmatpush.msra.mxu0 0.0
  %2257 = vmatpush.msra.mxu0 0.0
  %2258 = vmatpush.msra.mxu0 0.0
  %2259 = vmatpush.msra.mxu0 %v1656
  %2260 = vmatpush.msra.mxu0 %v1655
  %2261 = vmatpush.msra.mxu0 %v1654
  %2262 = vmatpush.msra.mxu0 %v1653
  %2263 = vmatmul.f32.gmra.mxu0 %v2245
  %v2264 = vpop.f32.mrf.mxu0
  %v2265 = vadd.f32 0.0, %v2264
  %2266 = vdwg.mxu0
  %v2267 = vadd.f32 %v2241, %v2265
  %v2268 = vxor.u32 %v2267, 2147483648
  %v2269 = vmul.f32 %v2268, 1.442695
  %v2270 = vpow.pop %v2269
  %v2271 = vadd.f32 %v2270, 1.0
  %v2272 = vrcp.pop %v2271
  %v2273 = vmul.f32 %v2271, %v2272
  %v2274 = vsub.f32 1.0, %v2273
  %v2275 = vmul.f32 %v2272, %v2274
  %v2276 = vadd.f32 %v2272, %v2275
  %vm2277 = vweird.f32 %v2271
  %vm2278 = vweird.f32 %v2272
  %vm2279 = vmor %vm2277, %vm2278
  %v2280 = vsel %vm2279, %v2272, %v2276
  %v2281 = vand.u32 2147483647, %v2271
  %vm2282 = vcmp.eq.f32.partialorder %v2281, 8.507059e+37
  %v2283 = vand.u32 %v2271, 2147483648
  %v2284 = vor.u32 1.1754944e-38, %v2283
  %v2285 = vsel %vm2282, %v2284, %v2280
  %v2286 = vmul.f32 1.0, %v2285
  %v2287 = vmul.f32 %v2286, 2.0
  %v2288 = vsub.f32 %v2287, 1.0
  %v2289 = vsel %vm78, %v2288, %v2286
  %v2290 = vmul.f32 %v2289, %v2168
  %2292 = vrot.lane.b32.xlu0 %v2289, 64
  %v2293 = vpop.permute.xlu0 %2292
  %v2295 = vmul.f32 %v2289, %v2293
  %2297 = vrot.lane.b32.xlu0 %v2295, 32
  %v2298 = vpop.permute.xlu0 %2297
  %v2300 = vadd.f32 %v2290, %v2298
  %v2301 = vtanh.pop %v2300
  %2303 = vrot.lane.b32.xlu0 %v2301, 64
  %v2304 = vpop.permute.xlu0 %2303
  %v2306 = vmul.f32 %v2289, %v2304
  %v2307 = vld [vmem:[#allocation2 + $0x28] sm:$0xff]
  %2309 = vrot.lane.b32.xlu0 %v2240, 32
  %v2310 = vpop.permute.xlu0 %2309
  %v2311 = vsel %vm254, %v2310, 0
  %2313 = vmatpush.msra.mxu0 0.0
  %2314 = vmatpush.msra.mxu0 0.0
  %2315 = vmatpush.msra.mxu0 0.0
  %2316 = vmatpush.msra.mxu0 0.0
  %2317 = vmatpush.msra.mxu0 0.0
  %2318 = vmatpush.msra.mxu0 0.0
  %2319 = vmatpush.msra.mxu0 0.0
  %2320 = vmatpush.msra.mxu0 0.0
  %2321 = vmatpush.msra.mxu0 0.0
  %2322 = vmatpush.msra.mxu0 0.0
  %2323 = vmatpush.msra.mxu0 0.0
  %2324 = vmatpush.msra.mxu0 0.0
  %2325 = vmatpush.msra.mxu0 %v1648
  %2326 = vmatpush.msra.mxu0 %v1647
  %2327 = vmatpush.msra.mxu0 %v1646
  %2328 = vmatpush.msra.mxu0 %v1645
  %2329 = vmatmul.f32.gmra.mxu0 %v2311
  %v2330 = vpop.f32.mrf.mxu0
  %v2331 = vadd.f32 0.0, %v2330
  %2332 = vdwg.mxu0
  %v2333 = vadd.f32 %v2307, %v2331
  %v2334 = vxor.u32 %v2333, 2147483648
  %v2335 = vmul.f32 %v2334, 1.442695
  %v2336 = vpow.pop %v2335
  %v2337 = vadd.f32 %v2336, 1.0
  %v2338 = vrcp.pop %v2337
  %v2339 = vmul.f32 %v2337, %v2338
  %v2340 = vsub.f32 1.0, %v2339
  %v2341 = vmul.f32 %v2338, %v2340
  %v2342 = vadd.f32 %v2338, %v2341
  %vm2343 = vweird.f32 %v2337
  %vm2344 = vweird.f32 %v2338
  %vm2345 = vmor %vm2343, %vm2344
  %v2346 = vsel %vm2345, %v2338, %v2342
  %v2347 = vand.u32 2147483647, %v2337
  %vm2348 = vcmp.eq.f32.partialorder %v2347, 8.507059e+37
  %v2349 = vand.u32 %v2337, 2147483648
  %v2350 = vor.u32 1.1754944e-38, %v2349
  %v2351 = vsel %vm2348, %v2350, %v2346
  %v2352 = vmul.f32 1.0, %v2351
  %v2353 = vmul.f32 %v2352, 2.0
  %v2354 = vsub.f32 %v2353, 1.0
  %v2355 = vsel %vm78, %v2354, %v2352
  %v2356 = vmul.f32 %v2355, %v2234
  %2358 = vrot.lane.b32.xlu0 %v2355, 64
  %v2359 = vpop.permute.xlu0 %2358
  %v2361 = vmul.f32 %v2355, %v2359
  %2363 = vrot.lane.b32.xlu0 %v2361, 32
  %v2364 = vpop.permute.xlu0 %2363
  %v2366 = vadd.f32 %v2356, %v2364
  %v2367 = vtanh.pop %v2366
  %2369 = vrot.lane.b32.xlu0 %v2367, 64
  %v2370 = vpop.permute.xlu0 %2369
  %v2372 = vmul.f32 %v2355, %v2370
  %v2373 = vld [vmem:[#allocation3 + $0x10] sm:$0xff]
  %2375 = vrot.lane.b32.xlu0 %v2306, 32
  %v2376 = vpop.permute.xlu0 %2375
  %v2377 = vsel %vm254, %v2376, 0
  %2379 = vmatpush.msra.mxu0 0.0
  %2380 = vmatpush.msra.mxu0 0.0
  %2381 = vmatpush.msra.mxu0 0.0
  %2382 = vmatpush.msra.mxu0 0.0
  %2383 = vmatpush.msra.mxu0 0.0
  %2384 = vmatpush.msra.mxu0 0.0
  %2385 = vmatpush.msra.mxu0 0.0
  %2386 = vmatpush.msra.mxu0 0.0
  %2387 = vmatpush.msra.mxu0 0.0
  %2388 = vmatpush.msra.mxu0 0.0
  %2389 = vmatpush.msra.mxu0 0.0
  %2390 = vmatpush.msra.mxu0 0.0
  %2391 = vmatpush.msra.mxu0 %v1656
  %2392 = vmatpush.msra.mxu0 %v1655
  %2393 = vmatpush.msra.mxu0 %v1654
  %2394 = vmatpush.msra.mxu0 %v1653
  %2395 = vmatmul.f32.gmra.mxu0 %v2377
  %v2396 = vpop.f32.mrf.mxu0
  %v2397 = vadd.f32 0.0, %v2396
  %2398 = vdwg.mxu0
  %v2399 = vadd.f32 %v2373, %v2397
  %v2400 = vxor.u32 %v2399, 2147483648
  %v2401 = vmul.f32 %v2400, 1.442695
  %v2402 = vpow.pop %v2401
  %v2403 = vadd.f32 %v2402, 1.0
  %v2404 = vrcp.pop %v2403
  %v2405 = vmul.f32 %v2403, %v2404
  %v2406 = vsub.f32 1.0, %v2405
  %v2407 = vmul.f32 %v2404, %v2406
  %v2408 = vadd.f32 %v2404, %v2407
  %vm2409 = vweird.f32 %v2403
  %vm2410 = vweird.f32 %v2404
  %vm2411 = vmor %vm2409, %vm2410
  %v2412 = vsel %vm2411, %v2404, %v2408
  %v2413 = vand.u32 2147483647, %v2403
  %vm2414 = vcmp.eq.f32.partialorder %v2413, 8.507059e+37
  %v2415 = vand.u32 %v2403, 2147483648
  %v2416 = vor.u32 1.1754944e-38, %v2415
  %v2417 = vsel %vm2414, %v2416, %v2412
  %v2418 = vmul.f32 1.0, %v2417
  %v2419 = vmul.f32 %v2418, 2.0
  %v2420 = vsub.f32 %v2419, 1.0
  %v2421 = vsel %vm78, %v2420, %v2418
  %v2422 = vmul.f32 %v2421, %v2300
  %2424 = vrot.lane.b32.xlu0 %v2421, 64
  %v2425 = vpop.permute.xlu0 %2424
  %v2427 = vmul.f32 %v2421, %v2425
  %2429 = vrot.lane.b32.xlu0 %v2427, 32
  %v2430 = vpop.permute.xlu0 %2429
  %v2432 = vadd.f32 %v2422, %v2430
  %v2433 = vtanh.pop %v2432
  %2435 = vrot.lane.b32.xlu0 %v2433, 64
  %v2436 = vpop.permute.xlu0 %2435
  %v2438 = vmul.f32 %v2421, %v2436
  %v2439 = vld [vmem:[#allocation2 + $0x30] sm:$0xff]
  %2441 = vrot.lane.b32.xlu0 %v2372, 32
  %v2442 = vpop.permute.xlu0 %2441
  %v2443 = vsel %vm254, %v2442, 0
  %2445 = vmatpush.msra.mxu0 0.0
  %2446 = vmatpush.msra.mxu0 0.0
  %2447 = vmatpush.msra.mxu0 0.0
  %2448 = vmatpush.msra.mxu0 0.0
  %2449 = vmatpush.msra.mxu0 0.0
  %2450 = vmatpush.msra.mxu0 0.0
  %2451 = vmatpush.msra.mxu0 0.0
  %2452 = vmatpush.msra.mxu0 0.0
  %2453 = vmatpush.msra.mxu0 0.0
  %2454 = vmatpush.msra.mxu0 0.0
  %2455 = vmatpush.msra.mxu0 0.0
  %2456 = vmatpush.msra.mxu0 0.0
  %2457 = vmatpush.msra.mxu0 %v1648
  %2458 = vmatpush.msra.mxu0 %v1647
  %2459 = vmatpush.msra.mxu0 %v1646
  %2460 = vmatpush.msra.mxu0 %v1645
  %2461 = vmatmul.f32.gmra.mxu0 %v2443
  %v2462 = vpop.f32.mrf.mxu0
  %v2463 = vadd.f32 0.0, %v2462
  %2464 = vdwg.mxu0
  %v2465 = vadd.f32 %v2439, %v2463
  %v2466 = vxor.u32 %v2465, 2147483648
  %v2467 = vmul.f32 %v2466, 1.442695
  %v2468 = vpow.pop %v2467
  %v2469 = vadd.f32 %v2468, 1.0
  %v2470 = vrcp.pop %v2469
  %v2471 = vmul.f32 %v2469, %v2470
  %v2472 = vsub.f32 1.0, %v2471
  %v2473 = vmul.f32 %v2470, %v2472
  %v2474 = vadd.f32 %v2470, %v2473
  %vm2475 = vweird.f32 %v2469
  %vm2476 = vweird.f32 %v2470
  %vm2477 = vmor %vm2475, %vm2476
  %v2478 = vsel %vm2477, %v2470, %v2474
  %v2479 = vand.u32 2147483647, %v2469
  %vm2480 = vcmp.eq.f32.partialorder %v2479, 8.507059e+37
  %v2481 = vand.u32 %v2469, 2147483648
  %v2482 = vor.u32 1.1754944e-38, %v2481
  %v2483 = vsel %vm2480, %v2482, %v2478
  %v2484 = vmul.f32 1.0, %v2483
  %v2485 = vmul.f32 %v2484, 2.0
  %v2486 = vsub.f32 %v2485, 1.0
  %v2487 = vsel %vm78, %v2486, %v2484
  %v2488 = vmul.f32 %v2487, %v2366
  %2490 = vrot.lane.b32.xlu0 %v2487, 64
  %v2491 = vpop.permute.xlu0 %2490
  %v2493 = vmul.f32 %v2487, %v2491
  %2495 = vrot.lane.b32.xlu0 %v2493, 32
  %v2496 = vpop.permute.xlu0 %2495
  %v2498 = vadd.f32 %v2488, %v2496
  %v2499 = vtanh.pop %v2498
  %2501 = vrot.lane.b32.xlu0 %v2499, 64
  %v2502 = vpop.permute.xlu0 %2501
  %v2504 = vmul.f32 %v2487, %v2502
  %v2505 = vld [vmem:[#allocation3 + $0x8] sm:$0xff]
  %2507 = vrot.lane.b32.xlu0 %v2438, 32
  %v2508 = vpop.permute.xlu0 %2507
  %v2509 = vsel %vm254, %v2508, 0
  %2511 = vmatpush.msra.mxu0 0.0
  %2512 = vmatpush.msra.mxu0 0.0
  %2513 = vmatpush.msra.mxu0 0.0
  %2514 = vmatpush.msra.mxu0 0.0
  %2515 = vmatpush.msra.mxu0 0.0
  %2516 = vmatpush.msra.mxu0 0.0
  %2517 = vmatpush.msra.mxu0 0.0
  %2518 = vmatpush.msra.mxu0 0.0
  %2519 = vmatpush.msra.mxu0 0.0
  %2520 = vmatpush.msra.mxu0 0.0
  %2521 = vmatpush.msra.mxu0 0.0
  %2522 = vmatpush.msra.mxu0 0.0
  %2523 = vmatpush.msra.mxu0 %v1656
  %2524 = vmatpush.msra.mxu0 %v1655
  %2525 = vmatpush.msra.mxu0 %v1654
  %2526 = vmatpush.msra.mxu0 %v1653
  %2527 = vmatmul.f32.gmra.mxu0 %v2509
  %v2528 = vpop.f32.mrf.mxu0
  %v2529 = vadd.f32 0.0, %v2528
  %2530 = vdwg.mxu0
  %v2531 = vadd.f32 %v2505, %v2529
  %v2532 = vxor.u32 %v2531, 2147483648
  %v2533 = vmul.f32 %v2532, 1.442695
  %v2534 = vpow.pop %v2533
  %v2535 = vadd.f32 %v2534, 1.0
  %v2536 = vrcp.pop %v2535
  %v2537 = vmul.f32 %v2535, %v2536
  %v2538 = vsub.f32 1.0, %v2537
  %v2539 = vmul.f32 %v2536, %v2538
  %v2540 = vadd.f32 %v2536, %v2539
  %vm2541 = vweird.f32 %v2535
  %vm2542 = vweird.f32 %v2536
  %vm2543 = vmor %vm2541, %vm2542
  %v2544 = vsel %vm2543, %v2536, %v2540
  %v2545 = vand.u32 2147483647, %v2535
  %vm2546 = vcmp.eq.f32.partialorder %v2545, 8.507059e+37
  %v2547 = vand.u32 %v2535, 2147483648
  %v2548 = vor.u32 1.1754944e-38, %v2547
  %v2549 = vsel %vm2546, %v2548, %v2544
  %v2550 = vmul.f32 1.0, %v2549
  %v2551 = vmul.f32 %v2550, 2.0
  %v2552 = vsub.f32 %v2551, 1.0
  %v2553 = vsel %vm78, %v2552, %v2550
  %v2554 = vmul.f32 %v2553, %v2432
  %2556 = vrot.lane.b32.xlu0 %v2553, 64
  %v2557 = vpop.permute.xlu0 %2556
  %v2559 = vmul.f32 %v2553, %v2557
  %2561 = vrot.lane.b32.xlu0 %v2559, 32
  %v2562 = vpop.permute.xlu0 %2561
  %v2564 = vadd.f32 %v2554, %v2562
  %v2565 = vtanh.pop %v2564
  %2567 = vrot.lane.b32.xlu0 %v2565, 64
  %v2568 = vpop.permute.xlu0 %2567
  %v2570 = vmul.f32 %v2553, %v2568
  %v2571 = vld [vmem:[#allocation2 + $0x38] sm:$0xff]
  %2573 = vrot.lane.b32.xlu0 %v2504, 32
  %v2574 = vpop.permute.xlu0 %2573
  %v2575 = vsel %vm254, %v2574, 0
  %2577 = vmatpush.msra.mxu0 0.0
  %2578 = vmatpush.msra.mxu0 0.0
  %2579 = vmatpush.msra.mxu0 0.0
  %2580 = vmatpush.msra.mxu0 0.0
  %2581 = vmatpush.msra.mxu0 0.0
  %2582 = vmatpush.msra.mxu0 0.0
  %2583 = vmatpush.msra.mxu0 0.0
  %2584 = vmatpush.msra.mxu0 0.0
  %2585 = vmatpush.msra.mxu0 0.0
  %2586 = vmatpush.msra.mxu0 0.0
  %2587 = vmatpush.msra.mxu0 0.0
  %2588 = vmatpush.msra.mxu0 0.0
  %2589 = vmatpush.msra.mxu0 %v1648
  %2590 = vmatpush.msra.mxu0 %v1647
  %2591 = vmatpush.msra.mxu0 %v1646
  %2592 = vmatpush.msra.mxu0 %v1645
  %2593 = vmatmul.f32.gmra.mxu0 %v2575
  %v2594 = vpop.f32.mrf.mxu0
  %v2595 = vadd.f32 0.0, %v2594
  %2596 = vdwg.mxu0
  %v2597 = vadd.f32 %v2571, %v2595
  %v2598 = vxor.u32 %v2597, 2147483648
  %v2599 = vmul.f32 %v2598, 1.442695
  %v2600 = vpow.pop %v2599
  %v2601 = vadd.f32 %v2600, 1.0
  %v2602 = vrcp.pop %v2601
  %v2603 = vmul.f32 %v2601, %v2602
  %v2604 = vsub.f32 1.0, %v2603
  %v2605 = vmul.f32 %v2602, %v2604
  %v2606 = vadd.f32 %v2602, %v2605
  %vm2607 = vweird.f32 %v2601
  %vm2608 = vweird.f32 %v2602
  %vm2609 = vmor %vm2607, %vm2608
  %v2610 = vsel %vm2609, %v2602, %v2606
  %v2611 = vand.u32 2147483647, %v2601
  %vm2612 = vcmp.eq.f32.partialorder %v2611, 8.507059e+37
  %v2613 = vand.u32 %v2601, 2147483648
  %v2614 = vor.u32 1.1754944e-38, %v2613
  %v2615 = vsel %vm2612, %v2614, %v2610
  %v2616 = vmul.f32 1.0, %v2615
  %v2617 = vmul.f32 %v2616, 2.0
  %v2618 = vsub.f32 %v2617, 1.0
  %v2619 = vsel %vm78, %v2618, %v2616
  %v2620 = vmul.f32 %v2619, %v2498
  %2622 = vrot.lane.b32.xlu0 %v2619, 64
  %v2623 = vpop.permute.xlu0 %2622
  %v2625 = vmul.f32 %v2619, %v2623
  %2627 = vrot.lane.b32.xlu0 %v2625, 32
  %v2628 = vpop.permute.xlu0 %2627
  %v2630 = vadd.f32 %v2620, %v2628
  %v2631 = vtanh.pop %v2630
  %2633 = vrot.lane.b32.xlu0 %v2631, 64
  %v2634 = vpop.permute.xlu0 %2633
  %v2636 = vmul.f32 %v2619, %v2634
  %v2637 = vld [vmem:[#allocation3] sm:$0xff]
  %2639 = vrot.lane.b32.xlu0 %v2570, 32
  %v2640 = vpop.permute.xlu0 %2639
  %v2641 = vsel %vm254, %v2640, 0
  %2643 = vmatpush.msra.mxu0 0.0
  %2644 = vmatpush.msra.mxu0 0.0
  %2645 = vmatpush.msra.mxu0 0.0
  %2646 = vmatpush.msra.mxu0 0.0
  %2647 = vmatpush.msra.mxu0 0.0
  %2648 = vmatpush.msra.mxu0 0.0
  %2649 = vmatpush.msra.mxu0 0.0
  %2650 = vmatpush.msra.mxu0 0.0
  %2651 = vmatpush.msra.mxu0 0.0
  %2652 = vmatpush.msra.mxu0 0.0
  %2653 = vmatpush.msra.mxu0 0.0
  %2654 = vmatpush.msra.mxu0 0.0
  %2655 = vmatpush.msra.mxu0 %v1656
  %2656 = vmatpush.msra.mxu0 %v1655
  %2657 = vmatpush.msra.mxu0 %v1654
  %2658 = vmatpush.msra.mxu0 %v1653
  %2659 = vmatmul.f32.gmra.mxu0 %v2641
  %v2660 = vpop.f32.mrf.mxu0
  %v2661 = vadd.f32 0.0, %v2660
  %2662 = vdwg.mxu0
  %v2663 = vadd.f32 %v2637, %v2661
  %v2664 = vxor.u32 %v2663, 2147483648
  %v2665 = vmul.f32 %v2664, 1.442695
  %v2666 = vpow.pop %v2665
  %v2667 = vadd.f32 %v2666, 1.0
  %v2668 = vrcp.pop %v2667
  %v2669 = vmul.f32 %v2667, %v2668
  %v2670 = vsub.f32 1.0, %v2669
  %v2671 = vmul.f32 %v2668, %v2670
  %v2672 = vadd.f32 %v2668, %v2671
  %vm2673 = vweird.f32 %v2667
  %vm2674 = vweird.f32 %v2668
  %vm2675 = vmor %vm2673, %vm2674
  %v2676 = vsel %vm2675, %v2668, %v2672
  %v2677 = vand.u32 2147483647, %v2667
  %vm2678 = vcmp.eq.f32.partialorder %v2677, 8.507059e+37
  %v2679 = vand.u32 %v2667, 2147483648
  %v2680 = vor.u32 1.1754944e-38, %v2679
  %v2681 = vsel %vm2678, %v2680, %v2676
  %v2682 = vmul.f32 1.0, %v2681
  %v2683 = vmul.f32 %v2682, 2.0
  %v2684 = vsub.f32 %v2683, 1.0
  %v2685 = vsel %vm78, %v2684, %v2682
  %v2686 = vmul.f32 %v2685, %v2564
  %2688 = vrot.lane.b32.xlu0 %v2685, 64
  %v2689 = vpop.permute.xlu0 %2688
  %v2691 = vmul.f32 %v2685, %v2689
  %2693 = vrot.lane.b32.xlu0 %v2691, 32
  %v2694 = vpop.permute.xlu0 %2693
  %v2696 = vadd.f32 %v2686, %v2694
  %v2697 = vtanh.pop %v2696
  %2699 = vrot.lane.b32.xlu0 %v2697, 64
  %v2700 = vpop.permute.xlu0 %2699
  %v2702 = vmul.f32 %v2685, %v2700
  %v2703 = vld [vmem:[%s15] sm:$0xff]
  %v2704 = vld [vmem:[%s15 + $0x8] sm:$0xff]
  %v2705 = vld [vmem:[%s15 + $0x10] sm:$0xff]
  %v2706 = vld [vmem:[%s15 + $0x18] sm:$0xff]
  %v2707 = vld [vmem:[%s17] sm:$0x1]
  %v2709 = vperm.slane %v2707, 0
  %2712 = vrot.lane.b32.xlu0 %v2636, 32
  %v2713 = vpop.permute.xlu0 %2712
  %v2714 = vsel %vm254, %v2713, 0
  %2716 = vmatpush.msra.mxu0 0.0
  %2717 = vmatpush.msra.mxu0 0.0
  %2718 = vmatpush.msra.mxu0 0.0
  %2719 = vmatpush.msra.mxu0 0.0
  %2720 = vmatpush.msra.mxu0 0.0
  %2721 = vmatpush.msra.mxu0 0.0
  %2722 = vmatpush.msra.mxu0 0.0
  %2723 = vmatpush.msra.mxu0 0.0
  %2724 = vmatpush.msra.mxu0 0.0
  %2725 = vmatpush.msra.mxu0 0.0
  %2726 = vmatpush.msra.mxu0 0.0
  %2727 = vmatpush.msra.mxu0 0.0
  %2728 = vmatpush.msra.mxu0 %v2706
  %2729 = vmatpush.msra.mxu0 %v2705
  %2730 = vmatpush.msra.mxu0 %v2704
  %2731 = vmatpush.msra.mxu0 %v2703
  %2732 = vmatmul.f32.gmra.mxu0 %v2714
  %v2733 = vpop.f32.mrf.mxu0
  %v2734 = vadd.f32 %v2709, %v2733
  %2735 = vdwg.mxu0
  %v2736 = vld [vmem:[%s18] sm:$0xff]
  %v2737 = vld [vmem:[%s18 + $0x8] sm:$0xff]
  %v2738 = vld [vmem:[%s18 + $0x10] sm:$0xff]
  %v2739 = vld [vmem:[%s18 + $0x18] sm:$0xff]
  %v2740 = vld [vmem:[%s20] sm:$0x1]
  %v2742 = vperm.slane %v2740, 0
  %2744 = vmatpush.msra.mxu0 0.0
  %2745 = vmatpush.msra.mxu0 0.0
  %2746 = vmatpush.msra.mxu0 0.0
  %2747 = vmatpush.msra.mxu0 0.0
  %2748 = vmatpush.msra.mxu0 0.0
  %2749 = vmatpush.msra.mxu0 0.0
  %2750 = vmatpush.msra.mxu0 0.0
  %2751 = vmatpush.msra.mxu0 0.0
  %2752 = vmatpush.msra.mxu0 0.0
  %2753 = vmatpush.msra.mxu0 0.0
  %2754 = vmatpush.msra.mxu0 0.0
  %2755 = vmatpush.msra.mxu0 0.0
  %2756 = vmatpush.msra.mxu0 %v2739
  %2757 = vmatpush.msra.mxu0 %v2738
  %2758 = vmatpush.msra.mxu0 %v2737
  %2759 = vmatpush.msra.mxu0 %v2736
  %2760 = vmatmul.f32.gmra.mxu0 %v2714
  %v2761 = vpop.f32.mrf.mxu0
  %v2762 = vadd.f32 %v2742, %v2761
  %2763 = vdwg.mxu0
  %v2764 = vld [vmem:[%s16] sm:$0xff]
  %v2765 = vld [vmem:[%s16 + $0x8] sm:$0xff]
  %v2766 = vld [vmem:[%s16 + $0x10] sm:$0xff]
  %v2767 = vld [vmem:[%s16 + $0x18] sm:$0xff]
  %2769 = vrot.lane.b32.xlu0 %v2702, 32
  %v2770 = vpop.permute.xlu0 %2769
  %v2771 = vsel %vm254, %v2770, 0
  %2773 = vmatpush.msra.mxu0 0.0
  %2774 = vmatpush.msra.mxu0 0.0
  %2775 = vmatpush.msra.mxu0 0.0
  %2776 = vmatpush.msra.mxu0 0.0
  %2777 = vmatpush.msra.mxu0 0.0
  %2778 = vmatpush.msra.mxu0 0.0
  %2779 = vmatpush.msra.mxu0 0.0
  %2780 = vmatpush.msra.mxu0 0.0
  %2781 = vmatpush.msra.mxu0 0.0
  %2782 = vmatpush.msra.mxu0 0.0
  %2783 = vmatpush.msra.mxu0 0.0
  %2784 = vmatpush.msra.mxu0 0.0
  %2785 = vmatpush.msra.mxu0 %v2767
  %2786 = vmatpush.msra.mxu0 %v2766
  %2787 = vmatpush.msra.mxu0 %v2765
  %2788 = vmatpush.msra.mxu0 %v2764
  %2789 = vmatmul.f32.gmra.mxu0 %v2771
  %v2790 = vpop.f32.mrf.mxu0
  %v2791 = vadd.f32 0.0, %v2790
  %2792 = vdwg.mxu0
  %v2793 = vadd.f32 %v2734, %v2791
  %v2794 = vld [vmem:[%s19] sm:$0xff]
  %v2795 = vld [vmem:[%s19 + $0x8] sm:$0xff]
  %v2796 = vld [vmem:[%s19 + $0x10] sm:$0xff]
  %v2797 = vld [vmem:[%s19 + $0x18] sm:$0xff]
  %2798 = vmatpush.msra.mxu0 0.0
  %2799 = vmatpush.msra.mxu0 0.0
  %2800 = vmatpush.msra.mxu0 0.0
  %2801 = vmatpush.msra.mxu0 0.0
  %2802 = vmatpush.msra.mxu0 0.0
  %2803 = vmatpush.msra.mxu0 0.0
  %2804 = vmatpush.msra.mxu0 0.0
  %2805 = vmatpush.msra.mxu0 0.0
  %2806 = vmatpush.msra.mxu0 0.0
  %2807 = vmatpush.msra.mxu0 0.0
  %2808 = vmatpush.msra.mxu0 0.0
  %2809 = vmatpush.msra.mxu0 0.0
  %2810 = vmatpush.msra.mxu0 %v2797
  %2811 = vmatpush.msra.mxu0 %v2796
  %2812 = vmatpush.msra.mxu0 %v2795
  %2813 = vmatpush.msra.mxu0 %v2794
  %2814 = vmatmul.f32.gmra.mxu0 %v2771
  %v2815 = vpop.f32.mrf.mxu0
  %v2816 = vadd.f32 0.0, %v2815
  %2817 = vdwg.mxu0
  %v2818 = vadd.f32 %v2762, %v2816
  %v2819 = vmul.f32 %v2818, 0.5
  %v2820 = vmul.f32 %v2819, 1.442695
  %v2821 = vpow.pop %v2820
  %v2822 = vld [vmem:[%s21] sm:$0xff]
  %v2823 = vmul.f32 %v2821, %v2822
  %v2824 = vadd.f32 %v2793, %v2823
  %vm2825 = vcmask 130048
  %2826 = vst.msk [vmem:[%s22] sm:$0xff] %vm2825, %v2824
  %2827 = vst.msk [vmem:[%s23] sm:$0xff] %vm2825, %v2793
  %2828 = vst.msk [vmem:[%s24] sm:$0xff] %vm2825, %v2818
  // Predicated region
  $region90: #{encoder_forward.1} parent=0 // pred_check
    _
  $region91: #{encoder_forward.1} parent=0 // pred_check_branch
    %2830 = sbr.rel (0) target = $region93
  $region92: #{encoder_forward.1} parent=0 // pred_region
    _
  $region93: #{encoder_forward.1} parent=0 // pred_fallthru
    _
  // Predicated region
  $region94: #{encoder_forward.1} parent=0 // pred_check
    _
  $region95: #{encoder_forward.1} parent=0 // pred_check_branch
    %2832 = sbr.rel (0) target = $region97
  $region96: #{encoder_forward.1} parent=0 // pred_region
    _
  $region97: #{encoder_forward.1} parent=0 // pred_fallthru
    _
  // Predicated region
  $region98: #{encoder_forward.1} parent=0 // pred_check
    _
  $region99: #{encoder_forward.1} parent=0 // pred_check_branch
    %2834 = sbr.rel (0) target = $region101
  $region100: #{encoder_forward.1} parent=0 // pred_region
    _
  $region101: #{encoder_forward.1} parent=0 // pred_fallthru
    _
  // Predicated region
  $region102: #{encoder_forward.1} parent=0 // pred_check
    _
  $region103: #{encoder_forward.1} parent=0 // pred_check_branch
    %2836 = sbr.rel (0) target = $region105
  $region104: #{encoder_forward.1} parent=0 // pred_region
    _
  $region105: #{encoder_forward.1} parent=0 // pred_fallthru
    _
  // Predicated region
  $region106: #{encoder_forward.1} parent=0 // pred_check
    _
  $region107: #{encoder_forward.1} parent=0 // pred_check_branch
    %2838 = sbr.rel (0) target = $region109
  $region108: #{encoder_forward.1} parent=0 // pred_region
    _
  $region109: #{encoder_forward.1} parent=0 // pred_fallthru
    _
  // Predicated region
  $region110: #{encoder_forward.1} parent=0 // pred_check
    _
  $region111: #{encoder_forward.1} parent=0 // pred_check_branch
    %2840 = sbr.rel (0) target = $region113
  $region112: #{encoder_forward.1} parent=0 // pred_region
    _
  $region113: #{encoder_forward.1} parent=0 // pred_fallthru
    _

</llo_original>
